<compile_context>
chip_gen: v7x
topology: tpu7x:2x2x1
jax: 0.10.0
libtpu: 0.0.40
codegen_flags: <defaults>
</compile_context>

<pallas_src>
import functools

import jax
import jax.numpy as jnp
import numpy as np
from jax.experimental import pallas as pl
from jax.experimental.pallas import tpu as pltpu


# ---------------------------------------------------------------------------
# In-kernel 3x3 convolution over a halo'd row tile, both column parities stacked
# along the MXU M dimension.
# ---------------------------------------------------------------------------
def _conv_taps_cat(xe, xo, w_ref, th, wp, cin):
    """xe/xo: (th+2, wp+1, cin) even/odd padded-input columns (compute dtype).
    w_ref: (9, cin, Cp) weights, tap index = kh*3 + kw.
    Returns f32 (2*th*wp, Cp): rows [0:th*wp] = conv at even output columns (2j),
    rows [th*wp:] = odd output columns (2j+1); within each half rows are ordered
    (h_local, j)."""
    m2 = 2 * th * wp

    def mm(a, b):
        return jnp.dot(a, b, preferred_element_type=jnp.float32)

    acc = None
    for kh in range(3):
        ae = xe[kh:kh + th]                     # (th, wp+1, cin) leading-dim slice
        ao = xo[kh:kh + th]
        e0 = ae[:, 0:wp, :]                     # padded even cols 2j
        e1 = ae[:, 1:wp + 1, :]                 # padded even cols 2j+2
        o0 = ao[:, 0:wp, :]                     # padded odd  cols 2j+1
        o1 = ao[:, 1:wp + 1, :]                 # padded odd  cols 2j+3
        # even output col 2j   reads padded cols (2j,   2j+1, 2j+2) -> (e0, o0, e1)
        # odd  output col 2j+1 reads padded cols (2j+1, 2j+2, 2j+3) -> (o0, e1, o1)
        l0 = jnp.concatenate([e0, o0], axis=0).reshape(m2, cin)   # tap kw=0, [even; odd]
        l1 = jnp.concatenate([o0, e1], axis=0).reshape(m2, cin)   # tap kw=1
        l2 = jnp.concatenate([e1, o1], axis=0).reshape(m2, cin)   # tap kw=2
        t = (mm(l0, w_ref[kh * 3 + 0])
             + mm(l1, w_ref[kh * 3 + 1])
             + mm(l2, w_ref[kh * 3 + 2]))
        acc = t if acc is None else acc + t
    return acc


# ---------------------------------------------------------------------------
# Pass 1: per-tile, per-channel (sum, sum-of-squares) of the conv output.
# Fully parallel over tiles; host does the tiny cross-tile reduction.
# ---------------------------------------------------------------------------
def _stats_kernel(xe_ref, xo_ref, w_ref, stat_ref, *, th, wp, cin):
    acc = _conv_taps_cat(xe_ref[0], xo_ref[0], w_ref, th, wp, cin)
    stat_ref[0, 0:1, :] = jnp.sum(acc, axis=0, keepdims=True)
    stat_ref[0, 1:2, :] = jnp.sum(acc * acc, axis=0, keepdims=True)


# ---------------------------------------------------------------------------
# Pass 2: recompute conv tile, BN scale/shift + ReLU + 2x2 max-pool, store pooled.
# ---------------------------------------------------------------------------
def _norm_pool_kernel(xe_ref, xo_ref, w_ref, ss_ref, o_ref, *, th, wp, cin):
    m = th * wp
    acc = _conv_taps_cat(xe_ref[0], xo_ref[0], w_ref, th, wp, cin)   # (2m, Cp) f32
    scale = ss_ref[0:1, :]                          # (1, Cp)
    shift = ss_ref[1:2, :]
    y = jnp.maximum(acc * scale + shift, 0.0)       # BN + ReLU, both parities at once
    yh = jnp.maximum(y[0:m], y[m:2 * m])            # horizontal 2-pool (elementwise)
    yr = yh.reshape(th // 2, 2, wp, yh.shape[-1])   # split rows into (h//2, parity)
    pooled = jnp.maximum(yr[:, 0], yr[:, 1])        # vertical 2-pool
    o_ref[...] = pooled[None].astype(o_ref.dtype)


# ---------------------------------------------------------------------------
# Host-side wrapper.
# ---------------------------------------------------------------------------
def _vmem_capacity_bytes():
    try:
        return int(pltpu.get_tpu_info().vmem_capacity_bytes)
    except Exception:
        return 64 * 1024 * 1024        # conservative: v7x has 64 MiB per TensorCore


def _pick_tile_rows(H, wp, cin, cp, cbytes, vmem_cap):
    """Largest even divisor `th` of H whose working set fits a fraction of VMEM."""
    budget = vmem_cap // 4             # headroom for transients / other buffers
    best = 2
    for th in range(2, H + 1, 2):
        if H % th != 0:
            continue
        need = (4 * (th + 2) * (wp + 1) * cin * cbytes   # 2 parities, double-buffered
                + 2 * th * wp * cp * 4                   # f32 conv accumulator (2 parities)
                + 6 * th * wp * cin * cbytes             # transient stacked LHS slabs
                + th * wp * cp * 4                       # pooled out, double-buffered
                + 9 * cin * cp * cbytes)                 # resident weights
        if need <= budget:
            best = th
    return best


def _conv3_2d_forward(x, W, b, gamma, beta, pooling=2, eps=1e-5,
                      compute_dtype=jnp.bfloat16):
    """x: (N, Cin, H, W) NCHW; W: (Cout, Cin, 3, 3); returns (N, Cout, H//2, W//2)."""
    N, Cin, H, Wd = x.shape
    Cout = W.shape[0]
    assert pooling == 2 and H % 2 == 0 and Wd % 2 == 0
    Hp, Wp = H // 2, Wd // 2
    # `b` (conv bias) is intentionally unused: train-mode BatchNorm subtracts the
    # batch mean, so a per-channel conv bias cancels exactly.

    LANES = 128
    Cp = ((Cout + LANES - 1) // LANES) * LANES     # lane-dense channel padding
    cbytes = jnp.dtype(compute_dtype).itemsize
    vmem_cap = _vmem_capacity_bytes()
    th = _pick_tile_rows(H, Wp, Cin, Cp, cbytes, vmem_cap)
    T = H // th
    NT = N * T
    vmem_limit = int(vmem_cap * 0.75)

    # ---- layout-only host glue (permutations + pad; no 9x im2col expansion) ----
    xh = jnp.transpose(x, (0, 2, 3, 1))                        # NHWC
    xp = jnp.pad(xh, ((0, 0), (1, 1), (1, 1), (0, 0)))         # (N, H+2, Wd+2, Cin)
    x_ev = xp[:, :, 0::2, :].astype(compute_dtype)             # (N, H+2, Wp+1, Cin)
    x_od = xp[:, :, 1::2, :].astype(compute_dtype)

    # TODO(synk): halo rows are duplicated host-side ((th+2)/th overhead); manual
    # DMA of overlapping row windows would remove the duplication.
    def _row_tiles(a):    # (N, H+2, Wp+1, Cin) -> (N*T, th+2, Wp+1, Cin)
        parts = [a[:, t * th: t * th + th + 2] for t in range(T)]
        return jnp.stack(parts, axis=1).reshape(NT, th + 2, Wp + 1, Cin)

    xe_t = _row_tiles(x_ev)
    xo_t = _row_tiles(x_od)

    w9 = jnp.transpose(W, (2, 3, 1, 0)).reshape(9, Cin, Cout)  # tap = kh*3 + kw
    w9 = jnp.pad(w9, ((0, 0), (0, 0), (0, Cp - Cout))).astype(compute_dtype)

    x_specs = [
        pl.BlockSpec((1, th + 2, Wp + 1, Cin), lambda i: (i, 0, 0, 0)),
        pl.BlockSpec((1, th + 2, Wp + 1, Cin), lambda i: (i, 0, 0, 0)),
    ]
    w_spec = pl.BlockSpec((9, Cin, Cp), lambda i: (0, 0, 0))   # resident across grid

    # ---- pass 1: per-tile per-channel sum / sum-of-squares (fully parallel) ----
    stats = pl.pallas_call(
        functools.partial(_stats_kernel, th=th, wp=Wp, cin=Cin),
        out_shape=jax.ShapeDtypeStruct((NT, 2, Cp), jnp.float32),
        grid=(NT,),
        in_specs=x_specs + [w_spec],
        out_specs=pl.BlockSpec((1, 2, Cp), lambda i: (i, 0, 0)),
        compiler_params=pltpu.CompilerParams(
            dimension_semantics=("parallel",),
            vmem_limit_bytes=vmem_limit),
    )(xe_t, xo_t, w9)

    # ---- tiny host math: fold BN into a per-channel scale/shift ----
    tot = jnp.sum(stats, axis=0)                                # (2, Cp)
    sum_c, sumsq_c = tot[0], tot[1]
    cnt = jnp.float32(N * H * Wd)
    mean = sum_c / cnt                                          # (Cp,)
    var = jnp.maximum(sumsq_c / cnt - mean * mean, 0.0)         # biased (train-mode BN)
    inv = jax.lax.rsqrt(var + eps)
    gamma_p = jnp.pad(gamma.astype(jnp.float32), (0, Cp - Cout))
    beta_p = jnp.pad(beta.astype(jnp.float32), (0, Cp - Cout))
    scale = gamma_p * inv
    shift = beta_p - mean * scale
    ss = jnp.stack([scale, shift], axis=0)                      # (2, Cp) f32

    # ---- pass 2: conv (recomputed) + BN + ReLU + 2x2 max-pool, per tile ----
    ss_spec = pl.BlockSpec((2, Cp), lambda i: (0, 0))
    pooled = pl.pallas_call(
        functools.partial(_norm_pool_kernel, th=th, wp=Wp, cin=Cin),
        out_shape=jax.ShapeDtypeStruct((NT, th // 2, Wp, Cp), jnp.float32),
        grid=(NT,),
        in_specs=x_specs + [w_spec, ss_spec],
        out_specs=pl.BlockSpec((1, th // 2, Wp, Cp), lambda i: (i, 0, 0, 0)),
        compiler_params=pltpu.CompilerParams(
            dimension_semantics=("parallel",),
            vmem_limit_bytes=vmem_limit),
    )(xe_t, xo_t, w9, ss)

    out = pooled.reshape(N, Hp, Wp, Cp)[:, :, :, :Cout]         # drop channel padding
    return jnp.transpose(out, (0, 3, 1, 2))                     # back to NCHW


conv3_2d_forward = jax.jit(_conv3_2d_forward,
                           static_argnames=("pooling", "compute_dtype"))


# ---------------------------------------------------------------------------
# Pure-JAX reference matching the PyTorch module (train-mode BatchNorm).
# ---------------------------------------------------------------------------
def _reference(x, W, b, gamma, beta, eps=1e-5):
    conv = jax.lax.conv_general_dilated(
        x, W, window_strides=(1, 1), padding=((1, 1), (1, 1)),
        dimension_numbers=("NCHW", "OIHW", "NCHW"),
        precision=jax.lax.Precision.HIGHEST)
    conv = conv + b[None, :, None, None]
    mean = jnp.mean(conv, axis=(0, 2, 3), keepdims=True)
    var = jnp.mean((conv - mean) ** 2, axis=(0, 2, 3), keepdims=True)
    y = (conv - mean) / jnp.sqrt(var + eps)
    y = y * gamma[None, :, None, None] + beta[None, :, None, None]
    y = jnp.maximum(y, 0.0)
    return jax.lax.reduce_window(
        y, -jnp.inf, jax.lax.max, (1, 1, 2, 2), (1, 1, 2, 2), "VALID")


if __name__ == "__main__":
    key = jax.random.PRNGKey(0)
    k_x, k_w, k_b, k_g, k_be = jax.random.split(key, 5)

    N, Cin, H, Wd = 2, 4, 16, 16
    Cout = 8

    x = jax.random.normal(k_x, (N, Cin, H, Wd), dtype=jnp.float32)
    W = 0.1 * jax.random.normal(k_w, (Cout, Cin, 3, 3), dtype=jnp.float32)
    b = 0.1 * jax.random.normal(k_b, (Cout,), dtype=jnp.float32)
    gamma = 1.0 + 0.1 * jax.random.normal(k_g, (Cout,), dtype=jnp.float32)
    beta = 0.1 * jax.random.normal(k_be, (Cout,), dtype=jnp.float32)

    out = jax.block_until_ready(conv3_2d_forward(x, W, b, gamma, beta))
    assert out.shape == (N, Cout, H // 2, Wd // 2), out.shape

    # Tight check: reference fed the same bf16-quantized conv inputs (the kernel
    # feeds bf16 to the MXU with f32 accumulation).
    xq = x.astype(jnp.bfloat16).astype(jnp.float32)
    Wq = W.astype(jnp.bfloat16).astype(jnp.float32)
    ref_q = jax.block_until_ready(_reference(xq, Wq, b, gamma, beta))
    np.testing.assert_allclose(np.asarray(out), np.asarray(ref_q),
                               rtol=2e-3, atol=2e-3)

    # Loose sanity check against the full-f32 reference (covers bf16 input rounding).
    ref = jax.block_until_ready(_reference(x, W, b, gamma, beta))
    np.testing.assert_allclose(np.asarray(out), np.asarray(ref),
                               rtol=5e-2, atol=5e-2)

    print("KERNEL_OK")
</pallas_src>

<mosaic_0001>
module attributes {stable_mosaic.version = 11 : i64} {
  func.func @_stats_kernel(%arg0: i32, %arg1: memref<1x18x9x4xbf16, #tpu.memory_space<vmem>>, %arg2: memref<1x18x9x4xbf16, #tpu.memory_space<vmem>>, %arg3: memref<9x4x128xbf16, #tpu.memory_space<vmem>>, %arg4: memref<1x2x128xf32, #tpu.memory_space<vmem>>) attributes {dimension_semantics = [#tpu.dimension_semantics<parallel>], iteration_bounds = array<i64: 2>, scalar_prefetch = 0 : i64, scratch_operands = 0 : i64, tpu.core_type = #tpu.core_type<tc>, window_params = [{transform_indices = @transform_0, window_bounds = array<i64: 1, 18, 9, 4>}, {transform_indices = @transform_1, window_bounds = array<i64: 1, 18, 9, 4>}, {pipeline_mode = #tpu.pipeline_mode<synchronous>, transform_indices = @transform_2, window_bounds = array<i64: 9, 4, 128>}, {transform_indices = @transform_3, window_bounds = array<i64: 1, 2, 128>}]} {
    %c0 = arith.constant 0 : index
    %c0_0 = arith.constant 0 : index
    %c0_1 = arith.constant 0 : index
    %c0_2 = arith.constant 0 : index
    %0 = vector.load %arg1[%c0, %c0_0, %c0_1, %c0_2] : memref<1x18x9x4xbf16, #tpu.memory_space<vmem>>, vector<1x18x9x4xbf16>
    %1 = vector.shape_cast %0 : vector<1x18x9x4xbf16> to vector<18x9x4xbf16>
    %c0_3 = arith.constant 0 : index
    %c0_4 = arith.constant 0 : index
    %c0_5 = arith.constant 0 : index
    %c0_6 = arith.constant 0 : index
    %2 = vector.load %arg2[%c0_3, %c0_4, %c0_5, %c0_6] : memref<1x18x9x4xbf16, #tpu.memory_space<vmem>>, vector<1x18x9x4xbf16>
    %3 = vector.shape_cast %2 : vector<1x18x9x4xbf16> to vector<18x9x4xbf16>
    %4 = vector.extract_strided_slice %1 {offsets = [0, 0, 0], sizes = [16, 9, 4], strides = [1, 1, 1]} : vector<18x9x4xbf16> to vector<16x9x4xbf16>
    %5 = vector.extract_strided_slice %3 {offsets = [0, 0, 0], sizes = [16, 9, 4], strides = [1, 1, 1]} : vector<18x9x4xbf16> to vector<16x9x4xbf16>
    %6 = vector.extract_strided_slice %4 {offsets = [0, 0, 0], sizes = [16, 8, 4], strides = [1, 1, 1]} : vector<16x9x4xbf16> to vector<16x8x4xbf16>
    %7 = vector.extract_strided_slice %4 {offsets = [0, 1, 0], sizes = [16, 8, 4], strides = [1, 1, 1]} : vector<16x9x4xbf16> to vector<16x8x4xbf16>
    %8 = vector.extract_strided_slice %5 {offsets = [0, 0, 0], sizes = [16, 8, 4], strides = [1, 1, 1]} : vector<16x9x4xbf16> to vector<16x8x4xbf16>
    %9 = vector.extract_strided_slice %5 {offsets = [0, 1, 0], sizes = [16, 8, 4], strides = [1, 1, 1]} : vector<16x9x4xbf16> to vector<16x8x4xbf16>
    %10 = tpu.concatenate %6, %8 in 0 : vector<16x8x4xbf16>, vector<16x8x4xbf16> -> vector<32x8x4xbf16>
    %11 = vector.shape_cast %10 : vector<32x8x4xbf16> to vector<256x4xbf16>
    %12 = tpu.concatenate %8, %7 in 0 : vector<16x8x4xbf16>, vector<16x8x4xbf16> -> vector<32x8x4xbf16>
    %13 = vector.shape_cast %12 : vector<32x8x4xbf16> to vector<256x4xbf16>
    %14 = tpu.concatenate %7, %9 in 0 : vector<16x8x4xbf16>, vector<16x8x4xbf16> -> vector<32x8x4xbf16>
    %15 = vector.shape_cast %14 : vector<32x8x4xbf16> to vector<256x4xbf16>
    %c0_7 = arith.constant 0 : index
    %c0_8 = arith.constant 0 : index
    %c0_9 = arith.constant 0 : index
    %16 = vector.load %arg3[%c0_7, %c0_8, %c0_9] : memref<9x4x128xbf16, #tpu.memory_space<vmem>>, vector<1x4x128xbf16>
    %17 = vector.shape_cast %16 : vector<1x4x128xbf16> to vector<4x128xbf16>
    %cst = arith.constant dense<0.000000e+00> : vector<256x128xf32>
    %18 = tpu.matmul %11, %17, %cst {dimension_numbers = #tpu.dot_dimension_numbers<[1], [0], [0], [1], [0, 0, 1, 1], [], []>} : vector<256x4xbf16>, vector<4x128xbf16>, vector<256x128xf32> -> vector<256x128xf32>
    %c1 = arith.constant 1 : index
    %c0_10 = arith.constant 0 : index
    %c0_11 = arith.constant 0 : index
    %19 = vector.load %arg3[%c1, %c0_10, %c0_11] : memref<9x4x128xbf16, #tpu.memory_space<vmem>>, vector<1x4x128xbf16>
    %20 = vector.shape_cast %19 : vector<1x4x128xbf16> to vector<4x128xbf16>
    %cst_12 = arith.constant dense<0.000000e+00> : vector<256x128xf32>
    %21 = tpu.matmul %13, %20, %cst_12 {dimension_numbers = #tpu.dot_dimension_numbers<[1], [0], [0], [1], [0, 0, 1, 1], [], []>} : vector<256x4xbf16>, vector<4x128xbf16>, vector<256x128xf32> -> vector<256x128xf32>
    %22 = arith.addf %18, %21 : vector<256x128xf32>
    %c2 = arith.constant 2 : index
    %c0_13 = arith.constant 0 : index
    %c0_14 = arith.constant 0 : index
    %23 = vector.load %arg3[%c2, %c0_13, %c0_14] : memref<9x4x128xbf16, #tpu.memory_space<vmem>>, vector<1x4x128xbf16>
    %24 = vector.shape_cast %23 : vector<1x4x128xbf16> to vector<4x128xbf16>
    %cst_15 = arith.constant dense<0.000000e+00> : vector<256x128xf32>
    %25 = tpu.matmul %15, %24, %cst_15 {dimension_numbers = #tpu.dot_dimension_numbers<[1], [0], [0], [1], [0, 0, 1, 1], [], []>} : vector<256x4xbf16>, vector<4x128xbf16>, vector<256x128xf32> -> vector<256x128xf32>
    %26 = arith.addf %22, %25 : vector<256x128xf32>
    %27 = vector.extract_strided_slice %1 {offsets = [1, 0, 0], sizes = [16, 9, 4], strides = [1, 1, 1]} : vector<18x9x4xbf16> to vector<16x9x4xbf16>
    %28 = vector.extract_strided_slice %3 {offsets = [1, 0, 0], sizes = [16, 9, 4], strides = [1, 1, 1]} : vector<18x9x4xbf16> to vector<16x9x4xbf16>
    %29 = vector.extract_strided_slice %27 {offsets = [0, 0, 0], sizes = [16, 8, 4], strides = [1, 1, 1]} : vector<16x9x4xbf16> to vector<16x8x4xbf16>
    %30 = vector.extract_strided_slice %27 {offsets = [0, 1, 0], sizes = [16, 8, 4], strides = [1, 1, 1]} : vector<16x9x4xbf16> to vector<16x8x4xbf16>
    %31 = vector.extract_strided_slice %28 {offsets = [0, 0, 0], sizes = [16, 8, 4], strides = [1, 1, 1]} : vector<16x9x4xbf16> to vector<16x8x4xbf16>
    %32 = vector.extract_strided_slice %28 {offsets = [0, 1, 0], sizes = [16, 8, 4], strides = [1, 1, 1]} : vector<16x9x4xbf16> to vector<16x8x4xbf16>
    %33 = tpu.concatenate %29, %31 in 0 : vector<16x8x4xbf16>, vector<16x8x4xbf16> -> vector<32x8x4xbf16>
    %34 = vector.shape_cast %33 : vector<32x8x4xbf16> to vector<256x4xbf16>
    %35 = tpu.concatenate %31, %30 in 0 : vector<16x8x4xbf16>, vector<16x8x4xbf16> -> vector<32x8x4xbf16>
    %36 = vector.shape_cast %35 : vector<32x8x4xbf16> to vector<256x4xbf16>
    %37 = tpu.concatenate %30, %32 in 0 : vector<16x8x4xbf16>, vector<16x8x4xbf16> -> vector<32x8x4xbf16>
    %38 = vector.shape_cast %37 : vector<32x8x4xbf16> to vector<256x4xbf16>
    %c3 = arith.constant 3 : index
    %c0_16 = arith.constant 0 : index
    %c0_17 = arith.constant 0 : index
    %39 = vector.load %arg3[%c3, %c0_16, %c0_17] : memref<9x4x128xbf16, #tpu.memory_space<vmem>>, vector<1x4x128xbf16>
    %40 = vector.shape_cast %39 : vector<1x4x128xbf16> to vector<4x128xbf16>
    %cst_18 = arith.constant dense<0.000000e+00> : vector<256x128xf32>
    %41 = tpu.matmul %34, %40, %cst_18 {dimension_numbers = #tpu.dot_dimension_numbers<[1], [0], [0], [1], [0, 0, 1, 1], [], []>} : vector<256x4xbf16>, vector<4x128xbf16>, vector<256x128xf32> -> vector<256x128xf32>
    %c4 = arith.constant 4 : index
    %c0_19 = arith.constant 0 : index
    %c0_20 = arith.constant 0 : index
    %42 = vector.load %arg3[%c4, %c0_19, %c0_20] : memref<9x4x128xbf16, #tpu.memory_space<vmem>>, vector<1x4x128xbf16>
    %43 = vector.shape_cast %42 : vector<1x4x128xbf16> to vector<4x128xbf16>
    %cst_21 = arith.constant dense<0.000000e+00> : vector<256x128xf32>
    %44 = tpu.matmul %36, %43, %cst_21 {dimension_numbers = #tpu.dot_dimension_numbers<[1], [0], [0], [1], [0, 0, 1, 1], [], []>} : vector<256x4xbf16>, vector<4x128xbf16>, vector<256x128xf32> -> vector<256x128xf32>
    %45 = arith.addf %41, %44 : vector<256x128xf32>
    %c5 = arith.constant 5 : index
    %c0_22 = arith.constant 0 : index
    %c0_23 = arith.constant 0 : index
    %46 = vector.load %arg3[%c5, %c0_22, %c0_23] : memref<9x4x128xbf16, #tpu.memory_space<vmem>>, vector<1x4x128xbf16>
    %47 = vector.shape_cast %46 : vector<1x4x128xbf16> to vector<4x128xbf16>
    %cst_24 = arith.constant dense<0.000000e+00> : vector<256x128xf32>
    %48 = tpu.matmul %38, %47, %cst_24 {dimension_numbers = #tpu.dot_dimension_numbers<[1], [0], [0], [1], [0, 0, 1, 1], [], []>} : vector<256x4xbf16>, vector<4x128xbf16>, vector<256x128xf32> -> vector<256x128xf32>
    %49 = arith.addf %45, %48 : vector<256x128xf32>
    %50 = arith.addf %26, %49 : vector<256x128xf32>
    %51 = vector.extract_strided_slice %1 {offsets = [2, 0, 0], sizes = [16, 9, 4], strides = [1, 1, 1]} : vector<18x9x4xbf16> to vector<16x9x4xbf16>
    %52 = vector.extract_strided_slice %3 {offsets = [2, 0, 0], sizes = [16, 9, 4], strides = [1, 1, 1]} : vector<18x9x4xbf16> to vector<16x9x4xbf16>
    %53 = vector.extract_strided_slice %51 {offsets = [0, 0, 0], sizes = [16, 8, 4], strides = [1, 1, 1]} : vector<16x9x4xbf16> to vector<16x8x4xbf16>
    %54 = vector.extract_strided_slice %51 {offsets = [0, 1, 0], sizes = [16, 8, 4], strides = [1, 1, 1]} : vector<16x9x4xbf16> to vector<16x8x4xbf16>
    %55 = vector.extract_strided_slice %52 {offsets = [0, 0, 0], sizes = [16, 8, 4], strides = [1, 1, 1]} : vector<16x9x4xbf16> to vector<16x8x4xbf16>
    %56 = vector.extract_strided_slice %52 {offsets = [0, 1, 0], sizes = [16, 8, 4], strides = [1, 1, 1]} : vector<16x9x4xbf16> to vector<16x8x4xbf16>
    %57 = tpu.concatenate %53, %55 in 0 : vector<16x8x4xbf16>, vector<16x8x4xbf16> -> vector<32x8x4xbf16>
    %58 = vector.shape_cast %57 : vector<32x8x4xbf16> to vector<256x4xbf16>
    %59 = tpu.concatenate %55, %54 in 0 : vector<16x8x4xbf16>, vector<16x8x4xbf16> -> vector<32x8x4xbf16>
    %60 = vector.shape_cast %59 : vector<32x8x4xbf16> to vector<256x4xbf16>
    %61 = tpu.concatenate %54, %56 in 0 : vector<16x8x4xbf16>, vector<16x8x4xbf16> -> vector<32x8x4xbf16>
    %62 = vector.shape_cast %61 : vector<32x8x4xbf16> to vector<256x4xbf16>
    %c6 = arith.constant 6 : index
    %c0_25 = arith.constant 0 : index
    %c0_26 = arith.constant 0 : index
    %63 = vector.load %arg3[%c6, %c0_25, %c0_26] : memref<9x4x128xbf16, #tpu.memory_space<vmem>>, vector<1x4x128xbf16>
    %64 = vector.shape_cast %63 : vector<1x4x128xbf16> to vector<4x128xbf16>
    %cst_27 = arith.constant dense<0.000000e+00> : vector<256x128xf32>
    %65 = tpu.matmul %58, %64, %cst_27 {dimension_numbers = #tpu.dot_dimension_numbers<[1], [0], [0], [1], [0, 0, 1, 1], [], []>} : vector<256x4xbf16>, vector<4x128xbf16>, vector<256x128xf32> -> vector<256x128xf32>
    %c7 = arith.constant 7 : index
    %c0_28 = arith.constant 0 : index
    %c0_29 = arith.constant 0 : index
    %66 = vector.load %arg3[%c7, %c0_28, %c0_29] : memref<9x4x128xbf16, #tpu.memory_space<vmem>>, vector<1x4x128xbf16>
    %67 = vector.shape_cast %66 : vector<1x4x128xbf16> to vector<4x128xbf16>
    %cst_30 = arith.constant dense<0.000000e+00> : vector<256x128xf32>
    %68 = tpu.matmul %60, %67, %cst_30 {dimension_numbers = #tpu.dot_dimension_numbers<[1], [0], [0], [1], [0, 0, 1, 1], [], []>} : vector<256x4xbf16>, vector<4x128xbf16>, vector<256x128xf32> -> vector<256x128xf32>
    %69 = arith.addf %65, %68 : vector<256x128xf32>
    %c8 = arith.constant 8 : index
    %c0_31 = arith.constant 0 : index
    %c0_32 = arith.constant 0 : index
    %70 = vector.load %arg3[%c8, %c0_31, %c0_32] : memref<9x4x128xbf16, #tpu.memory_space<vmem>>, vector<1x4x128xbf16>
    %71 = vector.shape_cast %70 : vector<1x4x128xbf16> to vector<4x128xbf16>
    %cst_33 = arith.constant dense<0.000000e+00> : vector<256x128xf32>
    %72 = tpu.matmul %62, %71, %cst_33 {dimension_numbers = #tpu.dot_dimension_numbers<[1], [0], [0], [1], [0, 0, 1, 1], [], []>} : vector<256x4xbf16>, vector<4x128xbf16>, vector<256x128xf32> -> vector<256x128xf32>
    %73 = arith.addf %69, %72 : vector<256x128xf32>
    %74 = arith.addf %50, %73 : vector<256x128xf32>
    %cst_34 = arith.constant dense<0.000000e+00> : vector<128xf32>
    %75 = vector.multi_reduction <add>, %74, %cst_34 [0] : vector<256x128xf32> to vector<128xf32>
    %76 = vector.shape_cast %75 : vector<128xf32> to vector<1x128xf32>
    %c0_35 = arith.constant 0 : index
    %c0_36 = arith.constant 0 : index
    %c0_37 = arith.constant 0 : index
    %77 = vector.load %arg4[%c0_35, %c0_36, %c0_37] : memref<1x2x128xf32, #tpu.memory_space<vmem>>, vector<1x1x128xf32>
    %78 = vector.shape_cast %77 : vector<1x1x128xf32> to vector<1x128xf32>
    %79 = vector.shape_cast %76 : vector<1x128xf32> to vector<1x1x128xf32>
    tpu.vector_store %arg4[%c0_35, %c0_36, %c0_37], %79 {strides = array<i32>} : memref<1x2x128xf32, #tpu.memory_space<vmem>>, vector<1x1x128xf32>,
    %80 = arith.mulf %74, %74 : vector<256x128xf32>
    %cst_38 = arith.constant dense<0.000000e+00> : vector<128xf32>
    %81 = vector.multi_reduction <add>, %80, %cst_38 [0] : vector<256x128xf32> to vector<128xf32>
    %82 = vector.shape_cast %81 : vector<128xf32> to vector<1x128xf32>
    %c0_39 = arith.constant 0 : index
    %c1_40 = arith.constant 1 : index
    %c0_41 = arith.constant 0 : index
    %83 = vector.load %arg4[%c0_39, %c1_40, %c0_41] : memref<1x2x128xf32, #tpu.memory_space<vmem>>, vector<1x1x128xf32>
    %84 = vector.shape_cast %83 : vector<1x1x128xf32> to vector<1x128xf32>
    %85 = vector.shape_cast %82 : vector<1x128xf32> to vector<1x1x128xf32>
    tpu.vector_store %arg4[%c0_39, %c1_40, %c0_41], %85 {strides = array<i32>} : memref<1x2x128xf32, #tpu.memory_space<vmem>>, vector<1x1x128xf32>,
    return
  }
  func.func @transform_0(%arg0: i32) -> (i32, i32, i32, i32) {
    %c0_i32 = arith.constant 0 : i32
    %c0_i32_0 = arith.constant 0 : i32
    %c0_i32_1 = arith.constant 0 : i32
    %c0_i32_2 = arith.constant 0 : i32
    return %arg0, %c0_i32, %c0_i32_0, %c0_i32_1 : i32, i32, i32, i32
  }
  func.func @transform_1(%arg0: i32) -> (i32, i32, i32, i32) {
    %c0_i32 = arith.constant 0 : i32
    %c0_i32_0 = arith.constant 0 : i32
    %c0_i32_1 = arith.constant 0 : i32
    %c0_i32_2 = arith.constant 0 : i32
    return %arg0, %c0_i32, %c0_i32_0, %c0_i32_1 : i32, i32, i32, i32
  }
  func.func @transform_2(%arg0: i32) -> (i32, i32, i32) {
    %c0_i32 = arith.constant 0 : i32
    %c0_i32_0 = arith.constant 0 : i32
    %c0_i32_1 = arith.constant 0 : i32
    %c0_i32_2 = arith.constant 0 : i32
    return %c0_i32, %c0_i32_0, %c0_i32_1 : i32, i32, i32
  }
  func.func @transform_3(%arg0: i32) -> (i32, i32, i32) {
    %c0_i32 = arith.constant 0 : i32
    %c0_i32_0 = arith.constant 0 : i32
    %c0_i32_1 = arith.constant 0 : i32
    return %arg0, %c0_i32, %c0_i32_0 : i32, i32, i32
  }
}

module attributes {stable_mosaic.version = 11 : i64} {
  func.func @_norm_pool_kernel(%arg0: i32, %arg1: memref<1x18x9x4xbf16, #tpu.memory_space<vmem>>, %arg2: memref<1x18x9x4xbf16, #tpu.memory_space<vmem>>, %arg3: memref<9x4x128xbf16, #tpu.memory_space<vmem>>, %arg4: memref<2x128xf32, #tpu.memory_space<vmem>>, %arg5: memref<1x8x8x128xf32, #tpu.memory_space<vmem>>) attributes {dimension_semantics = [#tpu.dimension_semantics<parallel>], iteration_bounds = array<i64: 2>, scalar_prefetch = 0 : i64, scratch_operands = 0 : i64, tpu.core_type = #tpu.core_type<tc>, window_params = [{transform_indices = @transform_0, window_bounds = array<i64: 1, 18, 9, 4>}, {transform_indices = @transform_1, window_bounds = array<i64: 1, 18, 9, 4>}, {pipeline_mode = #tpu.pipeline_mode<synchronous>, transform_indices = @transform_2, window_bounds = array<i64: 9, 4, 128>}, {pipeline_mode = #tpu.pipeline_mode<synchronous>, transform_indices = @transform_3, window_bounds = array<i64: 2, 128>}, {transform_indices = @transform_4, window_bounds = array<i64: 1, 8, 8, 128>}]} {
    %c0 = arith.constant 0 : index
    %c0_0 = arith.constant 0 : index
    %c0_1 = arith.constant 0 : index
    %c0_2 = arith.constant 0 : index
    %0 = vector.load %arg1[%c0, %c0_0, %c0_1, %c0_2] : memref<1x18x9x4xbf16, #tpu.memory_space<vmem>>, vector<1x18x9x4xbf16>
    %1 = vector.shape_cast %0 : vector<1x18x9x4xbf16> to vector<18x9x4xbf16>
    %c0_3 = arith.constant 0 : index
    %c0_4 = arith.constant 0 : index
    %c0_5 = arith.constant 0 : index
    %c0_6 = arith.constant 0 : index
    %2 = vector.load %arg2[%c0_3, %c0_4, %c0_5, %c0_6] : memref<1x18x9x4xbf16, #tpu.memory_space<vmem>>, vector<1x18x9x4xbf16>
    %3 = vector.shape_cast %2 : vector<1x18x9x4xbf16> to vector<18x9x4xbf16>
    %4 = vector.extract_strided_slice %1 {offsets = [0, 0, 0], sizes = [16, 9, 4], strides = [1, 1, 1]} : vector<18x9x4xbf16> to vector<16x9x4xbf16>
    %5 = vector.extract_strided_slice %3 {offsets = [0, 0, 0], sizes = [16, 9, 4], strides = [1, 1, 1]} : vector<18x9x4xbf16> to vector<16x9x4xbf16>
    %6 = vector.extract_strided_slice %4 {offsets = [0, 0, 0], sizes = [16, 8, 4], strides = [1, 1, 1]} : vector<16x9x4xbf16> to vector<16x8x4xbf16>
    %7 = vector.extract_strided_slice %4 {offsets = [0, 1, 0], sizes = [16, 8, 4], strides = [1, 1, 1]} : vector<16x9x4xbf16> to vector<16x8x4xbf16>
    %8 = vector.extract_strided_slice %5 {offsets = [0, 0, 0], sizes = [16, 8, 4], strides = [1, 1, 1]} : vector<16x9x4xbf16> to vector<16x8x4xbf16>
    %9 = vector.extract_strided_slice %5 {offsets = [0, 1, 0], sizes = [16, 8, 4], strides = [1, 1, 1]} : vector<16x9x4xbf16> to vector<16x8x4xbf16>
    %10 = tpu.concatenate %6, %8 in 0 : vector<16x8x4xbf16>, vector<16x8x4xbf16> -> vector<32x8x4xbf16>
    %11 = vector.shape_cast %10 : vector<32x8x4xbf16> to vector<256x4xbf16>
    %12 = tpu.concatenate %8, %7 in 0 : vector<16x8x4xbf16>, vector<16x8x4xbf16> -> vector<32x8x4xbf16>
    %13 = vector.shape_cast %12 : vector<32x8x4xbf16> to vector<256x4xbf16>
    %14 = tpu.concatenate %7, %9 in 0 : vector<16x8x4xbf16>, vector<16x8x4xbf16> -> vector<32x8x4xbf16>
    %15 = vector.shape_cast %14 : vector<32x8x4xbf16> to vector<256x4xbf16>
    %c0_7 = arith.constant 0 : index
    %c0_8 = arith.constant 0 : index
    %c0_9 = arith.constant 0 : index
    %16 = vector.load %arg3[%c0_7, %c0_8, %c0_9] : memref<9x4x128xbf16, #tpu.memory_space<vmem>>, vector<1x4x128xbf16>
    %17 = vector.shape_cast %16 : vector<1x4x128xbf16> to vector<4x128xbf16>
    %cst = arith.constant dense<0.000000e+00> : vector<256x128xf32>
    %18 = tpu.matmul %11, %17, %cst {dimension_numbers = #tpu.dot_dimension_numbers<[1], [0], [0], [1], [0, 0, 1, 1], [], []>} : vector<256x4xbf16>, vector<4x128xbf16>, vector<256x128xf32> -> vector<256x128xf32>
    %c1 = arith.constant 1 : index
    %c0_10 = arith.constant 0 : index
    %c0_11 = arith.constant 0 : index
    %19 = vector.load %arg3[%c1, %c0_10, %c0_11] : memref<9x4x128xbf16, #tpu.memory_space<vmem>>, vector<1x4x128xbf16>
    %20 = vector.shape_cast %19 : vector<1x4x128xbf16> to vector<4x128xbf16>
    %cst_12 = arith.constant dense<0.000000e+00> : vector<256x128xf32>
    %21 = tpu.matmul %13, %20, %cst_12 {dimension_numbers = #tpu.dot_dimension_numbers<[1], [0], [0], [1], [0, 0, 1, 1], [], []>} : vector<256x4xbf16>, vector<4x128xbf16>, vector<256x128xf32> -> vector<256x128xf32>
    %22 = arith.addf %18, %21 : vector<256x128xf32>
    %c2 = arith.constant 2 : index
    %c0_13 = arith.constant 0 : index
    %c0_14 = arith.constant 0 : index
    %23 = vector.load %arg3[%c2, %c0_13, %c0_14] : memref<9x4x128xbf16, #tpu.memory_space<vmem>>, vector<1x4x128xbf16>
    %24 = vector.shape_cast %23 : vector<1x4x128xbf16> to vector<4x128xbf16>
    %cst_15 = arith.constant dense<0.000000e+00> : vector<256x128xf32>
    %25 = tpu.matmul %15, %24, %cst_15 {dimension_numbers = #tpu.dot_dimension_numbers<[1], [0], [0], [1], [0, 0, 1, 1], [], []>} : vector<256x4xbf16>, vector<4x128xbf16>, vector<256x128xf32> -> vector<256x128xf32>
    %26 = arith.addf %22, %25 : vector<256x128xf32>
    %27 = vector.extract_strided_slice %1 {offsets = [1, 0, 0], sizes = [16, 9, 4], strides = [1, 1, 1]} : vector<18x9x4xbf16> to vector<16x9x4xbf16>
    %28 = vector.extract_strided_slice %3 {offsets = [1, 0, 0], sizes = [16, 9, 4], strides = [1, 1, 1]} : vector<18x9x4xbf16> to vector<16x9x4xbf16>
    %29 = vector.extract_strided_slice %27 {offsets = [0, 0, 0], sizes = [16, 8, 4], strides = [1, 1, 1]} : vector<16x9x4xbf16> to vector<16x8x4xbf16>
    %30 = vector.extract_strided_slice %27 {offsets = [0, 1, 0], sizes = [16, 8, 4], strides = [1, 1, 1]} : vector<16x9x4xbf16> to vector<16x8x4xbf16>
    %31 = vector.extract_strided_slice %28 {offsets = [0, 0, 0], sizes = [16, 8, 4], strides = [1, 1, 1]} : vector<16x9x4xbf16> to vector<16x8x4xbf16>
    %32 = vector.extract_strided_slice %28 {offsets = [0, 1, 0], sizes = [16, 8, 4], strides = [1, 1, 1]} : vector<16x9x4xbf16> to vector<16x8x4xbf16>
    %33 = tpu.concatenate %29, %31 in 0 : vector<16x8x4xbf16>, vector<16x8x4xbf16> -> vector<32x8x4xbf16>
    %34 = vector.shape_cast %33 : vector<32x8x4xbf16> to vector<256x4xbf16>
    %35 = tpu.concatenate %31, %30 in 0 : vector<16x8x4xbf16>, vector<16x8x4xbf16> -> vector<32x8x4xbf16>
    %36 = vector.shape_cast %35 : vector<32x8x4xbf16> to vector<256x4xbf16>
    %37 = tpu.concatenate %30, %32 in 0 : vector<16x8x4xbf16>, vector<16x8x4xbf16> -> vector<32x8x4xbf16>
    %38 = vector.shape_cast %37 : vector<32x8x4xbf16> to vector<256x4xbf16>
    %c3 = arith.constant 3 : index
    %c0_16 = arith.constant 0 : index
    %c0_17 = arith.constant 0 : index
    %39 = vector.load %arg3[%c3, %c0_16, %c0_17] : memref<9x4x128xbf16, #tpu.memory_space<vmem>>, vector<1x4x128xbf16>
    %40 = vector.shape_cast %39 : vector<1x4x128xbf16> to vector<4x128xbf16>
    %cst_18 = arith.constant dense<0.000000e+00> : vector<256x128xf32>
    %41 = tpu.matmul %34, %40, %cst_18 {dimension_numbers = #tpu.dot_dimension_numbers<[1], [0], [0], [1], [0, 0, 1, 1], [], []>} : vector<256x4xbf16>, vector<4x128xbf16>, vector<256x128xf32> -> vector<256x128xf32>
    %c4 = arith.constant 4 : index
    %c0_19 = arith.constant 0 : index
    %c0_20 = arith.constant 0 : index
    %42 = vector.load %arg3[%c4, %c0_19, %c0_20] : memref<9x4x128xbf16, #tpu.memory_space<vmem>>, vector<1x4x128xbf16>
    %43 = vector.shape_cast %42 : vector<1x4x128xbf16> to vector<4x128xbf16>
    %cst_21 = arith.constant dense<0.000000e+00> : vector<256x128xf32>
    %44 = tpu.matmul %36, %43, %cst_21 {dimension_numbers = #tpu.dot_dimension_numbers<[1], [0], [0], [1], [0, 0, 1, 1], [], []>} : vector<256x4xbf16>, vector<4x128xbf16>, vector<256x128xf32> -> vector<256x128xf32>
    %45 = arith.addf %41, %44 : vector<256x128xf32>
    %c5 = arith.constant 5 : index
    %c0_22 = arith.constant 0 : index
    %c0_23 = arith.constant 0 : index
    %46 = vector.load %arg3[%c5, %c0_22, %c0_23] : memref<9x4x128xbf16, #tpu.memory_space<vmem>>, vector<1x4x128xbf16>
    %47 = vector.shape_cast %46 : vector<1x4x128xbf16> to vector<4x128xbf16>
    %cst_24 = arith.constant dense<0.000000e+00> : vector<256x128xf32>
    %48 = tpu.matmul %38, %47, %cst_24 {dimension_numbers = #tpu.dot_dimension_numbers<[1], [0], [0], [1], [0, 0, 1, 1], [], []>} : vector<256x4xbf16>, vector<4x128xbf16>, vector<256x128xf32> -> vector<256x128xf32>
    %49 = arith.addf %45, %48 : vector<256x128xf32>
    %50 = arith.addf %26, %49 : vector<256x128xf32>
    %51 = vector.extract_strided_slice %1 {offsets = [2, 0, 0], sizes = [16, 9, 4], strides = [1, 1, 1]} : vector<18x9x4xbf16> to vector<16x9x4xbf16>
    %52 = vector.extract_strided_slice %3 {offsets = [2, 0, 0], sizes = [16, 9, 4], strides = [1, 1, 1]} : vector<18x9x4xbf16> to vector<16x9x4xbf16>
    %53 = vector.extract_strided_slice %51 {offsets = [0, 0, 0], sizes = [16, 8, 4], strides = [1, 1, 1]} : vector<16x9x4xbf16> to vector<16x8x4xbf16>
    %54 = vector.extract_strided_slice %51 {offsets = [0, 1, 0], sizes = [16, 8, 4], strides = [1, 1, 1]} : vector<16x9x4xbf16> to vector<16x8x4xbf16>
    %55 = vector.extract_strided_slice %52 {offsets = [0, 0, 0], sizes = [16, 8, 4], strides = [1, 1, 1]} : vector<16x9x4xbf16> to vector<16x8x4xbf16>
    %56 = vector.extract_strided_slice %52 {offsets = [0, 1, 0], sizes = [16, 8, 4], strides = [1, 1, 1]} : vector<16x9x4xbf16> to vector<16x8x4xbf16>
    %57 = tpu.concatenate %53, %55 in 0 : vector<16x8x4xbf16>, vector<16x8x4xbf16> -> vector<32x8x4xbf16>
    %58 = vector.shape_cast %57 : vector<32x8x4xbf16> to vector<256x4xbf16>
    %59 = tpu.concatenate %55, %54 in 0 : vector<16x8x4xbf16>, vector<16x8x4xbf16> -> vector<32x8x4xbf16>
    %60 = vector.shape_cast %59 : vector<32x8x4xbf16> to vector<256x4xbf16>
    %61 = tpu.concatenate %54, %56 in 0 : vector<16x8x4xbf16>, vector<16x8x4xbf16> -> vector<32x8x4xbf16>
    %62 = vector.shape_cast %61 : vector<32x8x4xbf16> to vector<256x4xbf16>
    %c6 = arith.constant 6 : index
    %c0_25 = arith.constant 0 : index
    %c0_26 = arith.constant 0 : index
    %63 = vector.load %arg3[%c6, %c0_25, %c0_26] : memref<9x4x128xbf16, #tpu.memory_space<vmem>>, vector<1x4x128xbf16>
    %64 = vector.shape_cast %63 : vector<1x4x128xbf16> to vector<4x128xbf16>
    %cst_27 = arith.constant dense<0.000000e+00> : vector<256x128xf32>
    %65 = tpu.matmul %58, %64, %cst_27 {dimension_numbers = #tpu.dot_dimension_numbers<[1], [0], [0], [1], [0, 0, 1, 1], [], []>} : vector<256x4xbf16>, vector<4x128xbf16>, vector<256x128xf32> -> vector<256x128xf32>
    %c7 = arith.constant 7 : index
    %c0_28 = arith.constant 0 : index
    %c0_29 = arith.constant 0 : index
    %66 = vector.load %arg3[%c7, %c0_28, %c0_29] : memref<9x4x128xbf16, #tpu.memory_space<vmem>>, vector<1x4x128xbf16>
    %67 = vector.shape_cast %66 : vector<1x4x128xbf16> to vector<4x128xbf16>
    %cst_30 = arith.constant dense<0.000000e+00> : vector<256x128xf32>
    %68 = tpu.matmul %60, %67, %cst_30 {dimension_numbers = #tpu.dot_dimension_numbers<[1], [0], [0], [1], [0, 0, 1, 1], [], []>} : vector<256x4xbf16>, vector<4x128xbf16>, vector<256x128xf32> -> vector<256x128xf32>
    %69 = arith.addf %65, %68 : vector<256x128xf32>
    %c8 = arith.constant 8 : index
    %c0_31 = arith.constant 0 : index
    %c0_32 = arith.constant 0 : index
    %70 = vector.load %arg3[%c8, %c0_31, %c0_32] : memref<9x4x128xbf16, #tpu.memory_space<vmem>>, vector<1x4x128xbf16>
    %71 = vector.shape_cast %70 : vector<1x4x128xbf16> to vector<4x128xbf16>
    %cst_33 = arith.constant dense<0.000000e+00> : vector<256x128xf32>
    %72 = tpu.matmul %62, %71, %cst_33 {dimension_numbers = #tpu.dot_dimension_numbers<[1], [0], [0], [1], [0, 0, 1, 1], [], []>} : vector<256x4xbf16>, vector<4x128xbf16>, vector<256x128xf32> -> vector<256x128xf32>
    %73 = arith.addf %69, %72 : vector<256x128xf32>
    %74 = arith.addf %50, %73 : vector<256x128xf32>
    %c0_34 = arith.constant 0 : index
    %c0_35 = arith.constant 0 : index
    %75 = vector.load %arg4[%c0_34, %c0_35] : memref<2x128xf32, #tpu.memory_space<vmem>>, vector<1x128xf32>
    %c1_36 = arith.constant 1 : index
    %c0_37 = arith.constant 0 : index
    %76 = vector.load %arg4[%c1_36, %c0_37] : memref<2x128xf32, #tpu.memory_space<vmem>>, vector<1x128xf32>
    %77 = vector.broadcast %75 : vector<1x128xf32> to vector<256x128xf32>
    %78 = arith.mulf %74, %77 : vector<256x128xf32>
    %79 = vector.broadcast %76 : vector<1x128xf32> to vector<256x128xf32>
    %80 = arith.addf %78, %79 : vector<256x128xf32>
    %cst_38 = arith.constant 0.000000e+00 : f32
    %81 = vector.broadcast %cst_38 : f32 to vector<256x128xf32>
    %82 = arith.maximumf %80, %81 : vector<256x128xf32>
    %83 = vector.extract_strided_slice %82 {offsets = [0, 0], sizes = [128, 128], strides = [1, 1]} : vector<256x128xf32> to vector<128x128xf32>
    %84 = vector.extract_strided_slice %82 {offsets = [128, 0], sizes = [128, 128], strides = [1, 1]} : vector<256x128xf32> to vector<128x128xf32>
    %85 = arith.maximumf %83, %84 : vector<128x128xf32>
    %86 = vector.shape_cast %85 : vector<128x128xf32> to vector<8x2x8x128xf32>
    %87 = vector.extract_strided_slice %86 {offsets = [0, 0, 0, 0], sizes = [8, 1, 8, 128], strides = [1, 1, 1, 1]} : vector<8x2x8x128xf32> to vector<8x1x8x128xf32>
    %88 = vector.shape_cast %87 : vector<8x1x8x128xf32> to vector<8x8x128xf32>
    %89 = vector.extract_strided_slice %86 {offsets = [0, 1, 0, 0], sizes = [8, 1, 8, 128], strides = [1, 1, 1, 1]} : vector<8x2x8x128xf32> to vector<8x1x8x128xf32>
    %90 = vector.shape_cast %89 : vector<8x1x8x128xf32> to vector<8x8x128xf32>
    %91 = arith.maximumf %88, %90 : vector<8x8x128xf32>
    %92 = vector.shape_cast %91 : vector<8x8x128xf32> to vector<1x8x8x128xf32>
    %c0_39 = arith.constant 0 : index
    %c0_40 = arith.constant 0 : index
    %c0_41 = arith.constant 0 : index
    %c0_42 = arith.constant 0 : index
    %93 = vector.load %arg5[%c0_39, %c0_40, %c0_41, %c0_42] : memref<1x8x8x128xf32, #tpu.memory_space<vmem>>, vector<1x8x8x128xf32>
    tpu.vector_store %arg5[%c0_39, %c0_40, %c0_41, %c0_42], %92 {strides = array<i32>} : memref<1x8x8x128xf32, #tpu.memory_space<vmem>>, vector<1x8x8x128xf32>,
    return
  }
  func.func @transform_0(%arg0: i32) -> (i32, i32, i32, i32) {
    %c0_i32 = arith.constant 0 : i32
    %c0_i32_0 = arith.constant 0 : i32
    %c0_i32_1 = arith.constant 0 : i32
    %c0_i32_2 = arith.constant 0 : i32
    return %arg0, %c0_i32, %c0_i32_0, %c0_i32_1 : i32, i32, i32, i32
  }
  func.func @transform_1(%arg0: i32) -> (i32, i32, i32, i32) {
    %c0_i32 = arith.constant 0 : i32
    %c0_i32_0 = arith.constant 0 : i32
    %c0_i32_1 = arith.constant 0 : i32
    %c0_i32_2 = arith.constant 0 : i32
    return %arg0, %c0_i32, %c0_i32_0, %c0_i32_1 : i32, i32, i32, i32
  }
  func.func @transform_2(%arg0: i32) -> (i32, i32, i32) {
    %c0_i32 = arith.constant 0 : i32
    %c0_i32_0 = arith.constant 0 : i32
    %c0_i32_1 = arith.constant 0 : i32
    %c0_i32_2 = arith.constant 0 : i32
    return %c0_i32, %c0_i32_0, %c0_i32_1 : i32, i32, i32
  }
  func.func @transform_3(%arg0: i32) -> (i32, i32) {
    %c0_i32 = arith.constant 0 : i32
    %c0_i32_0 = arith.constant 0 : i32
    %c0_i32_1 = arith.constant 0 : i32
    return %c0_i32, %c0_i32_0 : i32, i32
  }
  func.func @transform_4(%arg0: i32) -> (i32, i32, i32, i32) {
    %c0_i32 = arith.constant 0 : i32
    %c0_i32_0 = arith.constant 0 : i32
    %c0_i32_1 = arith.constant 0 : i32
    %c0_i32_2 = arith.constant 0 : i32
    return %arg0, %c0_i32, %c0_i32_0, %c0_i32_1 : i32, i32, i32, i32
  }
}

</mosaic_0001>

<llo_original>
// kernel: _conv3_2d_forward.2
$region0: #{_conv3_2d_forward.2}
  #allocation0 [shape = 'u32[]', space=smem, size = 0x4, offset = 0x4, fixed_abs, tag = 'smem constant byte address 0x4 - core index']
  #allocation1 [shape = 'u32[144,128]{1,0:T(1,128)}', space=vmem, size = 0x12000, scoped, tag = 'internal scratch']
  %s0 = inlined_call_operand.vmem [shape: bf16[2,18,9,4], index: 0, kind: input, shape index: {}]
  %s1 = inlined_call_operand.vmem [shape: bf16[2,18,9,4], index: 1, kind: input, shape index: {}]
  %s2 = inlined_call_operand.vmem [shape: bf16[9,4,128], index: 2, kind: input, shape index: {}]
  %s3 = inlined_call_operand.vmem [shape: f32[2,2,128], index: 3, kind: output, shape index: {}]
  %s4 = sld [smem:[#allocation0]]
  $region45: #{_conv3_2d_forward.2} parent=0
    _
  %s6 = ssub.s32 1, %s4
  %s7 = scalar_select 0, %s6, %s4
  loop: start=0, step=1, limit=4
  $region2: #{_conv3_2d_forward.2} parent=0 // loop_pre_header
    _
  $region3: #{_conv3_2d_forward.2} parent=0 // loop_header
    %s9 = sphi 0, %s13
    %p10 = scmp.ge.s32.totalorder %s9, 4
    %s19 = sphi 0, %s21
    %s22 = sphi 0, %s19
    %s23 = sphi 0, %s22
    %s39 = sphi 0, %s23
    %s45 = sphi 0, %s47
    %s48 = sphi 0, %s45
    %s49 = sphi 0, %s48
    %s65 = sphi 0, %s49
    %s69 = sphi 0, %s69
    %s71 = sphi 0, %s69
    %s72 = sphi 0, %s71
    %s86 = sphi 0, %s72
    %s92 = sphi 0, %s94
    %s95 = sphi 0, %s92
    %s96 = sphi 0, %s95
    %s112 = sphi 0, %s96
  $region4: #{_conv3_2d_forward.2} parent=0 // loop_header_branch
    %12 = sbr.rel (%p10) target = $region8
  $region5: #{_conv3_2d_forward.2} parent=0 // loop_body
    %s14 = ssub.s32 %s9, 1
    %s15 = ssub.s32 %s9, 2
    %s16 = sadd.s32 %s9, 1
    %s17 = ssub.s32 %s9, %s16
    %p18 = scmp.eq.s32.totalorder %s17, 0
    %s20 = sadd.s32 %s19, 1
    %s21 = scalar_select %p18, %s19, %s20
    %p24 = pneg %p18
    %p25 = scmp.eq.s32.totalorder %s9, 1
    %p26 = por %p24, %p25
    %p27 = scmp.ne.s32.totalorder %s19, %s22
    %p28 = scmp.eq.s32.totalorder %s9, 0
    %p29 = por %p27, %p28
    %p30 = scmp.ne.s32.totalorder %s19, %s22
    %p31 = scmp.eq.s32.totalorder %s14, 1
    %p32 = por %p30, %p31
    %p33 = scmp.ne.s32.totalorder %s22, %s23
    %p34 = scmp.eq.s32.totalorder %s14, 0
    %p35 = por %p33, %p34
    %p36 = scmp.ne.s32.totalorder %s22, %s23
    %p37 = scmp.eq.s32.totalorder %s15, 1
    %p38 = por %p36, %p37
    %p40 = scmp.ne.s32.totalorder %s23, %s39
    %p41 = scmp.eq.s32.totalorder %s15, 0
    %p42 = por %p40, %p41
    %s43 = ssub.s32 %s9, %s16
    %p44 = scmp.eq.s32.totalorder %s43, 0
    %s46 = sadd.s32 %s45, 1
    %s47 = scalar_select %p44, %s45, %s46
    %p50 = pneg %p44
    %p51 = scmp.eq.s32.totalorder %s9, 1
    %p52 = por %p50, %p51
    %p53 = scmp.ne.s32.totalorder %s45, %s48
    %p54 = scmp.eq.s32.totalorder %s9, 0
    %p55 = por %p53, %p54
    %p56 = scmp.ne.s32.totalorder %s45, %s48
    %p57 = scmp.eq.s32.totalorder %s14, 1
    %p58 = por %p56, %p57
    %p59 = scmp.ne.s32.totalorder %s48, %s49
    %p60 = scmp.eq.s32.totalorder %s14, 0
    %p61 = por %p59, %p60
    %p62 = scmp.ne.s32.totalorder %s48, %s49
    %p63 = scmp.eq.s32.totalorder %s15, 1
    %p64 = por %p62, %p63
    %p66 = scmp.ne.s32.totalorder %s49, %s65
    %p67 = scmp.eq.s32.totalorder %s15, 0
    %p68 = por %p66, %p67
    %s70 = sadd.s32 %s69, 1
    %p73 = scmp.eq.s32.totalorder %s9, 1
    %p74 = scmp.ne.s32.totalorder %s69, %s71
    %p75 = scmp.eq.s32.totalorder %s9, 0
    %p76 = por %p74, %p75
    %p77 = scmp.ne.s32.totalorder %s69, %s71
    %p78 = scmp.eq.s32.totalorder %s14, 1
    %p79 = por %p77, %p78
    %p80 = scmp.ne.s32.totalorder %s71, %s72
    %p81 = scmp.eq.s32.totalorder %s14, 0
    %p82 = por %p80, %p81
    %p83 = scmp.ne.s32.totalorder %s71, %s72
    %p84 = scmp.eq.s32.totalorder %s15, 1
    %p85 = por %p83, %p84
    %p87 = scmp.ne.s32.totalorder %s72, %s86
    %p88 = scmp.eq.s32.totalorder %s15, 0
    %p89 = por %p87, %p88
    %s90 = ssub.s32 %s9, %s16
    %p91 = scmp.eq.s32.totalorder %s90, 0
    %s93 = sadd.s32 %s92, 1
    %s94 = scalar_select %p91, %s92, %s93
    %p97 = pneg %p91
    %p98 = scmp.eq.s32.totalorder %s9, 1
    %p99 = por %p97, %p98
    %p100 = scmp.ne.s32.totalorder %s92, %s95
    %p101 = scmp.eq.s32.totalorder %s9, 0
    %p102 = por %p100, %p101
    %p103 = scmp.ne.s32.totalorder %s92, %s95
    %p104 = scmp.eq.s32.totalorder %s14, 1
    %p105 = por %p103, %p104
    %p106 = scmp.ne.s32.totalorder %s95, %s96
    %p107 = scmp.eq.s32.totalorder %s14, 0
    %p108 = por %p106, %p107
    %p109 = scmp.ne.s32.totalorder %s95, %s96
    %p110 = scmp.eq.s32.totalorder %s15, 1
    %p111 = por %p109, %p110
    %p113 = scmp.ne.s32.totalorder %s96, %s112
    %p114 = scmp.eq.s32.totalorder %s15, 0
    %p115 = por %p113, %p114
    %p116 = scmp.le.s32.totalorder 1, %s9
    %p117 = scmp.lt.s32.totalorder %s9, 3
    %p118 = pnand %p116, %p117
    %p119 = pneg %p118
    // Predicated region
    $region9: #{_conv3_2d_forward.2} parent=5 // pred_check
      _
    $region10: #{_conv3_2d_forward.2} parent=5 // pred_check_branch
      %121 = sbr.rel (%p118) target = $region12
    $region11: #{_conv3_2d_forward.2} parent=5 // pred_region
      %s122 = ssub.s32 %s9, 1
      // Predicated region
      $region13: #{_conv3_2d_forward.2} parent=11 // pred_check
        %p123 = pneg %p82
      $region14: #{_conv3_2d_forward.2} parent=11 // pred_check_branch
        %125 = sbr.rel (%p123) target = $region16
      $region15: #{_conv3_2d_forward.2} parent=11 // pred_region
        _
      $region16: #{_conv3_2d_forward.2} parent=11 // pred_fallthru
        _
    $region12: #{_conv3_2d_forward.2} parent=5 // pred_fallthru
      _
    %p126 = scmp.lt.s32.totalorder %s9, 2
    // Predicated region
    $region17: #{_conv3_2d_forward.2} parent=5 // pred_check
      %p127 = pneg %p126
    $region18: #{_conv3_2d_forward.2} parent=5 // pred_check_branch
      %129 = sbr.rel (%p127) target = $region20
    $region19: #{_conv3_2d_forward.2} parent=5 // pred_region
      // Predicated region
      $region21: #{_conv3_2d_forward.2} parent=19 // pred_check
        %p130 = pneg %p29
      $region22: #{_conv3_2d_forward.2} parent=19 // pred_check_branch
        %132 = sbr.rel (%p130) target = $region24
      $region23: #{_conv3_2d_forward.2} parent=19 // pred_region
        %p133 = scmp.lt.s32.totalorder %s9, 1
        %s134 = scalar_select %p133, %s9, 1
        %s135 = smul.addr %s134, 36
        %s136 = smul.addr %s135, 4
        %s137 = scalar_lea.vmem %s0, %s136
      $region24: #{_conv3_2d_forward.2} parent=19 // pred_fallthru
        _
      // Predicated region
      $region25: #{_conv3_2d_forward.2} parent=19 // pred_check
        %p138 = pneg %p55
      $region26: #{_conv3_2d_forward.2} parent=19 // pred_check_branch
        %140 = sbr.rel (%p138) target = $region28
      $region27: #{_conv3_2d_forward.2} parent=19 // pred_region
        %p141 = scmp.lt.s32.totalorder %s9, 1
        %s142 = scalar_select %p141, %s9, 1
        %s143 = smul.addr %s142, 36
        %s144 = smul.addr %s143, 4
        %s145 = scalar_lea.vmem %s1, %s144
      $region28: #{_conv3_2d_forward.2} parent=19 // pred_fallthru
        _
    $region20: #{_conv3_2d_forward.2} parent=5 // pred_fallthru
      _
    %p146 = scmp.le.s32.totalorder 1, %s9
    %p147 = scmp.lt.s32.totalorder %s9, 3
    %p148 = pnand %p146, %p147
    %p149 = pneg %p148
    // Predicated region
    $region29: #{_conv3_2d_forward.2} parent=5 // pred_check
      _
    $region30: #{_conv3_2d_forward.2} parent=5 // pred_check_branch
      %151 = sbr.rel (%p148) target = $region32
    $region31: #{_conv3_2d_forward.2} parent=5 // pred_region
      %s152 = ssub.s32 %s9, 1
      %p153 = scmp.lt.s32.totalorder %s14, 1
      %s154 = scalar_select %p153, %s14, 1
      %s155 = smul.addr %s154, 36
      %s156 = smul.addr %s155, 4
      %s157 = scalar_lea.vmem %s0, %s156
      %p158 = pneg %p35
      %p159 = pneg %p32
      %p160 = scmp.lt.s32.totalorder %s14, 1
      %s161 = scalar_select %p160, %s14, 1
      %s162 = smul.addr %s161, 36
      %s163 = smul.addr %s162, 4
      %s164 = scalar_lea.vmem %s1, %s163
      %p165 = pneg %p61
      %p166 = pneg %p58
      %p167 = pneg %p82
      %p168 = pneg %p79
      %p169 = pneg %p108
      %p170 = pneg %p105
      %p171 = scmp.lt.s32.totalorder %s14, 1
      %s172 = scalar_select %p171, %s14, 1
      %s173 = smul.addr %s172, 2
      %s174 = scalar_lea.vmem %s3, %s173
      %p175 = scmp.lt.s32.totalorder %s14, 1
      %s176 = scalar_select %p175, %s14, 1
      %s177 = smul.addr %s176, 36
      %s178 = smul.addr %s177, 4
      %s179 = scalar_lea.vmem %s0, %s178
      %p180 = scmp.lt.s32.totalorder %s14, 1
      %s181 = scalar_select %p180, %s14, 1
      %s182 = smul.addr %s181, 36
      %s183 = smul.addr %s182, 4
      %s184 = scalar_lea.vmem %s1, %s183
      %p185 = scmp.lt.s32.totalorder %s14, 1
      %s186 = scalar_select %p185, %s14, 1
      %s187 = smul.addr %s186, 2
      %s188 = scalar_lea.vmem %s3, %s187
      %v190 = vld [vmem:[%s179] sm:$0xf]
      %v191 = vld [vmem:[%s179 + $0x4] sm:$0x1]
      %v192 = vld [vmem:[%s179 + $0x8] sm:$0xf]
      %v193 = vld [vmem:[%s179 + $0xc] sm:$0x1]
      %v194 = vld [vmem:[%s179 + $0x10] sm:$0xf]
      %v195 = vld [vmem:[%s179 + $0x14] sm:$0x1]
      %v196 = vld [vmem:[%s179 + $0x18] sm:$0xf]
      %v197 = vld [vmem:[%s179 + $0x1c] sm:$0x1]
      %v198 = vld [vmem:[%s179 + $0x20] sm:$0xf]
      %v199 = vld [vmem:[%s179 + $0x24] sm:$0x1]
      %v200 = vld [vmem:[%s179 + $0x28] sm:$0xf]
      %v201 = vld [vmem:[%s179 + $0x2c] sm:$0x1]
      %v202 = vld [vmem:[%s179 + $0x30] sm:$0xf]
      %v203 = vld [vmem:[%s179 + $0x34] sm:$0x1]
      %v204 = vld [vmem:[%s179 + $0x38] sm:$0xf]
      %v205 = vld [vmem:[%s179 + $0x3c] sm:$0x1]
      %v206 = vld [vmem:[%s179 + $0x40] sm:$0xf]
      %v207 = vld [vmem:[%s179 + $0x44] sm:$0x1]
      %v208 = vld [vmem:[%s179 + $0x48] sm:$0xf]
      %v209 = vld [vmem:[%s179 + $0x4c] sm:$0x1]
      %v210 = vld [vmem:[%s179 + $0x50] sm:$0xf]
      %v211 = vld [vmem:[%s179 + $0x54] sm:$0x1]
      %v212 = vld [vmem:[%s179 + $0x58] sm:$0xf]
      %v213 = vld [vmem:[%s179 + $0x5c] sm:$0x1]
      %v214 = vld [vmem:[%s179 + $0x60] sm:$0xf]
      %v215 = vld [vmem:[%s179 + $0x64] sm:$0x1]
      %v216 = vld [vmem:[%s179 + $0x68] sm:$0xf]
      %v217 = vld [vmem:[%s179 + $0x6c] sm:$0x1]
      %v218 = vld [vmem:[%s179 + $0x70] sm:$0xf]
      %v219 = vld [vmem:[%s179 + $0x74] sm:$0x1]
      %v220 = vld [vmem:[%s179 + $0x78] sm:$0xf]
      %v221 = vld [vmem:[%s179 + $0x7c] sm:$0x1]
      %v222 = vld [vmem:[%s179 + $0x80] sm:$0xf]
      %v223 = vld [vmem:[%s179 + $0x84] sm:$0x1]
      %v224 = vld [vmem:[%s179 + $0x88] sm:$0xf]
      %v225 = vld [vmem:[%s179 + $0x8c] sm:$0x1]
      %v226 = vld [vmem:[%s184] sm:$0xf]
      %v227 = vld [vmem:[%s184 + $0x4] sm:$0x1]
      %v228 = vld [vmem:[%s184 + $0x8] sm:$0xf]
      %v229 = vld [vmem:[%s184 + $0xc] sm:$0x1]
      %v230 = vld [vmem:[%s184 + $0x10] sm:$0xf]
      %v231 = vld [vmem:[%s184 + $0x14] sm:$0x1]
      %v232 = vld [vmem:[%s184 + $0x18] sm:$0xf]
      %v233 = vld [vmem:[%s184 + $0x1c] sm:$0x1]
      %v234 = vld [vmem:[%s184 + $0x20] sm:$0xf]
      %v235 = vld [vmem:[%s184 + $0x24] sm:$0x1]
      %v236 = vld [vmem:[%s184 + $0x28] sm:$0xf]
      %v237 = vld [vmem:[%s184 + $0x2c] sm:$0x1]
      %v238 = vld [vmem:[%s184 + $0x30] sm:$0xf]
      %v239 = vld [vmem:[%s184 + $0x34] sm:$0x1]
      %v240 = vld [vmem:[%s184 + $0x38] sm:$0xf]
      %v241 = vld [vmem:[%s184 + $0x3c] sm:$0x1]
      %v242 = vld [vmem:[%s184 + $0x40] sm:$0xf]
      %v243 = vld [vmem:[%s184 + $0x44] sm:$0x1]
      %v244 = vld [vmem:[%s184 + $0x48] sm:$0xf]
      %v245 = vld [vmem:[%s184 + $0x4c] sm:$0x1]
      %v246 = vld [vmem:[%s184 + $0x50] sm:$0xf]
      %v247 = vld [vmem:[%s184 + $0x54] sm:$0x1]
      %v248 = vld [vmem:[%s184 + $0x58] sm:$0xf]
      %v249 = vld [vmem:[%s184 + $0x5c] sm:$0x1]
      %v250 = vld [vmem:[%s184 + $0x60] sm:$0xf]
      %v251 = vld [vmem:[%s184 + $0x64] sm:$0x1]
      %v252 = vld [vmem:[%s184 + $0x68] sm:$0xf]
      %v253 = vld [vmem:[%s184 + $0x6c] sm:$0x1]
      %v254 = vld [vmem:[%s184 + $0x70] sm:$0xf]
      %v255 = vld [vmem:[%s184 + $0x74] sm:$0x1]
      %v256 = vld [vmem:[%s184 + $0x78] sm:$0xf]
      %v257 = vld [vmem:[%s184 + $0x7c] sm:$0x1]
      %v258 = vld [vmem:[%s184 + $0x80] sm:$0xf]
      %v259 = vld [vmem:[%s184 + $0x84] sm:$0x1]
      %v260 = vld [vmem:[%s184 + $0x88] sm:$0xf]
      %v261 = vld [vmem:[%s184 + $0x8c] sm:$0x1]
      %vm262 = vsmask.f32 3328
      %vm263 = vsmask.f32 7440
      %vm264 = vmor %vm262, %vm263
      %v266 = vshrl.u32 %v190, 16
      %v268 = vrot.slane %v266, 4
      %v269 = vshll.u32 %v190, 16
      %v271 = vrot.slane %v269, 5
      %v272 = vor.u32 %v268, %v271
      %v273 = vrot.slane %v272, 4
      %v275 = vshll.u32 %v191, 16
      %v277 = vrot.slane %v275, 5
      %v278 = vsel %vm264, %v273, %v277
      %v280 = vshrl.u32 %v192, 16
      %v282 = vrot.slane %v280, 4
      %v283 = vshll.u32 %v192, 16
      %v285 = vrot.slane %v283, 5
      %v286 = vor.u32 %v282, %v285
      %v287 = vrot.slane %v286, 4
      %v289 = vshll.u32 %v193, 16
      %v291 = vrot.slane %v289, 5
      %v292 = vsel %vm264, %v287, %v291
      %v294 = vshrl.u32 %v194, 16
      %v296 = vrot.slane %v294, 4
      %v297 = vshll.u32 %v194, 16
      %v299 = vrot.slane %v297, 5
      %v300 = vor.u32 %v296, %v299
      %v301 = vrot.slane %v300, 4
      %v303 = vshll.u32 %v195, 16
      %v305 = vrot.slane %v303, 5
      %v306 = vsel %vm264, %v301, %v305
      %v308 = vshrl.u32 %v196, 16
      %v310 = vrot.slane %v308, 4
      %v311 = vshll.u32 %v196, 16
      %v313 = vrot.slane %v311, 5
      %v314 = vor.u32 %v310, %v313
      %v315 = vrot.slane %v314, 4
      %v317 = vshll.u32 %v197, 16
      %v319 = vrot.slane %v317, 5
      %v320 = vsel %vm264, %v315, %v319
      %v322 = vshrl.u32 %v198, 16
      %v324 = vrot.slane %v322, 4
      %v325 = vshll.u32 %v198, 16
      %v327 = vrot.slane %v325, 5
      %v328 = vor.u32 %v324, %v327
      %v329 = vrot.slane %v328, 4
      %v331 = vshll.u32 %v199, 16
      %v333 = vrot.slane %v331, 5
      %v334 = vsel %vm264, %v329, %v333
      %v336 = vshrl.u32 %v200, 16
      %v338 = vrot.slane %v336, 4
      %v339 = vshll.u32 %v200, 16
      %v341 = vrot.slane %v339, 5
      %v342 = vor.u32 %v338, %v341
      %v343 = vrot.slane %v342, 4
      %v345 = vshll.u32 %v201, 16
      %v347 = vrot.slane %v345, 5
      %v348 = vsel %vm264, %v343, %v347
      %v350 = vshrl.u32 %v202, 16
      %v352 = vrot.slane %v350, 4
      %v353 = vshll.u32 %v202, 16
      %v355 = vrot.slane %v353, 5
      %v356 = vor.u32 %v352, %v355
      %v357 = vrot.slane %v356, 4
      %v359 = vshll.u32 %v203, 16
      %v361 = vrot.slane %v359, 5
      %v362 = vsel %vm264, %v357, %v361
      %v364 = vshrl.u32 %v204, 16
      %v366 = vrot.slane %v364, 4
      %v367 = vshll.u32 %v204, 16
      %v369 = vrot.slane %v367, 5
      %v370 = vor.u32 %v366, %v369
      %v371 = vrot.slane %v370, 4
      %v373 = vshll.u32 %v205, 16
      %v375 = vrot.slane %v373, 5
      %v376 = vsel %vm264, %v371, %v375
      %v378 = vshrl.u32 %v206, 16
      %v380 = vrot.slane %v378, 4
      %v381 = vshll.u32 %v206, 16
      %v383 = vrot.slane %v381, 5
      %v384 = vor.u32 %v380, %v383
      %v385 = vrot.slane %v384, 4
      %v387 = vshll.u32 %v207, 16
      %v389 = vrot.slane %v387, 5
      %v390 = vsel %vm264, %v385, %v389
      %v392 = vshrl.u32 %v208, 16
      %v394 = vrot.slane %v392, 4
      %v395 = vshll.u32 %v208, 16
      %v397 = vrot.slane %v395, 5
      %v398 = vor.u32 %v394, %v397
      %v399 = vrot.slane %v398, 4
      %v401 = vshll.u32 %v209, 16
      %v403 = vrot.slane %v401, 5
      %v404 = vsel %vm264, %v399, %v403
      %v406 = vshrl.u32 %v210, 16
      %v408 = vrot.slane %v406, 4
      %v409 = vshll.u32 %v210, 16
      %v411 = vrot.slane %v409, 5
      %v412 = vor.u32 %v408, %v411
      %v413 = vrot.slane %v412, 4
      %v415 = vshll.u32 %v211, 16
      %v417 = vrot.slane %v415, 5
      %v418 = vsel %vm264, %v413, %v417
      %v420 = vshrl.u32 %v212, 16
      %v422 = vrot.slane %v420, 4
      %v423 = vshll.u32 %v212, 16
      %v425 = vrot.slane %v423, 5
      %v426 = vor.u32 %v422, %v425
      %v427 = vrot.slane %v426, 4
      %v429 = vshll.u32 %v213, 16
      %v431 = vrot.slane %v429, 5
      %v432 = vsel %vm264, %v427, %v431
      %v434 = vshrl.u32 %v214, 16
      %v436 = vrot.slane %v434, 4
      %v437 = vshll.u32 %v214, 16
      %v439 = vrot.slane %v437, 5
      %v440 = vor.u32 %v436, %v439
      %v441 = vrot.slane %v440, 4
      %v443 = vshll.u32 %v215, 16
      %v445 = vrot.slane %v443, 5
      %v446 = vsel %vm264, %v441, %v445
      %v448 = vshrl.u32 %v216, 16
      %v450 = vrot.slane %v448, 4
      %v451 = vshll.u32 %v216, 16
      %v453 = vrot.slane %v451, 5
      %v454 = vor.u32 %v450, %v453
      %v455 = vrot.slane %v454, 4
      %v457 = vshll.u32 %v217, 16
      %v459 = vrot.slane %v457, 5
      %v460 = vsel %vm264, %v455, %v459
      %v462 = vshrl.u32 %v218, 16
      %v464 = vrot.slane %v462, 4
      %v465 = vshll.u32 %v218, 16
      %v467 = vrot.slane %v465, 5
      %v468 = vor.u32 %v464, %v467
      %v469 = vrot.slane %v468, 4
      %v471 = vshll.u32 %v219, 16
      %v473 = vrot.slane %v471, 5
      %v474 = vsel %vm264, %v469, %v473
      %v476 = vshrl.u32 %v220, 16
      %v478 = vrot.slane %v476, 4
      %v479 = vshll.u32 %v220, 16
      %v481 = vrot.slane %v479, 5
      %v482 = vor.u32 %v478, %v481
      %v483 = vrot.slane %v482, 4
      %v485 = vshll.u32 %v221, 16
      %v487 = vrot.slane %v485, 5
      %v488 = vsel %vm264, %v483, %v487
      %v490 = vshrl.u32 %v226, 16
      %v492 = vrot.slane %v490, 4
      %v493 = vshll.u32 %v226, 16
      %v495 = vrot.slane %v493, 5
      %v496 = vor.u32 %v492, %v495
      %v497 = vrot.slane %v496, 4
      %v499 = vshll.u32 %v227, 16
      %v501 = vrot.slane %v499, 5
      %v502 = vsel %vm264, %v497, %v501
      %v504 = vshrl.u32 %v228, 16
      %v506 = vrot.slane %v504, 4
      %v507 = vshll.u32 %v228, 16
      %v509 = vrot.slane %v507, 5
      %v510 = vor.u32 %v506, %v509
      %v511 = vrot.slane %v510, 4
      %v513 = vshll.u32 %v229, 16
      %v515 = vrot.slane %v513, 5
      %v516 = vsel %vm264, %v511, %v515
      %v518 = vshrl.u32 %v230, 16
      %v520 = vrot.slane %v518, 4
      %v521 = vshll.u32 %v230, 16
      %v523 = vrot.slane %v521, 5
      %v524 = vor.u32 %v520, %v523
      %v525 = vrot.slane %v524, 4
      %v527 = vshll.u32 %v231, 16
      %v529 = vrot.slane %v527, 5
      %v530 = vsel %vm264, %v525, %v529
      %v532 = vshrl.u32 %v232, 16
      %v534 = vrot.slane %v532, 4
      %v535 = vshll.u32 %v232, 16
      %v537 = vrot.slane %v535, 5
      %v538 = vor.u32 %v534, %v537
      %v539 = vrot.slane %v538, 4
      %v541 = vshll.u32 %v233, 16
      %v543 = vrot.slane %v541, 5
      %v544 = vsel %vm264, %v539, %v543
      %v546 = vshrl.u32 %v234, 16
      %v548 = vrot.slane %v546, 4
      %v549 = vshll.u32 %v234, 16
      %v551 = vrot.slane %v549, 5
      %v552 = vor.u32 %v548, %v551
      %v553 = vrot.slane %v552, 4
      %v555 = vshll.u32 %v235, 16
      %v557 = vrot.slane %v555, 5
      %v558 = vsel %vm264, %v553, %v557
      %v560 = vshrl.u32 %v236, 16
      %v562 = vrot.slane %v560, 4
      %v563 = vshll.u32 %v236, 16
      %v565 = vrot.slane %v563, 5
      %v566 = vor.u32 %v562, %v565
      %v567 = vrot.slane %v566, 4
      %v569 = vshll.u32 %v237, 16
      %v571 = vrot.slane %v569, 5
      %v572 = vsel %vm264, %v567, %v571
      %v574 = vshrl.u32 %v238, 16
      %v576 = vrot.slane %v574, 4
      %v577 = vshll.u32 %v238, 16
      %v579 = vrot.slane %v577, 5
      %v580 = vor.u32 %v576, %v579
      %v581 = vrot.slane %v580, 4
      %v583 = vshll.u32 %v239, 16
      %v585 = vrot.slane %v583, 5
      %v586 = vsel %vm264, %v581, %v585
      %v588 = vshrl.u32 %v240, 16
      %v590 = vrot.slane %v588, 4
      %v591 = vshll.u32 %v240, 16
      %v593 = vrot.slane %v591, 5
      %v594 = vor.u32 %v590, %v593
      %v595 = vrot.slane %v594, 4
      %v597 = vshll.u32 %v241, 16
      %v599 = vrot.slane %v597, 5
      %v600 = vsel %vm264, %v595, %v599
      %v602 = vshrl.u32 %v242, 16
      %v604 = vrot.slane %v602, 4
      %v605 = vshll.u32 %v242, 16
      %v607 = vrot.slane %v605, 5
      %v608 = vor.u32 %v604, %v607
      %v609 = vrot.slane %v608, 4
      %v611 = vshll.u32 %v243, 16
      %v613 = vrot.slane %v611, 5
      %v614 = vsel %vm264, %v609, %v613
      %v616 = vshrl.u32 %v244, 16
      %v618 = vrot.slane %v616, 4
      %v619 = vshll.u32 %v244, 16
      %v621 = vrot.slane %v619, 5
      %v622 = vor.u32 %v618, %v621
      %v623 = vrot.slane %v622, 4
      %v625 = vshll.u32 %v245, 16
      %v627 = vrot.slane %v625, 5
      %v628 = vsel %vm264, %v623, %v627
      %v630 = vshrl.u32 %v246, 16
      %v632 = vrot.slane %v630, 4
      %v633 = vshll.u32 %v246, 16
      %v635 = vrot.slane %v633, 5
      %v636 = vor.u32 %v632, %v635
      %v637 = vrot.slane %v636, 4
      %v639 = vshll.u32 %v247, 16
      %v641 = vrot.slane %v639, 5
      %v642 = vsel %vm264, %v637, %v641
      %v644 = vshrl.u32 %v248, 16
      %v646 = vrot.slane %v644, 4
      %v647 = vshll.u32 %v248, 16
      %v649 = vrot.slane %v647, 5
      %v650 = vor.u32 %v646, %v649
      %v651 = vrot.slane %v650, 4
      %v653 = vshll.u32 %v249, 16
      %v655 = vrot.slane %v653, 5
      %v656 = vsel %vm264, %v651, %v655
      %v658 = vshrl.u32 %v250, 16
      %v660 = vrot.slane %v658, 4
      %v661 = vshll.u32 %v250, 16
      %v663 = vrot.slane %v661, 5
      %v664 = vor.u32 %v660, %v663
      %v665 = vrot.slane %v664, 4
      %v667 = vshll.u32 %v251, 16
      %v669 = vrot.slane %v667, 5
      %v670 = vsel %vm264, %v665, %v669
      %v672 = vshrl.u32 %v252, 16
      %v674 = vrot.slane %v672, 4
      %v675 = vshll.u32 %v252, 16
      %v677 = vrot.slane %v675, 5
      %v678 = vor.u32 %v674, %v677
      %v679 = vrot.slane %v678, 4
      %v681 = vshll.u32 %v253, 16
      %v683 = vrot.slane %v681, 5
      %v684 = vsel %vm264, %v679, %v683
      %v686 = vshrl.u32 %v254, 16
      %v688 = vrot.slane %v686, 4
      %v689 = vshll.u32 %v254, 16
      %v691 = vrot.slane %v689, 5
      %v692 = vor.u32 %v688, %v691
      %v693 = vrot.slane %v692, 4
      %v695 = vshll.u32 %v255, 16
      %v697 = vrot.slane %v695, 5
      %v698 = vsel %vm264, %v693, %v697
      %v700 = vshrl.u32 %v256, 16
      %v702 = vrot.slane %v700, 4
      %v703 = vshll.u32 %v256, 16
      %v705 = vrot.slane %v703, 5
      %v706 = vor.u32 %v702, %v705
      %v707 = vrot.slane %v706, 4
      %v709 = vshll.u32 %v257, 16
      %v711 = vrot.slane %v709, 5
      %v712 = vsel %vm264, %v707, %v711
      %v713 = vld [vmem:[%s2] sm:$0x3]
      %s714 = scalar_lea.vmem %s2, 2
      %v715 = vld [vmem:[%s714] sm:$0x3]
      %v732 = vunpack.c.l.b16 %v226
      %v733 = vunpack.c.l.b16 %v228
      %v734 = vunpack.c.l.b16 %v230
      %v735 = vunpack.c.l.b16 %v232
      %v736 = vunpack.c.l.b16 %v234
      %v737 = vunpack.c.l.b16 %v236
      %v738 = vunpack.c.l.b16 %v238
      %v739 = vunpack.c.l.b16 %v240
      %v740 = vunpack.c.l.b16 %v242
      %v741 = vunpack.c.l.b16 %v244
      %v742 = vunpack.c.l.b16 %v246
      %v743 = vunpack.c.l.b16 %v248
      %v744 = vunpack.c.l.b16 %v250
      %v745 = vunpack.c.l.b16 %v252
      %v746 = vunpack.c.l.b16 %v254
      %v747 = vunpack.c.l.b16 %v256
      %v748 = vunpack.c.l.b16 %v278
      %v749 = vunpack.c.l.b16 %v292
      %v750 = vunpack.c.l.b16 %v306
      %v751 = vunpack.c.l.b16 %v320
      %v752 = vunpack.c.l.b16 %v334
      %v753 = vunpack.c.l.b16 %v348
      %v754 = vunpack.c.l.b16 %v362
      %v755 = vunpack.c.l.b16 %v376
      %v756 = vunpack.c.l.b16 %v390
      %v757 = vunpack.c.l.b16 %v404
      %v758 = vunpack.c.l.b16 %v418
      %v759 = vunpack.c.l.b16 %v432
      %v760 = vunpack.c.l.b16 %v446
      %v761 = vunpack.c.l.b16 %v460
      %v762 = vunpack.c.l.b16 %v474
      %v763 = vunpack.c.l.b16 %v488
      %v764 = vpack.c.b16 %v733, %v732
      %v765 = vpack.c.b16 %v735, %v734
      %v766 = vpack.c.b16 %v737, %v736
      %v767 = vpack.c.b16 %v739, %v738
      %v768 = vpack.c.b16 %v741, %v740
      %v769 = vpack.c.b16 %v743, %v742
      %v770 = vpack.c.b16 %v745, %v744
      %v771 = vpack.c.b16 %v747, %v746
      %v772 = vpack.c.b16 %v749, %v748
      %v773 = vpack.c.b16 %v751, %v750
      %v774 = vpack.c.b16 %v753, %v752
      %v775 = vpack.c.b16 %v755, %v754
      %v776 = vpack.c.b16 %v757, %v756
      %v777 = vpack.c.b16 %v759, %v758
      %v778 = vpack.c.b16 %v761, %v760
      %v779 = vpack.c.b16 %v763, %v762
      %vm780 = vcmask 31744
      %v782 = vsel %vm780, %v764, 0
      %v785 = vsel %vm780, %v765, 0
      %v788 = vsel %vm780, %v766, 0
      %v791 = vsel %vm780, %v767, 0
      %v794 = vsel %vm780, %v768, 0
      %v797 = vsel %vm780, %v769, 0
      %v800 = vsel %vm780, %v770, 0
      %v803 = vsel %vm780, %v771, 0
      %v806 = vsel %vm780, %v772, 0
      %v809 = vsel %vm780, %v773, 0
      %v812 = vsel %vm780, %v774, 0
      %v815 = vsel %vm780, %v775, 0
      %v818 = vsel %vm780, %v776, 0
      %v821 = vsel %vm780, %v777, 0
      %v824 = vsel %vm780, %v778, 0
      %v827 = vsel %vm780, %v779, 0
      %vm829 = vcmask 1041408
      %v831 = vsel %vm829, %v715, 0
      %833 = vmatprep.subr.bf16.mxu0 0
      %834 = vmatpush1.bf16.msra.mxu0 %v831
      %835 = vmatprep.subr.bf16.mxu0 0
      %836 = vmatpush1.bf16.msra.mxu0 0
      %837 = vmatprep.subr.bf16.mxu0 0
      %838 = vmatpush1.bf16.msra.mxu0 0
      %839 = vmatprep.subr.bf16.mxu0 0
      %840 = vmatpush1.bf16.msra.mxu0 0
      %841 = vmatprep.subr.bf16.mxu0 0
      %842 = vmatpush1.bf16.msra.mxu0 0
      %843 = vmatprep.subr.bf16.mxu0 0
      %844 = vmatpush1.bf16.msra.mxu0 0
      %845 = vmatprep.subr.bf16.mxu0 0
      %846 = vmatpush1.bf16.msra.mxu0 0
      %847 = vmatprep.subr.bf16.mxu0 0
      %848 = vmatpush1.bf16.msra.mxu0 0
      %849 = vmatprep.subr.bf16.mxu0 0
      %850 = vmatpush1.bf16.msra.mxu0 0
      %851 = vmatprep.subr.bf16.mxu0 0
      %852 = vmatpush1.bf16.msra.mxu0 0
      %853 = vmatprep.subr.bf16.mxu0 0
      %854 = vmatpush1.bf16.msra.mxu0 0
      %855 = vmatprep.subr.bf16.mxu0 0
      %856 = vmatpush1.bf16.msra.mxu0 0
      %857 = vmatprep.subr.bf16.mxu0 0
      %858 = vmatpush1.bf16.msra.mxu0 0
      %859 = vmatprep.subr.bf16.mxu0 0
      %860 = vmatpush1.bf16.msra.mxu0 0
      %861 = vmatprep.subr.bf16.mxu0 0
      %862 = vmatpush1.bf16.msra.mxu0 0
      %863 = vmatprep.subr.bf16.mxu0 0
      %864 = vmatpush1.bf16.msra.mxu0 0
      %865 = vmatprep.mubr.bf16.mxu0 0
      %866 = vmatmul.mubr.bf16.gmra.mrb[0].mxu0 %v782
      %v867 = vpop.f32.mrb[0].mxu0
      %v868 = vadd.f32 0.0, %v867
      %v869 = vpop.f32.mrb[0].mxu0
      %v870 = vpop.f32.mrb[0].mxu0
      %v871 = vadd.f32 0.0, %v870
      %v872 = vpop.f32.mrb[0].mxu0
      %873 = vmatprep.mubr.bf16.mxu0 0
      %874 = vmatmul.mubr.bf16.gmra.mrb[0].mxu0 %v785
      %v875 = vpop.f32.mrb[0].mxu0
      %v876 = vadd.f32 0.0, %v875
      %v877 = vpop.f32.mrb[0].mxu0
      %v878 = vpop.f32.mrb[0].mxu0
      %v879 = vadd.f32 0.0, %v878
      %v880 = vpop.f32.mrb[0].mxu0
      %881 = vmatprep.mubr.bf16.mxu0 0
      %882 = vmatmul.mubr.bf16.gmra.mrb[0].mxu0 %v788
      %v883 = vpop.f32.mrb[0].mxu0
      %v884 = vadd.f32 0.0, %v883
      %v885 = vpop.f32.mrb[0].mxu0
      %v886 = vpop.f32.mrb[0].mxu0
      %v887 = vadd.f32 0.0, %v886
      %v888 = vpop.f32.mrb[0].mxu0
      %889 = vmatprep.mubr.bf16.mxu0 0
      %890 = vmatmul.mubr.bf16.gmra.mrb[0].mxu0 %v791
      %v891 = vpop.f32.mrb[0].mxu0
      %v892 = vadd.f32 0.0, %v891
      %v893 = vpop.f32.mrb[0].mxu0
      %v894 = vpop.f32.mrb[0].mxu0
      %v895 = vadd.f32 0.0, %v894
      %v896 = vpop.f32.mrb[0].mxu0
      %897 = vmatprep.mubr.bf16.mxu0 0
      %898 = vmatmul.mubr.bf16.gmra.mrb[0].mxu0 %v794
      %v899 = vpop.f32.mrb[0].mxu0
      %v900 = vadd.f32 0.0, %v899
      %v901 = vpop.f32.mrb[0].mxu0
      %v902 = vpop.f32.mrb[0].mxu0
      %v903 = vadd.f32 0.0, %v902
      %v904 = vpop.f32.mrb[0].mxu0
      %905 = vmatprep.mubr.bf16.mxu0 0
      %906 = vmatmul.mubr.bf16.gmra.mrb[0].mxu0 %v797
      %v907 = vpop.f32.mrb[0].mxu0
      %v908 = vadd.f32 0.0, %v907
      %v909 = vpop.f32.mrb[0].mxu0
      %v910 = vpop.f32.mrb[0].mxu0
      %v911 = vadd.f32 0.0, %v910
      %v912 = vpop.f32.mrb[0].mxu0
      %913 = vmatprep.mubr.bf16.mxu0 0
      %914 = vmatmul.mubr.bf16.gmra.mrb[0].mxu0 %v800
      %v915 = vpop.f32.mrb[0].mxu0
      %v916 = vadd.f32 0.0, %v915
      %v917 = vpop.f32.mrb[0].mxu0
      %v918 = vpop.f32.mrb[0].mxu0
      %v919 = vadd.f32 0.0, %v918
      %v920 = vpop.f32.mrb[0].mxu0
      %921 = vmatprep.mubr.bf16.mxu0 0
      %922 = vmatmul.mubr.bf16.gmra.mrb[0].mxu0 %v803
      %v923 = vpop.f32.mrb[0].mxu0
      %v924 = vadd.f32 0.0, %v923
      %v925 = vpop.f32.mrb[0].mxu0
      %v926 = vpop.f32.mrb[0].mxu0
      %v927 = vadd.f32 0.0, %v926
      %v928 = vpop.f32.mrb[0].mxu0
      %929 = vmatprep.mubr.bf16.mxu0 0
      %930 = vmatmul.mubr.bf16.gmra.mrb[0].mxu0 %v806
      %v931 = vpop.f32.mrb[0].mxu0
      %v932 = vadd.f32 0.0, %v931
      %v933 = vpop.f32.mrb[0].mxu0
      %v934 = vpop.f32.mrb[0].mxu0
      %v935 = vadd.f32 0.0, %v934
      %v936 = vpop.f32.mrb[0].mxu0
      %937 = vmatprep.mubr.bf16.mxu0 0
      %938 = vmatmul.mubr.bf16.gmra.mrb[0].mxu0 %v809
      %v939 = vpop.f32.mrb[0].mxu0
      %v940 = vadd.f32 0.0, %v939
      %v941 = vpop.f32.mrb[0].mxu0
      %v942 = vpop.f32.mrb[0].mxu0
      %v943 = vadd.f32 0.0, %v942
      %v944 = vpop.f32.mrb[0].mxu0
      %945 = vmatprep.mubr.bf16.mxu0 0
      %946 = vmatmul.mubr.bf16.gmra.mrb[0].mxu0 %v812
      %v947 = vpop.f32.mrb[0].mxu0
      %v948 = vadd.f32 0.0, %v947
      %v949 = vpop.f32.mrb[0].mxu0
      %v950 = vpop.f32.mrb[0].mxu0
      %v951 = vadd.f32 0.0, %v950
      %v952 = vpop.f32.mrb[0].mxu0
      %953 = vmatprep.mubr.bf16.mxu0 0
      %954 = vmatmul.mubr.bf16.gmra.mrb[0].mxu0 %v815
      %v955 = vpop.f32.mrb[0].mxu0
      %v956 = vadd.f32 0.0, %v955
      %v957 = vpop.f32.mrb[0].mxu0
      %v958 = vpop.f32.mrb[0].mxu0
      %v959 = vadd.f32 0.0, %v958
      %v960 = vpop.f32.mrb[0].mxu0
      %961 = vmatprep.mubr.bf16.mxu0 0
      %962 = vmatmul.mubr.bf16.gmra.mrb[0].mxu0 %v818
      %v963 = vpop.f32.mrb[0].mxu0
      %v964 = vadd.f32 0.0, %v963
      %v965 = vpop.f32.mrb[0].mxu0
      %v966 = vpop.f32.mrb[0].mxu0
      %v967 = vadd.f32 0.0, %v966
      %v968 = vpop.f32.mrb[0].mxu0
      %969 = vmatprep.mubr.bf16.mxu0 0
      %970 = vmatmul.mubr.bf16.gmra.mrb[0].mxu0 %v821
      %v971 = vpop.f32.mrb[0].mxu0
      %v972 = vadd.f32 0.0, %v971
      %v973 = vpop.f32.mrb[0].mxu0
      %v974 = vpop.f32.mrb[0].mxu0
      %v975 = vadd.f32 0.0, %v974
      %v976 = vpop.f32.mrb[0].mxu0
      %977 = vmatprep.mubr.bf16.mxu0 0
      %978 = vmatmul.mubr.bf16.gmra.mrb[0].mxu0 %v824
      %v979 = vpop.f32.mrb[0].mxu0
      %v980 = vadd.f32 0.0, %v979
      %v981 = vpop.f32.mrb[0].mxu0
      %v982 = vpop.f32.mrb[0].mxu0
      %v983 = vadd.f32 0.0, %v982
      %v984 = vpop.f32.mrb[0].mxu0
      %985 = vmatprep.mubr.bf16.mxu0 0
      %986 = vmatmul.mubr.bf16.gmra.mrb[0].mxu0 %v827
      %v987 = vpop.f32.mrb[0].mxu0
      %v988 = vadd.f32 0.0, %v987
      %v989 = vpop.f32.mrb[0].mxu0
      %v990 = vpop.f32.mrb[0].mxu0
      %v991 = vadd.f32 0.0, %v990
      %v992 = vpop.f32.mrb[0].mxu0
      %993 = vdwg.mxu0
      %v1010 = vunpack.c.l.b16 %v190
      %v1011 = vunpack.c.l.b16 %v192
      %v1012 = vunpack.c.l.b16 %v194
      %v1013 = vunpack.c.l.b16 %v196
      %v1014 = vunpack.c.l.b16 %v198
      %v1015 = vunpack.c.l.b16 %v200
      %v1016 = vunpack.c.l.b16 %v202
      %v1017 = vunpack.c.l.b16 %v204
      %v1018 = vunpack.c.l.b16 %v206
      %v1019 = vunpack.c.l.b16 %v208
      %v1020 = vunpack.c.l.b16 %v210
      %v1021 = vunpack.c.l.b16 %v212
      %v1022 = vunpack.c.l.b16 %v214
      %v1023 = vunpack.c.l.b16 %v216
      %v1024 = vunpack.c.l.b16 %v218
      %v1025 = vunpack.c.l.b16 %v220
      %v1026 = vpack.c.b16 %v1011, %v1010
      %v1027 = vpack.c.b16 %v1013, %v1012
      %v1028 = vpack.c.b16 %v1015, %v1014
      %v1029 = vpack.c.b16 %v1017, %v1016
      %v1030 = vpack.c.b16 %v1019, %v1018
      %v1031 = vpack.c.b16 %v1021, %v1020
      %v1032 = vpack.c.b16 %v1023, %v1022
      %v1033 = vpack.c.b16 %v1025, %v1024
      %v1035 = vsel %vm780, %v1026, 0
      %v1038 = vsel %vm780, %v1027, 0
      %v1041 = vsel %vm780, %v1028, 0
      %v1044 = vsel %vm780, %v1029, 0
      %v1047 = vsel %vm780, %v1030, 0
      %v1050 = vsel %vm780, %v1031, 0
      %v1053 = vsel %vm780, %v1032, 0
      %v1056 = vsel %vm780, %v1033, 0
      %v1059 = vsel %vm829, %v713, 0
      %1061 = vmatprep.subr.bf16.mxu0 0
      %1062 = vmatpush1.bf16.msra.mxu0 %v1059
      %1063 = vmatprep.subr.bf16.mxu0 0
      %1064 = vmatpush1.bf16.msra.mxu0 0
      %1065 = vmatprep.subr.bf16.mxu0 0
      %1066 = vmatpush1.bf16.msra.mxu0 0
      %1067 = vmatprep.subr.bf16.mxu0 0
      %1068 = vmatpush1.bf16.msra.mxu0 0
      %1069 = vmatprep.subr.bf16.mxu0 0
      %1070 = vmatpush1.bf16.msra.mxu0 0
      %1071 = vmatprep.subr.bf16.mxu0 0
      %1072 = vmatpush1.bf16.msra.mxu0 0
      %1073 = vmatprep.subr.bf16.mxu0 0
      %1074 = vmatpush1.bf16.msra.mxu0 0
      %1075 = vmatprep.subr.bf16.mxu0 0
      %1076 = vmatpush1.bf16.msra.mxu0 0
      %1077 = vmatprep.subr.bf16.mxu0 0
      %1078 = vmatpush1.bf16.msra.mxu0 0
      %1079 = vmatprep.subr.bf16.mxu0 0
      %1080 = vmatpush1.bf16.msra.mxu0 0
      %1081 = vmatprep.subr.bf16.mxu0 0
      %1082 = vmatpush1.bf16.msra.mxu0 0
      %1083 = vmatprep.subr.bf16.mxu0 0
      %1084 = vmatpush1.bf16.msra.mxu0 0
      %1085 = vmatprep.subr.bf16.mxu0 0
      %1086 = vmatpush1.bf16.msra.mxu0 0
      %1087 = vmatprep.subr.bf16.mxu0 0
      %1088 = vmatpush1.bf16.msra.mxu0 0
      %1089 = vmatprep.subr.bf16.mxu0 0
      %1090 = vmatpush1.bf16.msra.mxu0 0
      %1091 = vmatprep.subr.bf16.mxu0 0
      %1092 = vmatpush1.bf16.msra.mxu0 0
      %1093 = vmatprep.mubr.bf16.mxu0 0
      %1094 = vmatmul.mubr.bf16.gmra.mrb[0].mxu0 %v1035
      %v1095 = vpop.f32.mrb[0].mxu0
      %v1096 = vadd.f32 %v868, %v1095
      %v1097 = vpop.f32.mrb[0].mxu0
      %v1098 = vpop.f32.mrb[0].mxu0
      %v1099 = vadd.f32 %v871, %v1098
      %v1100 = vpop.f32.mrb[0].mxu0
      %1101 = vmatprep.mubr.bf16.mxu0 0
      %1102 = vmatmul.mubr.bf16.gmra.mrb[0].mxu0 %v1038
      %v1103 = vpop.f32.mrb[0].mxu0
      %v1104 = vadd.f32 %v876, %v1103
      %v1105 = vpop.f32.mrb[0].mxu0
      %v1106 = vpop.f32.mrb[0].mxu0
      %v1107 = vadd.f32 %v879, %v1106
      %v1108 = vpop.f32.mrb[0].mxu0
      %1109 = vmatprep.mubr.bf16.mxu0 0
      %1110 = vmatmul.mubr.bf16.gmra.mrb[0].mxu0 %v1041
      %v1111 = vpop.f32.mrb[0].mxu0
      %v1112 = vadd.f32 %v884, %v1111
      %v1113 = vpop.f32.mrb[0].mxu0
      %v1114 = vpop.f32.mrb[0].mxu0
      %v1115 = vadd.f32 %v887, %v1114
      %v1116 = vpop.f32.mrb[0].mxu0
      %1117 = vmatprep.mubr.bf16.mxu0 0
      %1118 = vmatmul.mubr.bf16.gmra.mrb[0].mxu0 %v1044
      %v1119 = vpop.f32.mrb[0].mxu0
      %v1120 = vadd.f32 %v892, %v1119
      %v1121 = vpop.f32.mrb[0].mxu0
      %v1122 = vpop.f32.mrb[0].mxu0
      %v1123 = vadd.f32 %v895, %v1122
      %v1124 = vpop.f32.mrb[0].mxu0
      %1125 = vmatprep.mubr.bf16.mxu0 0
      %1126 = vmatmul.mubr.bf16.gmra.mrb[0].mxu0 %v1047
      %v1127 = vpop.f32.mrb[0].mxu0
      %v1128 = vadd.f32 %v900, %v1127
      %v1129 = vpop.f32.mrb[0].mxu0
      %v1130 = vpop.f32.mrb[0].mxu0
      %v1131 = vadd.f32 %v903, %v1130
      %v1132 = vpop.f32.mrb[0].mxu0
      %1133 = vmatprep.mubr.bf16.mxu0 0
      %1134 = vmatmul.mubr.bf16.gmra.mrb[0].mxu0 %v1050
      %v1135 = vpop.f32.mrb[0].mxu0
      %v1136 = vadd.f32 %v908, %v1135
      %v1137 = vpop.f32.mrb[0].mxu0
      %v1138 = vpop.f32.mrb[0].mxu0
      %v1139 = vadd.f32 %v911, %v1138
      %v1140 = vpop.f32.mrb[0].mxu0
      %1141 = vmatprep.mubr.bf16.mxu0 0
      %1142 = vmatmul.mubr.bf16.gmra.mrb[0].mxu0 %v1053
      %v1143 = vpop.f32.mrb[0].mxu0
      %v1144 = vadd.f32 %v916, %v1143
      %v1145 = vpop.f32.mrb[0].mxu0
      %v1146 = vpop.f32.mrb[0].mxu0
      %v1147 = vadd.f32 %v919, %v1146
      %v1148 = vpop.f32.mrb[0].mxu0
      %1149 = vmatprep.mubr.bf16.mxu0 0
      %1150 = vmatmul.mubr.bf16.gmra.mrb[0].mxu0 %v1056
      %v1151 = vpop.f32.mrb[0].mxu0
      %v1152 = vadd.f32 %v924, %v1151
      %v1153 = vpop.f32.mrb[0].mxu0
      %v1154 = vpop.f32.mrb[0].mxu0
      %v1155 = vadd.f32 %v927, %v1154
      %v1156 = vpop.f32.mrb[0].mxu0
      %1157 = vmatprep.mubr.bf16.mxu0 0
      %1158 = vmatmul.mubr.bf16.gmra.mrb[0].mxu0 %v782
      %v1159 = vpop.f32.mrb[0].mxu0
      %v1160 = vadd.f32 %v932, %v1159
      %v1161 = vpop.f32.mrb[0].mxu0
      %v1162 = vpop.f32.mrb[0].mxu0
      %v1163 = vadd.f32 %v935, %v1162
      %v1164 = vpop.f32.mrb[0].mxu0
      %1165 = vmatprep.mubr.bf16.mxu0 0
      %1166 = vmatmul.mubr.bf16.gmra.mrb[0].mxu0 %v785
      %v1167 = vpop.f32.mrb[0].mxu0
      %v1168 = vadd.f32 %v940, %v1167
      %v1169 = vpop.f32.mrb[0].mxu0
      %v1170 = vpop.f32.mrb[0].mxu0
      %v1171 = vadd.f32 %v943, %v1170
      %v1172 = vpop.f32.mrb[0].mxu0
      %1173 = vmatprep.mubr.bf16.mxu0 0
      %1174 = vmatmul.mubr.bf16.gmra.mrb[0].mxu0 %v788
      %v1175 = vpop.f32.mrb[0].mxu0
      %v1176 = vadd.f32 %v948, %v1175
      %v1177 = vpop.f32.mrb[0].mxu0
      %v1178 = vpop.f32.mrb[0].mxu0
      %v1179 = vadd.f32 %v951, %v1178
      %v1180 = vpop.f32.mrb[0].mxu0
      %1181 = vmatprep.mubr.bf16.mxu0 0
      %1182 = vmatmul.mubr.bf16.gmra.mrb[0].mxu0 %v791
      %v1183 = vpop.f32.mrb[0].mxu0
      %v1184 = vadd.f32 %v956, %v1183
      %v1185 = vpop.f32.mrb[0].mxu0
      %v1186 = vpop.f32.mrb[0].mxu0
      %v1187 = vadd.f32 %v959, %v1186
      %v1188 = vpop.f32.mrb[0].mxu0
      %1189 = vmatprep.mubr.bf16.mxu0 0
      %1190 = vmatmul.mubr.bf16.gmra.mrb[0].mxu0 %v794
      %v1191 = vpop.f32.mrb[0].mxu0
      %v1192 = vadd.f32 %v964, %v1191
      %v1193 = vpop.f32.mrb[0].mxu0
      %v1194 = vpop.f32.mrb[0].mxu0
      %v1195 = vadd.f32 %v967, %v1194
      %v1196 = vpop.f32.mrb[0].mxu0
      %1197 = vmatprep.mubr.bf16.mxu0 0
      %1198 = vmatmul.mubr.bf16.gmra.mrb[0].mxu0 %v797
      %v1199 = vpop.f32.mrb[0].mxu0
      %v1200 = vadd.f32 %v972, %v1199
      %v1201 = vpop.f32.mrb[0].mxu0
      %v1202 = vpop.f32.mrb[0].mxu0
      %v1203 = vadd.f32 %v975, %v1202
      %v1204 = vpop.f32.mrb[0].mxu0
      %1205 = vmatprep.mubr.bf16.mxu0 0
      %1206 = vmatmul.mubr.bf16.gmra.mrb[0].mxu0 %v800
      %v1207 = vpop.f32.mrb[0].mxu0
      %v1208 = vadd.f32 %v980, %v1207
      %v1209 = vpop.f32.mrb[0].mxu0
      %v1210 = vpop.f32.mrb[0].mxu0
      %v1211 = vadd.f32 %v983, %v1210
      %v1212 = vpop.f32.mrb[0].mxu0
      %1213 = vmatprep.mubr.bf16.mxu0 0
      %1214 = vmatmul.mubr.bf16.gmra.mrb[0].mxu0 %v803
      %v1215 = vpop.f32.mrb[0].mxu0
      %v1216 = vadd.f32 %v988, %v1215
      %v1217 = vpop.f32.mrb[0].mxu0
      %v1218 = vpop.f32.mrb[0].mxu0
      %v1219 = vadd.f32 %v991, %v1218
      %v1220 = vpop.f32.mrb[0].mxu0
      %1221 = vdwg.mxu0
      %s1222 = scalar_lea.vmem %s2, 4
      %v1223 = vld [vmem:[%s1222] sm:$0x3]
      %v1224 = vunpack.c.l.b16 %v502
      %v1225 = vunpack.c.l.b16 %v516
      %v1226 = vunpack.c.l.b16 %v530
      %v1227 = vunpack.c.l.b16 %v544
      %v1228 = vunpack.c.l.b16 %v558
      %v1229 = vunpack.c.l.b16 %v572
      %v1230 = vunpack.c.l.b16 %v586
      %v1231 = vunpack.c.l.b16 %v600
      %v1232 = vunpack.c.l.b16 %v614
      %v1233 = vunpack.c.l.b16 %v628
      %v1234 = vunpack.c.l.b16 %v642
      %v1235 = vunpack.c.l.b16 %v656
      %v1236 = vunpack.c.l.b16 %v670
      %v1237 = vunpack.c.l.b16 %v684
      %v1238 = vunpack.c.l.b16 %v698
      %v1239 = vunpack.c.l.b16 %v712
      %v1240 = vpack.c.b16 %v1225, %v1224
      %v1241 = vpack.c.b16 %v1227, %v1226
      %v1242 = vpack.c.b16 %v1229, %v1228
      %v1243 = vpack.c.b16 %v1231, %v1230
      %v1244 = vpack.c.b16 %v1233, %v1232
      %v1245 = vpack.c.b16 %v1235, %v1234
      %v1246 = vpack.c.b16 %v1237, %v1236
      %v1247 = vpack.c.b16 %v1239, %v1238
      %v1249 = vsel %vm780, %v1240, 0
      %v1252 = vsel %vm780, %v1241, 0
      %v1255 = vsel %vm780, %v1242, 0
      %v1258 = vsel %vm780, %v1243, 0
      %v1261 = vsel %vm780, %v1244, 0
      %v1264 = vsel %vm780, %v1245, 0
      %v1267 = vsel %vm780, %v1246, 0
      %v1270 = vsel %vm780, %v1247, 0
      %v1273 = vsel %vm829, %v1223, 0
      %1275 = vmatprep.subr.bf16.mxu0 0
      %1276 = vmatpush1.bf16.msra.mxu0 %v1273
      %1277 = vmatprep.subr.bf16.mxu0 0
      %1278 = vmatpush1.bf16.msra.mxu0 0
      %1279 = vmatprep.subr.bf16.mxu0 0
      %1280 = vmatpush1.bf16.msra.mxu0 0
      %1281 = vmatprep.subr.bf16.mxu0 0
      %1282 = vmatpush1.bf16.msra.mxu0 0
      %1283 = vmatprep.subr.bf16.mxu0 0
      %1284 = vmatpush1.bf16.msra.mxu0 0
      %1285 = vmatprep.subr.bf16.mxu0 0
      %1286 = vmatpush1.bf16.msra.mxu0 0
      %1287 = vmatprep.subr.bf16.mxu0 0
      %1288 = vmatpush1.bf16.msra.mxu0 0
      %1289 = vmatprep.subr.bf16.mxu0 0
      %1290 = vmatpush1.bf16.msra.mxu0 0
      %1291 = vmatprep.subr.bf16.mxu0 0
      %1292 = vmatpush1.bf16.msra.mxu0 0
      %1293 = vmatprep.subr.bf16.mxu0 0
      %1294 = vmatpush1.bf16.msra.mxu0 0
      %1295 = vmatprep.subr.bf16.mxu0 0
      %1296 = vmatpush1.bf16.msra.mxu0 0
      %1297 = vmatprep.subr.bf16.mxu0 0
      %1298 = vmatpush1.bf16.msra.mxu0 0
      %1299 = vmatprep.subr.bf16.mxu0 0
      %1300 = vmatpush1.bf16.msra.mxu0 0
      %1301 = vmatprep.subr.bf16.mxu0 0
      %1302 = vmatpush1.bf16.msra.mxu0 0
      %1303 = vmatprep.subr.bf16.mxu0 0
      %1304 = vmatpush1.bf16.msra.mxu0 0
      %1305 = vmatprep.subr.bf16.mxu0 0
      %1306 = vmatpush1.bf16.msra.mxu0 0
      %1307 = vmatprep.mubr.bf16.mxu0 0
      %1308 = vmatmul.mubr.bf16.gmra.mrb[0].mxu0 %v806
      %v1309 = vpop.f32.mrb[0].mxu0
      %v1310 = vadd.f32 0.0, %v1309
      %v1311 = vpop.f32.mrb[0].mxu0
      %v1312 = vpop.f32.mrb[0].mxu0
      %v1313 = vadd.f32 0.0, %v1312
      %v1314 = vpop.f32.mrb[0].mxu0
      %1315 = vmatprep.mubr.bf16.mxu0 0
      %1316 = vmatmul.mubr.bf16.gmra.mrb[0].mxu0 %v809
      %v1317 = vpop.f32.mrb[0].mxu0
      %v1318 = vadd.f32 0.0, %v1317
      %v1319 = vpop.f32.mrb[0].mxu0
      %v1320 = vpop.f32.mrb[0].mxu0
      %v1321 = vadd.f32 0.0, %v1320
      %v1322 = vpop.f32.mrb[0].mxu0
      %1323 = vmatprep.mubr.bf16.mxu0 0
      %1324 = vmatmul.mubr.bf16.gmra.mrb[0].mxu0 %v812
      %v1325 = vpop.f32.mrb[0].mxu0
      %v1326 = vadd.f32 0.0, %v1325
      %v1327 = vpop.f32.mrb[0].mxu0
      %v1328 = vpop.f32.mrb[0].mxu0
      %v1329 = vadd.f32 0.0, %v1328
      %v1330 = vpop.f32.mrb[0].mxu0
      %1331 = vmatprep.mubr.bf16.mxu0 0
      %1332 = vmatmul.mubr.bf16.gmra.mrb[0].mxu0 %v815
      %v1333 = vpop.f32.mrb[0].mxu0
      %v1334 = vadd.f32 0.0, %v1333
      %v1335 = vpop.f32.mrb[0].mxu0
      %v1336 = vpop.f32.mrb[0].mxu0
      %v1337 = vadd.f32 0.0, %v1336
      %v1338 = vpop.f32.mrb[0].mxu0
      %1339 = vmatprep.mubr.bf16.mxu0 0
      %1340 = vmatmul.mubr.bf16.gmra.mrb[0].mxu0 %v818
      %v1341 = vpop.f32.mrb[0].mxu0
      %v1342 = vadd.f32 0.0, %v1341
      %v1343 = vpop.f32.mrb[0].mxu0
      %v1344 = vpop.f32.mrb[0].mxu0
      %v1345 = vadd.f32 0.0, %v1344
      %v1346 = vpop.f32.mrb[0].mxu0
      %1347 = vmatprep.mubr.bf16.mxu0 0
      %1348 = vmatmul.mubr.bf16.gmra.mrb[0].mxu0 %v821
      %v1349 = vpop.f32.mrb[0].mxu0
      %v1350 = vadd.f32 0.0, %v1349
      %v1351 = vpop.f32.mrb[0].mxu0
      %v1352 = vpop.f32.mrb[0].mxu0
      %v1353 = vadd.f32 0.0, %v1352
      %v1354 = vpop.f32.mrb[0].mxu0
      %1355 = vmatprep.mubr.bf16.mxu0 0
      %1356 = vmatmul.mubr.bf16.gmra.mrb[0].mxu0 %v824
      %v1357 = vpop.f32.mrb[0].mxu0
      %v1358 = vadd.f32 0.0, %v1357
      %v1359 = vpop.f32.mrb[0].mxu0
      %v1360 = vpop.f32.mrb[0].mxu0
      %v1361 = vadd.f32 0.0, %v1360
      %v1362 = vpop.f32.mrb[0].mxu0
      %1363 = vmatprep.mubr.bf16.mxu0 0
      %1364 = vmatmul.mubr.bf16.gmra.mrb[0].mxu0 %v827
      %v1365 = vpop.f32.mrb[0].mxu0
      %v1366 = vadd.f32 0.0, %v1365
      %v1367 = vpop.f32.mrb[0].mxu0
      %v1368 = vpop.f32.mrb[0].mxu0
      %v1369 = vadd.f32 0.0, %v1368
      %v1370 = vpop.f32.mrb[0].mxu0
      %1371 = vmatprep.mubr.bf16.mxu0 0
      %1372 = vmatmul.mubr.bf16.gmra.mrb[0].mxu0 %v1249
      %v1373 = vpop.f32.mrb[0].mxu0
      %v1374 = vadd.f32 0.0, %v1373
      %v1375 = vpop.f32.mrb[0].mxu0
      %v1376 = vpop.f32.mrb[0].mxu0
      %v1377 = vadd.f32 0.0, %v1376
      %v1378 = vpop.f32.mrb[0].mxu0
      %1379 = vmatprep.mubr.bf16.mxu0 0
      %1380 = vmatmul.mubr.bf16.gmra.mrb[0].mxu0 %v1252
      %v1381 = vpop.f32.mrb[0].mxu0
      %v1382 = vadd.f32 0.0, %v1381
      %v1383 = vpop.f32.mrb[0].mxu0
      %v1384 = vpop.f32.mrb[0].mxu0
      %v1385 = vadd.f32 0.0, %v1384
      %v1386 = vpop.f32.mrb[0].mxu0
      %1387 = vmatprep.mubr.bf16.mxu0 0
      %1388 = vmatmul.mubr.bf16.gmra.mrb[0].mxu0 %v1255
      %v1389 = vpop.f32.mrb[0].mxu0
      %v1390 = vadd.f32 0.0, %v1389
      %v1391 = vpop.f32.mrb[0].mxu0
      %v1392 = vpop.f32.mrb[0].mxu0
      %v1393 = vadd.f32 0.0, %v1392
      %v1394 = vpop.f32.mrb[0].mxu0
      %1395 = vmatprep.mubr.bf16.mxu0 0
      %1396 = vmatmul.mubr.bf16.gmra.mrb[0].mxu0 %v1258
      %v1397 = vpop.f32.mrb[0].mxu0
      %v1398 = vadd.f32 0.0, %v1397
      %v1399 = vpop.f32.mrb[0].mxu0
      %v1400 = vpop.f32.mrb[0].mxu0
      %v1401 = vadd.f32 0.0, %v1400
      %v1402 = vpop.f32.mrb[0].mxu0
      %1403 = vmatprep.mubr.bf16.mxu0 0
      %1404 = vmatmul.mubr.bf16.gmra.mrb[0].mxu0 %v1261
      %v1405 = vpop.f32.mrb[0].mxu0
      %v1406 = vadd.f32 0.0, %v1405
      %v1407 = vpop.f32.mrb[0].mxu0
      %v1408 = vpop.f32.mrb[0].mxu0
      %v1409 = vadd.f32 0.0, %v1408
      %v1410 = vpop.f32.mrb[0].mxu0
      %1411 = vmatprep.mubr.bf16.mxu0 0
      %1412 = vmatmul.mubr.bf16.gmra.mrb[0].mxu0 %v1264
      %v1413 = vpop.f32.mrb[0].mxu0
      %v1414 = vadd.f32 0.0, %v1413
      %v1415 = vpop.f32.mrb[0].mxu0
      %v1416 = vpop.f32.mrb[0].mxu0
      %v1417 = vadd.f32 0.0, %v1416
      %v1418 = vpop.f32.mrb[0].mxu0
      %1419 = vmatprep.mubr.bf16.mxu0 0
      %1420 = vmatmul.mubr.bf16.gmra.mrb[0].mxu0 %v1267
      %v1421 = vpop.f32.mrb[0].mxu0
      %v1422 = vadd.f32 0.0, %v1421
      %v1423 = vpop.f32.mrb[0].mxu0
      %v1424 = vpop.f32.mrb[0].mxu0
      %v1425 = vadd.f32 0.0, %v1424
      %v1426 = vpop.f32.mrb[0].mxu0
      %1427 = vmatprep.mubr.bf16.mxu0 0
      %1428 = vmatmul.mubr.bf16.gmra.mrb[0].mxu0 %v1270
      %v1429 = vpop.f32.mrb[0].mxu0
      %v1430 = vadd.f32 0.0, %v1429
      %v1431 = vpop.f32.mrb[0].mxu0
      %v1432 = vpop.f32.mrb[0].mxu0
      %v1433 = vadd.f32 0.0, %v1432
      %v1434 = vpop.f32.mrb[0].mxu0
      %1435 = vdwg.mxu0
      %v1436 = vadd.f32 %v1096, %v1310
      %v1437 = vadd.f32 %v1099, %v1313
      %v1438 = vadd.f32 %v1104, %v1318
      %v1439 = vadd.f32 %v1107, %v1321
      %v1440 = vadd.f32 %v1112, %v1326
      %v1441 = vadd.f32 %v1115, %v1329
      %v1442 = vadd.f32 %v1120, %v1334
      %v1443 = vadd.f32 %v1123, %v1337
      %v1444 = vadd.f32 %v1128, %v1342
      %v1445 = vadd.f32 %v1131, %v1345
      %v1446 = vadd.f32 %v1136, %v1350
      %v1447 = vadd.f32 %v1139, %v1353
      %v1448 = vadd.f32 %v1144, %v1358
      %v1449 = vadd.f32 %v1147, %v1361
      %v1450 = vadd.f32 %v1152, %v1366
      %v1451 = vadd.f32 %v1155, %v1369
      %v1452 = vadd.f32 %v1160, %v1374
      %v1453 = vadd.f32 %v1163, %v1377
      %v1454 = vadd.f32 %v1168, %v1382
      %v1455 = vadd.f32 %v1171, %v1385
      %v1456 = vadd.f32 %v1176, %v1390
      %v1457 = vadd.f32 %v1179, %v1393
      %v1458 = vadd.f32 %v1184, %v1398
      %v1459 = vadd.f32 %v1187, %v1401
      %v1460 = vadd.f32 %v1192, %v1406
      %v1461 = vadd.f32 %v1195, %v1409
      %v1462 = vadd.f32 %v1200, %v1414
      %v1463 = vadd.f32 %v1203, %v1417
      %v1464 = vadd.f32 %v1208, %v1422
      %v1465 = vadd.f32 %v1211, %v1425
      %v1466 = vadd.f32 %v1216, %v1430
      %v1467 = vadd.f32 %v1219, %v1433
      %v1469 = vshrl.u32 %v222, 16
      %v1471 = vrot.slane %v1469, 4
      %v1472 = vshll.u32 %v222, 16
      %v1474 = vrot.slane %v1472, 5
      %v1475 = vor.u32 %v1471, %v1474
      %v1476 = vrot.slane %v1475, 4
      %v1478 = vshll.u32 %v223, 16
      %v1480 = vrot.slane %v1478, 5
      %v1481 = vsel %vm264, %v1476, %v1480
      %v1483 = vshrl.u32 %v258, 16
      %v1485 = vrot.slane %v1483, 4
      %v1486 = vshll.u32 %v258, 16
      %v1488 = vrot.slane %v1486, 5
      %v1489 = vor.u32 %v1485, %v1488
      %v1490 = vrot.slane %v1489, 4
      %v1492 = vshll.u32 %v259, 16
      %v1494 = vrot.slane %v1492, 5
      %v1495 = vsel %vm264, %v1490, %v1494
      %s1496 = scalar_lea.vmem %s2, 6
      %v1497 = vld [vmem:[%s1496] sm:$0x3]
      %s1498 = scalar_lea.vmem %s2, 8
      %v1499 = vld [vmem:[%s1498] sm:$0x3]
      %v1501 = vunpack.c.l.b16 %v258
      %v1502 = vunpack.c.l.b16 %v1481
      %v1503 = vpack.c.b16 %v734, %v733
      %v1504 = vpack.c.b16 %v736, %v735
      %v1505 = vpack.c.b16 %v738, %v737
      %v1506 = vpack.c.b16 %v740, %v739
      %v1507 = vpack.c.b16 %v742, %v741
      %v1508 = vpack.c.b16 %v744, %v743
      %v1509 = vpack.c.b16 %v746, %v745
      %v1510 = vpack.c.b16 %v1501, %v747
      %v1511 = vpack.c.b16 %v750, %v749
      %v1512 = vpack.c.b16 %v752, %v751
      %v1513 = vpack.c.b16 %v754, %v753
      %v1514 = vpack.c.b16 %v756, %v755
      %v1515 = vpack.c.b16 %v758, %v757
      %v1516 = vpack.c.b16 %v760, %v759
      %v1517 = vpack.c.b16 %v762, %v761
      %v1518 = vpack.c.b16 %v1502, %v763
      %v1520 = vsel %vm780, %v1503, 0
      %v1523 = vsel %vm780, %v1504, 0
      %v1526 = vsel %vm780, %v1505, 0
      %v1529 = vsel %vm780, %v1506, 0
      %v1532 = vsel %vm780, %v1507, 0
      %v1535 = vsel %vm780, %v1508, 0
      %v1538 = vsel %vm780, %v1509, 0
      %v1541 = vsel %vm780, %v1510, 0
      %v1544 = vsel %vm780, %v1511, 0
      %v1547 = vsel %vm780, %v1512, 0
      %v1550 = vsel %vm780, %v1513, 0
      %v1553 = vsel %vm780, %v1514, 0
      %v1556 = vsel %vm780, %v1515, 0
      %v1559 = vsel %vm780, %v1516, 0
      %v1562 = vsel %vm780, %v1517, 0
      %v1565 = vsel %vm780, %v1518, 0
      %v1568 = vsel %vm829, %v1499, 0
      %1570 = vmatprep.subr.bf16.mxu0 0
      %1571 = vmatpush1.bf16.msra.mxu0 %v1568
      %1572 = vmatprep.subr.bf16.mxu0 0
      %1573 = vmatpush1.bf16.msra.mxu0 0
      %1574 = vmatprep.subr.bf16.mxu0 0
      %1575 = vmatpush1.bf16.msra.mxu0 0
      %1576 = vmatprep.subr.bf16.mxu0 0
      %1577 = vmatpush1.bf16.msra.mxu0 0
      %1578 = vmatprep.subr.bf16.mxu0 0
      %1579 = vmatpush1.bf16.msra.mxu0 0
      %1580 = vmatprep.subr.bf16.mxu0 0
      %1581 = vmatpush1.bf16.msra.mxu0 0
      %1582 = vmatprep.subr.bf16.mxu0 0
      %1583 = vmatpush1.bf16.msra.mxu0 0
      %1584 = vmatprep.subr.bf16.mxu0 0
      %1585 = vmatpush1.bf16.msra.mxu0 0
      %1586 = vmatprep.subr.bf16.mxu0 0
      %1587 = vmatpush1.bf16.msra.mxu0 0
      %1588 = vmatprep.subr.bf16.mxu0 0
      %1589 = vmatpush1.bf16.msra.mxu0 0
      %1590 = vmatprep.subr.bf16.mxu0 0
      %1591 = vmatpush1.bf16.msra.mxu0 0
      %1592 = vmatprep.subr.bf16.mxu0 0
      %1593 = vmatpush1.bf16.msra.mxu0 0
      %1594 = vmatprep.subr.bf16.mxu0 0
      %1595 = vmatpush1.bf16.msra.mxu0 0
      %1596 = vmatprep.subr.bf16.mxu0 0
      %1597 = vmatpush1.bf16.msra.mxu0 0
      %1598 = vmatprep.subr.bf16.mxu0 0
      %1599 = vmatpush1.bf16.msra.mxu0 0
      %1600 = vmatprep.subr.bf16.mxu0 0
      %1601 = vmatpush1.bf16.msra.mxu0 0
      %1602 = vmatprep.mubr.bf16.mxu0 0
      %1603 = vmatmul.mubr.bf16.gmra.mrb[0].mxu0 %v1520
      %v1604 = vpop.f32.mrb[0].mxu0
      %v1605 = vadd.f32 0.0, %v1604
      %v1606 = vpop.f32.mrb[0].mxu0
      %v1607 = vpop.f32.mrb[0].mxu0
      %v1608 = vadd.f32 0.0, %v1607
      %v1609 = vpop.f32.mrb[0].mxu0
      %1610 = vmatprep.mubr.bf16.mxu0 0
      %1611 = vmatmul.mubr.bf16.gmra.mrb[0].mxu0 %v1523
      %v1612 = vpop.f32.mrb[0].mxu0
      %v1613 = vadd.f32 0.0, %v1612
      %v1614 = vpop.f32.mrb[0].mxu0
      %v1615 = vpop.f32.mrb[0].mxu0
      %v1616 = vadd.f32 0.0, %v1615
      %v1617 = vpop.f32.mrb[0].mxu0
      %1618 = vmatprep.mubr.bf16.mxu0 0
      %1619 = vmatmul.mubr.bf16.gmra.mrb[0].mxu0 %v1526
      %v1620 = vpop.f32.mrb[0].mxu0
      %v1621 = vadd.f32 0.0, %v1620
      %v1622 = vpop.f32.mrb[0].mxu0
      %v1623 = vpop.f32.mrb[0].mxu0
      %v1624 = vadd.f32 0.0, %v1623
      %v1625 = vpop.f32.mrb[0].mxu0
      %1626 = vmatprep.mubr.bf16.mxu0 0
      %1627 = vmatmul.mubr.bf16.gmra.mrb[0].mxu0 %v1529
      %v1628 = vpop.f32.mrb[0].mxu0
      %v1629 = vadd.f32 0.0, %v1628
      %v1630 = vpop.f32.mrb[0].mxu0
      %v1631 = vpop.f32.mrb[0].mxu0
      %v1632 = vadd.f32 0.0, %v1631
      %v1633 = vpop.f32.mrb[0].mxu0
      %1634 = vmatprep.mubr.bf16.mxu0 0
      %1635 = vmatmul.mubr.bf16.gmra.mrb[0].mxu0 %v1532
      %v1636 = vpop.f32.mrb[0].mxu0
      %v1637 = vadd.f32 0.0, %v1636
      %v1638 = vpop.f32.mrb[0].mxu0
      %v1639 = vpop.f32.mrb[0].mxu0
      %v1640 = vadd.f32 0.0, %v1639
      %v1641 = vpop.f32.mrb[0].mxu0
      %1642 = vmatprep.mubr.bf16.mxu0 0
      %1643 = vmatmul.mubr.bf16.gmra.mrb[0].mxu0 %v1535
      %v1644 = vpop.f32.mrb[0].mxu0
      %v1645 = vadd.f32 0.0, %v1644
      %v1646 = vpop.f32.mrb[0].mxu0
      %v1647 = vpop.f32.mrb[0].mxu0
      %v1648 = vadd.f32 0.0, %v1647
      %v1649 = vpop.f32.mrb[0].mxu0
      %1650 = vmatprep.mubr.bf16.mxu0 0
      %1651 = vmatmul.mubr.bf16.gmra.mrb[0].mxu0 %v1538
      %v1652 = vpop.f32.mrb[0].mxu0
      %v1653 = vadd.f32 0.0, %v1652
      %v1654 = vpop.f32.mrb[0].mxu0
      %v1655 = vpop.f32.mrb[0].mxu0
      %v1656 = vadd.f32 0.0, %v1655
      %v1657 = vpop.f32.mrb[0].mxu0
      %1658 = vmatprep.mubr.bf16.mxu0 0
      %1659 = vmatmul.mubr.bf16.gmra.mrb[0].mxu0 %v1541
      %v1660 = vpop.f32.mrb[0].mxu0
      %v1661 = vadd.f32 0.0, %v1660
      %v1662 = vpop.f32.mrb[0].mxu0
      %v1663 = vpop.f32.mrb[0].mxu0
      %v1664 = vadd.f32 0.0, %v1663
      %v1665 = vpop.f32.mrb[0].mxu0
      %1666 = vmatprep.mubr.bf16.mxu0 0
      %1667 = vmatmul.mubr.bf16.gmra.mrb[0].mxu0 %v1544
      %v1668 = vpop.f32.mrb[0].mxu0
      %v1669 = vadd.f32 0.0, %v1668
      %v1670 = vpop.f32.mrb[0].mxu0
      %v1671 = vpop.f32.mrb[0].mxu0
      %v1672 = vadd.f32 0.0, %v1671
      %v1673 = vpop.f32.mrb[0].mxu0
      %1674 = vmatprep.mubr.bf16.mxu0 0
      %1675 = vmatmul.mubr.bf16.gmra.mrb[0].mxu0 %v1547
      %v1676 = vpop.f32.mrb[0].mxu0
      %v1677 = vadd.f32 0.0, %v1676
      %v1678 = vpop.f32.mrb[0].mxu0
      %v1679 = vpop.f32.mrb[0].mxu0
      %v1680 = vadd.f32 0.0, %v1679
      %v1681 = vpop.f32.mrb[0].mxu0
      %1682 = vmatprep.mubr.bf16.mxu0 0
      %1683 = vmatmul.mubr.bf16.gmra.mrb[0].mxu0 %v1550
      %v1684 = vpop.f32.mrb[0].mxu0
      %v1685 = vadd.f32 0.0, %v1684
      %v1686 = vpop.f32.mrb[0].mxu0
      %v1687 = vpop.f32.mrb[0].mxu0
      %v1688 = vadd.f32 0.0, %v1687
      %v1689 = vpop.f32.mrb[0].mxu0
      %1690 = vmatprep.mubr.bf16.mxu0 0
      %1691 = vmatmul.mubr.bf16.gmra.mrb[0].mxu0 %v1553
      %v1692 = vpop.f32.mrb[0].mxu0
      %v1693 = vadd.f32 0.0, %v1692
      %v1694 = vpop.f32.mrb[0].mxu0
      %v1695 = vpop.f32.mrb[0].mxu0
      %v1696 = vadd.f32 0.0, %v1695
      %v1697 = vpop.f32.mrb[0].mxu0
      %1698 = vmatprep.mubr.bf16.mxu0 0
      %1699 = vmatmul.mubr.bf16.gmra.mrb[0].mxu0 %v1556
      %v1700 = vpop.f32.mrb[0].mxu0
      %v1701 = vadd.f32 0.0, %v1700
      %v1702 = vpop.f32.mrb[0].mxu0
      %v1703 = vpop.f32.mrb[0].mxu0
      %v1704 = vadd.f32 0.0, %v1703
      %v1705 = vpop.f32.mrb[0].mxu0
      %1706 = vmatprep.mubr.bf16.mxu0 0
      %1707 = vmatmul.mubr.bf16.gmra.mrb[0].mxu0 %v1559
      %v1708 = vpop.f32.mrb[0].mxu0
      %v1709 = vadd.f32 0.0, %v1708
      %v1710 = vpop.f32.mrb[0].mxu0
      %v1711 = vpop.f32.mrb[0].mxu0
      %v1712 = vadd.f32 0.0, %v1711
      %v1713 = vpop.f32.mrb[0].mxu0
      %1714 = vmatprep.mubr.bf16.mxu0 0
      %1715 = vmatmul.mubr.bf16.gmra.mrb[0].mxu0 %v1562
      %v1716 = vpop.f32.mrb[0].mxu0
      %v1717 = vadd.f32 0.0, %v1716
      %v1718 = vpop.f32.mrb[0].mxu0
      %v1719 = vpop.f32.mrb[0].mxu0
      %v1720 = vadd.f32 0.0, %v1719
      %v1721 = vpop.f32.mrb[0].mxu0
      %1722 = vmatprep.mubr.bf16.mxu0 0
      %1723 = vmatmul.mubr.bf16.gmra.mrb[0].mxu0 %v1565
      %v1724 = vpop.f32.mrb[0].mxu0
      %v1725 = vadd.f32 0.0, %v1724
      %v1726 = vpop.f32.mrb[0].mxu0
      %v1727 = vpop.f32.mrb[0].mxu0
      %v1728 = vadd.f32 0.0, %v1727
      %v1729 = vpop.f32.mrb[0].mxu0
      %1730 = vdwg.mxu0
      %v1732 = vunpack.c.l.b16 %v222
      %v1733 = vpack.c.b16 %v1012, %v1011
      %v1734 = vpack.c.b16 %v1014, %v1013
      %v1735 = vpack.c.b16 %v1016, %v1015
      %v1736 = vpack.c.b16 %v1018, %v1017
      %v1737 = vpack.c.b16 %v1020, %v1019
      %v1738 = vpack.c.b16 %v1022, %v1021
      %v1739 = vpack.c.b16 %v1024, %v1023
      %v1740 = vpack.c.b16 %v1732, %v1025
      %v1742 = vsel %vm780, %v1733, 0
      %v1745 = vsel %vm780, %v1734, 0
      %v1748 = vsel %vm780, %v1735, 0
      %v1751 = vsel %vm780, %v1736, 0
      %v1754 = vsel %vm780, %v1737, 0
      %v1757 = vsel %vm780, %v1738, 0
      %v1760 = vsel %vm780, %v1739, 0
      %v1763 = vsel %vm780, %v1740, 0
      %v1766 = vsel %vm829, %v1497, 0
      %1768 = vmatprep.subr.bf16.mxu0 0
      %1769 = vmatpush1.bf16.msra.mxu0 %v1766
      %1770 = vmatprep.subr.bf16.mxu0 0
      %1771 = vmatpush1.bf16.msra.mxu0 0
      %1772 = vmatprep.subr.bf16.mxu0 0
      %1773 = vmatpush1.bf16.msra.mxu0 0
      %1774 = vmatprep.subr.bf16.mxu0 0
      %1775 = vmatpush1.bf16.msra.mxu0 0
      %1776 = vmatprep.subr.bf16.mxu0 0
      %1777 = vmatpush1.bf16.msra.mxu0 0
      %1778 = vmatprep.subr.bf16.mxu0 0
      %1779 = vmatpush1.bf16.msra.mxu0 0
      %1780 = vmatprep.subr.bf16.mxu0 0
      %1781 = vmatpush1.bf16.msra.mxu0 0
      %1782 = vmatprep.subr.bf16.mxu0 0
      %1783 = vmatpush1.bf16.msra.mxu0 0
      %1784 = vmatprep.subr.bf16.mxu0 0
      %1785 = vmatpush1.bf16.msra.mxu0 0
      %1786 = vmatprep.subr.bf16.mxu0 0
      %1787 = vmatpush1.bf16.msra.mxu0 0
      %1788 = vmatprep.subr.bf16.mxu0 0
      %1789 = vmatpush1.bf16.msra.mxu0 0
      %1790 = vmatprep.subr.bf16.mxu0 0
      %1791 = vmatpush1.bf16.msra.mxu0 0
      %1792 = vmatprep.subr.bf16.mxu0 0
      %1793 = vmatpush1.bf16.msra.mxu0 0
      %1794 = vmatprep.subr.bf16.mxu0 0
      %1795 = vmatpush1.bf16.msra.mxu0 0
      %1796 = vmatprep.subr.bf16.mxu0 0
      %1797 = vmatpush1.bf16.msra.mxu0 0
      %1798 = vmatprep.subr.bf16.mxu0 0
      %1799 = vmatpush1.bf16.msra.mxu0 0
      %1800 = vmatprep.mubr.bf16.mxu0 0
      %1801 = vmatmul.mubr.bf16.gmra.mrb[0].mxu0 %v1742
      %v1802 = vpop.f32.mrb[0].mxu0
      %v1803 = vadd.f32 %v1605, %v1802
      %v1804 = vpop.f32.mrb[0].mxu0
      %v1805 = vpop.f32.mrb[0].mxu0
      %v1806 = vadd.f32 %v1608, %v1805
      %v1807 = vpop.f32.mrb[0].mxu0
      %1808 = vmatprep.mubr.bf16.mxu0 0
      %1809 = vmatmul.mubr.bf16.gmra.mrb[0].mxu0 %v1745
      %v1810 = vpop.f32.mrb[0].mxu0
      %v1811 = vadd.f32 %v1613, %v1810
      %v1812 = vpop.f32.mrb[0].mxu0
      %v1813 = vpop.f32.mrb[0].mxu0
      %v1814 = vadd.f32 %v1616, %v1813
      %v1815 = vpop.f32.mrb[0].mxu0
      %1816 = vmatprep.mubr.bf16.mxu0 0
      %1817 = vmatmul.mubr.bf16.gmra.mrb[0].mxu0 %v1748
      %v1818 = vpop.f32.mrb[0].mxu0
      %v1819 = vadd.f32 %v1621, %v1818
      %v1820 = vpop.f32.mrb[0].mxu0
      %v1821 = vpop.f32.mrb[0].mxu0
      %v1822 = vadd.f32 %v1624, %v1821
      %v1823 = vpop.f32.mrb[0].mxu0
      %1824 = vmatprep.mubr.bf16.mxu0 0
      %1825 = vmatmul.mubr.bf16.gmra.mrb[0].mxu0 %v1751
      %v1826 = vpop.f32.mrb[0].mxu0
      %v1827 = vadd.f32 %v1629, %v1826
      %v1828 = vpop.f32.mrb[0].mxu0
      %v1829 = vpop.f32.mrb[0].mxu0
      %v1830 = vadd.f32 %v1632, %v1829
      %v1831 = vpop.f32.mrb[0].mxu0
      %1832 = vmatprep.mubr.bf16.mxu0 0
      %1833 = vmatmul.mubr.bf16.gmra.mrb[0].mxu0 %v1754
      %v1834 = vpop.f32.mrb[0].mxu0
      %v1835 = vadd.f32 %v1637, %v1834
      %v1836 = vpop.f32.mrb[0].mxu0
      %v1837 = vpop.f32.mrb[0].mxu0
      %v1838 = vadd.f32 %v1640, %v1837
      %v1839 = vpop.f32.mrb[0].mxu0
      %1840 = vmatprep.mubr.bf16.mxu0 0
      %1841 = vmatmul.mubr.bf16.gmra.mrb[0].mxu0 %v1757
      %v1842 = vpop.f32.mrb[0].mxu0
      %v1843 = vadd.f32 %v1645, %v1842
      %v1844 = vpop.f32.mrb[0].mxu0
      %v1845 = vpop.f32.mrb[0].mxu0
      %v1846 = vadd.f32 %v1648, %v1845
      %v1847 = vpop.f32.mrb[0].mxu0
      %1848 = vmatprep.mubr.bf16.mxu0 0
      %1849 = vmatmul.mubr.bf16.gmra.mrb[0].mxu0 %v1760
      %v1850 = vpop.f32.mrb[0].mxu0
      %v1851 = vadd.f32 %v1653, %v1850
      %v1852 = vpop.f32.mrb[0].mxu0
      %v1853 = vpop.f32.mrb[0].mxu0
      %v1854 = vadd.f32 %v1656, %v1853
      %v1855 = vpop.f32.mrb[0].mxu0
      %1856 = vmatprep.mubr.bf16.mxu0 0
      %1857 = vmatmul.mubr.bf16.gmra.mrb[0].mxu0 %v1763
      %v1858 = vpop.f32.mrb[0].mxu0
      %v1859 = vadd.f32 %v1661, %v1858
      %v1860 = vpop.f32.mrb[0].mxu0
      %v1861 = vpop.f32.mrb[0].mxu0
      %v1862 = vadd.f32 %v1664, %v1861
      %v1863 = vpop.f32.mrb[0].mxu0
      %1864 = vmatprep.mubr.bf16.mxu0 0
      %1865 = vmatmul.mubr.bf16.gmra.mrb[0].mxu0 %v1520
      %v1866 = vpop.f32.mrb[0].mxu0
      %v1867 = vadd.f32 %v1669, %v1866
      %v1868 = vpop.f32.mrb[0].mxu0
      %v1869 = vpop.f32.mrb[0].mxu0
      %v1870 = vadd.f32 %v1672, %v1869
      %v1871 = vpop.f32.mrb[0].mxu0
      %1872 = vmatprep.mubr.bf16.mxu0 0
      %1873 = vmatmul.mubr.bf16.gmra.mrb[0].mxu0 %v1523
      %v1874 = vpop.f32.mrb[0].mxu0
      %v1875 = vadd.f32 %v1677, %v1874
      %v1876 = vpop.f32.mrb[0].mxu0
      %v1877 = vpop.f32.mrb[0].mxu0
      %v1878 = vadd.f32 %v1680, %v1877
      %v1879 = vpop.f32.mrb[0].mxu0
      %1880 = vmatprep.mubr.bf16.mxu0 0
      %1881 = vmatmul.mubr.bf16.gmra.mrb[0].mxu0 %v1526
      %v1882 = vpop.f32.mrb[0].mxu0
      %v1883 = vadd.f32 %v1685, %v1882
      %v1884 = vpop.f32.mrb[0].mxu0
      %v1885 = vpop.f32.mrb[0].mxu0
      %v1886 = vadd.f32 %v1688, %v1885
      %v1887 = vpop.f32.mrb[0].mxu0
      %1888 = vmatprep.mubr.bf16.mxu0 0
      %1889 = vmatmul.mubr.bf16.gmra.mrb[0].mxu0 %v1529
      %v1890 = vpop.f32.mrb[0].mxu0
      %v1891 = vadd.f32 %v1693, %v1890
      %v1892 = vpop.f32.mrb[0].mxu0
      %v1893 = vpop.f32.mrb[0].mxu0
      %v1894 = vadd.f32 %v1696, %v1893
      %v1895 = vpop.f32.mrb[0].mxu0
      %1896 = vmatprep.mubr.bf16.mxu0 0
      %1897 = vmatmul.mubr.bf16.gmra.mrb[0].mxu0 %v1532
      %v1898 = vpop.f32.mrb[0].mxu0
      %v1899 = vadd.f32 %v1701, %v1898
      %v1900 = vpop.f32.mrb[0].mxu0
      %v1901 = vpop.f32.mrb[0].mxu0
      %v1902 = vadd.f32 %v1704, %v1901
      %v1903 = vpop.f32.mrb[0].mxu0
      %1904 = vmatprep.mubr.bf16.mxu0 0
      %1905 = vmatmul.mubr.bf16.gmra.mrb[0].mxu0 %v1535
      %v1906 = vpop.f32.mrb[0].mxu0
      %v1907 = vadd.f32 %v1709, %v1906
      %v1908 = vpop.f32.mrb[0].mxu0
      %v1909 = vpop.f32.mrb[0].mxu0
      %v1910 = vadd.f32 %v1712, %v1909
      %v1911 = vpop.f32.mrb[0].mxu0
      %1912 = vmatprep.mubr.bf16.mxu0 0
      %1913 = vmatmul.mubr.bf16.gmra.mrb[0].mxu0 %v1538
      %v1914 = vpop.f32.mrb[0].mxu0
      %v1915 = vadd.f32 %v1717, %v1914
      %v1916 = vpop.f32.mrb[0].mxu0
      %v1917 = vpop.f32.mrb[0].mxu0
      %v1918 = vadd.f32 %v1720, %v1917
      %v1919 = vpop.f32.mrb[0].mxu0
      %1920 = vmatprep.mubr.bf16.mxu0 0
      %1921 = vmatmul.mubr.bf16.gmra.mrb[0].mxu0 %v1541
      %v1922 = vpop.f32.mrb[0].mxu0
      %v1923 = vadd.f32 %v1725, %v1922
      %v1924 = vpop.f32.mrb[0].mxu0
      %v1925 = vpop.f32.mrb[0].mxu0
      %v1926 = vadd.f32 %v1728, %v1925
      %v1927 = vpop.f32.mrb[0].mxu0
      %1928 = vdwg.mxu0
      %s1929 = scalar_lea.vmem %s2, 10
      %v1930 = vld [vmem:[%s1929] sm:$0x3]
      %v1931 = vunpack.c.l.b16 %v1495
      %v1932 = vpack.c.b16 %v1226, %v1225
      %v1933 = vpack.c.b16 %v1228, %v1227
      %v1934 = vpack.c.b16 %v1230, %v1229
      %v1935 = vpack.c.b16 %v1232, %v1231
      %v1936 = vpack.c.b16 %v1234, %v1233
      %v1937 = vpack.c.b16 %v1236, %v1235
      %v1938 = vpack.c.b16 %v1238, %v1237
      %v1939 = vpack.c.b16 %v1931, %v1239
      %v1941 = vsel %vm780, %v1932, 0
      %v1944 = vsel %vm780, %v1933, 0
      %v1947 = vsel %vm780, %v1934, 0
      %v1950 = vsel %vm780, %v1935, 0
      %v1953 = vsel %vm780, %v1936, 0
      %v1956 = vsel %vm780, %v1937, 0
      %v1959 = vsel %vm780, %v1938, 0
      %v1962 = vsel %vm780, %v1939, 0
      %v1965 = vsel %vm829, %v1930, 0
      %1967 = vmatprep.subr.bf16.mxu0 0
      %1968 = vmatpush1.bf16.msra.mxu0 %v1965
      %1969 = vmatprep.subr.bf16.mxu0 0
      %1970 = vmatpush1.bf16.msra.mxu0 0
      %1971 = vmatprep.subr.bf16.mxu0 0
      %1972 = vmatpush1.bf16.msra.mxu0 0
      %1973 = vmatprep.subr.bf16.mxu0 0
      %1974 = vmatpush1.bf16.msra.mxu0 0
      %1975 = vmatprep.subr.bf16.mxu0 0
      %1976 = vmatpush1.bf16.msra.mxu0 0
      %1977 = vmatprep.subr.bf16.mxu0 0
      %1978 = vmatpush1.bf16.msra.mxu0 0
      %1979 = vmatprep.subr.bf16.mxu0 0
      %1980 = vmatpush1.bf16.msra.mxu0 0
      %1981 = vmatprep.subr.bf16.mxu0 0
      %1982 = vmatpush1.bf16.msra.mxu0 0
      %1983 = vmatprep.subr.bf16.mxu0 0
      %1984 = vmatpush1.bf16.msra.mxu0 0
      %1985 = vmatprep.subr.bf16.mxu0 0
      %1986 = vmatpush1.bf16.msra.mxu0 0
      %1987 = vmatprep.subr.bf16.mxu0 0
      %1988 = vmatpush1.bf16.msra.mxu0 0
      %1989 = vmatprep.subr.bf16.mxu0 0
      %1990 = vmatpush1.bf16.msra.mxu0 0
      %1991 = vmatprep.subr.bf16.mxu0 0
      %1992 = vmatpush1.bf16.msra.mxu0 0
      %1993 = vmatprep.subr.bf16.mxu0 0
      %1994 = vmatpush1.bf16.msra.mxu0 0
      %1995 = vmatprep.subr.bf16.mxu0 0
      %1996 = vmatpush1.bf16.msra.mxu0 0
      %1997 = vmatprep.subr.bf16.mxu0 0
      %1998 = vmatpush1.bf16.msra.mxu0 0
      %1999 = vmatprep.mubr.bf16.mxu0 0
      %2000 = vmatmul.mubr.bf16.gmra.mrb[0].mxu0 %v1544
      %v2001 = vpop.f32.mrb[0].mxu0
      %v2002 = vadd.f32 0.0, %v2001
      %v2003 = vpop.f32.mrb[0].mxu0
      %v2004 = vpop.f32.mrb[0].mxu0
      %v2005 = vadd.f32 0.0, %v2004
      %v2006 = vpop.f32.mrb[0].mxu0
      %2007 = vmatprep.mubr.bf16.mxu0 0
      %2008 = vmatmul.mubr.bf16.gmra.mrb[0].mxu0 %v1547
      %v2009 = vpop.f32.mrb[0].mxu0
      %v2010 = vadd.f32 0.0, %v2009
      %v2011 = vpop.f32.mrb[0].mxu0
      %v2012 = vpop.f32.mrb[0].mxu0
      %v2013 = vadd.f32 0.0, %v2012
      %v2014 = vpop.f32.mrb[0].mxu0
      %2015 = vmatprep.mubr.bf16.mxu0 0
      %2016 = vmatmul.mubr.bf16.gmra.mrb[0].mxu0 %v1550
      %v2017 = vpop.f32.mrb[0].mxu0
      %v2018 = vadd.f32 0.0, %v2017
      %v2019 = vpop.f32.mrb[0].mxu0
      %v2020 = vpop.f32.mrb[0].mxu0
      %v2021 = vadd.f32 0.0, %v2020
      %v2022 = vpop.f32.mrb[0].mxu0
      %2023 = vmatprep.mubr.bf16.mxu0 0
      %2024 = vmatmul.mubr.bf16.gmra.mrb[0].mxu0 %v1553
      %v2025 = vpop.f32.mrb[0].mxu0
      %v2026 = vadd.f32 0.0, %v2025
      %v2027 = vpop.f32.mrb[0].mxu0
      %v2028 = vpop.f32.mrb[0].mxu0
      %v2029 = vadd.f32 0.0, %v2028
      %v2030 = vpop.f32.mrb[0].mxu0
      %2031 = vmatprep.mubr.bf16.mxu0 0
      %2032 = vmatmul.mubr.bf16.gmra.mrb[0].mxu0 %v1556
      %v2033 = vpop.f32.mrb[0].mxu0
      %v2034 = vadd.f32 0.0, %v2033
      %v2035 = vpop.f32.mrb[0].mxu0
      %v2036 = vpop.f32.mrb[0].mxu0
      %v2037 = vadd.f32 0.0, %v2036
      %v2038 = vpop.f32.mrb[0].mxu0
      %2039 = vmatprep.mubr.bf16.mxu0 0
      %2040 = vmatmul.mubr.bf16.gmra.mrb[0].mxu0 %v1559
      %v2041 = vpop.f32.mrb[0].mxu0
      %v2042 = vadd.f32 0.0, %v2041
      %v2043 = vpop.f32.mrb[0].mxu0
      %v2044 = vpop.f32.mrb[0].mxu0
      %v2045 = vadd.f32 0.0, %v2044
      %v2046 = vpop.f32.mrb[0].mxu0
      %2047 = vmatprep.mubr.bf16.mxu0 0
      %2048 = vmatmul.mubr.bf16.gmra.mrb[0].mxu0 %v1562
      %v2049 = vpop.f32.mrb[0].mxu0
      %v2050 = vadd.f32 0.0, %v2049
      %v2051 = vpop.f32.mrb[0].mxu0
      %v2052 = vpop.f32.mrb[0].mxu0
      %v2053 = vadd.f32 0.0, %v2052
      %v2054 = vpop.f32.mrb[0].mxu0
      %2055 = vmatprep.mubr.bf16.mxu0 0
      %2056 = vmatmul.mubr.bf16.gmra.mrb[0].mxu0 %v1565
      %v2057 = vpop.f32.mrb[0].mxu0
      %v2058 = vadd.f32 0.0, %v2057
      %v2059 = vpop.f32.mrb[0].mxu0
      %v2060 = vpop.f32.mrb[0].mxu0
      %v2061 = vadd.f32 0.0, %v2060
      %v2062 = vpop.f32.mrb[0].mxu0
      %2063 = vmatprep.mubr.bf16.mxu0 0
      %2064 = vmatmul.mubr.bf16.gmra.mrb[0].mxu0 %v1941
      %v2065 = vpop.f32.mrb[0].mxu0
      %v2066 = vadd.f32 0.0, %v2065
      %v2067 = vpop.f32.mrb[0].mxu0
      %v2068 = vpop.f32.mrb[0].mxu0
      %v2069 = vadd.f32 0.0, %v2068
      %v2070 = vpop.f32.mrb[0].mxu0
      %2071 = vmatprep.mubr.bf16.mxu0 0
      %2072 = vmatmul.mubr.bf16.gmra.mrb[0].mxu0 %v1944
      %v2073 = vpop.f32.mrb[0].mxu0
      %v2074 = vadd.f32 0.0, %v2073
      %v2075 = vpop.f32.mrb[0].mxu0
      %v2076 = vpop.f32.mrb[0].mxu0
      %v2077 = vadd.f32 0.0, %v2076
      %v2078 = vpop.f32.mrb[0].mxu0
      %2079 = vmatprep.mubr.bf16.mxu0 0
      %2080 = vmatmul.mubr.bf16.gmra.mrb[0].mxu0 %v1947
      %v2081 = vpop.f32.mrb[0].mxu0
      %v2082 = vadd.f32 0.0, %v2081
      %v2083 = vpop.f32.mrb[0].mxu0
      %v2084 = vpop.f32.mrb[0].mxu0
      %v2085 = vadd.f32 0.0, %v2084
      %v2086 = vpop.f32.mrb[0].mxu0
      %2087 = vmatprep.mubr.bf16.mxu0 0
      %2088 = vmatmul.mubr.bf16.gmra.mrb[0].mxu0 %v1950
      %v2089 = vpop.f32.mrb[0].mxu0
      %v2090 = vadd.f32 0.0, %v2089
      %v2091 = vpop.f32.mrb[0].mxu0
      %v2092 = vpop.f32.mrb[0].mxu0
      %v2093 = vadd.f32 0.0, %v2092
      %v2094 = vpop.f32.mrb[0].mxu0
      %2095 = vmatprep.mubr.bf16.mxu0 0
      %2096 = vmatmul.mubr.bf16.gmra.mrb[0].mxu0 %v1953
      %v2097 = vpop.f32.mrb[0].mxu0
      %v2098 = vadd.f32 0.0, %v2097
      %v2099 = vpop.f32.mrb[0].mxu0
      %v2100 = vpop.f32.mrb[0].mxu0
      %v2101 = vadd.f32 0.0, %v2100
      %v2102 = vpop.f32.mrb[0].mxu0
      %2103 = vmatprep.mubr.bf16.mxu0 0
      %2104 = vmatmul.mubr.bf16.gmra.mrb[0].mxu0 %v1956
      %v2105 = vpop.f32.mrb[0].mxu0
      %v2106 = vadd.f32 0.0, %v2105
      %v2107 = vpop.f32.mrb[0].mxu0
      %v2108 = vpop.f32.mrb[0].mxu0
      %v2109 = vadd.f32 0.0, %v2108
      %v2110 = vpop.f32.mrb[0].mxu0
      %2111 = vmatprep.mubr.bf16.mxu0 0
      %2112 = vmatmul.mubr.bf16.gmra.mrb[0].mxu0 %v1959
      %v2113 = vpop.f32.mrb[0].mxu0
      %v2114 = vadd.f32 0.0, %v2113
      %v2115 = vpop.f32.mrb[0].mxu0
      %v2116 = vpop.f32.mrb[0].mxu0
      %v2117 = vadd.f32 0.0, %v2116
      %v2118 = vpop.f32.mrb[0].mxu0
      %2119 = vmatprep.mubr.bf16.mxu0 0
      %2120 = vmatmul.mubr.bf16.gmra.mrb[0].mxu0 %v1962
      %v2121 = vpop.f32.mrb[0].mxu0
      %v2122 = vadd.f32 0.0, %v2121
      %v2123 = vpop.f32.mrb[0].mxu0
      %v2124 = vpop.f32.mrb[0].mxu0
      %v2125 = vadd.f32 0.0, %v2124
      %v2126 = vpop.f32.mrb[0].mxu0
      %2127 = vdwg.mxu0
      %v2128 = vadd.f32 %v1803, %v2002
      %v2129 = vadd.f32 %v1806, %v2005
      %v2130 = vadd.f32 %v1811, %v2010
      %v2131 = vadd.f32 %v1814, %v2013
      %v2132 = vadd.f32 %v1819, %v2018
      %v2133 = vadd.f32 %v1822, %v2021
      %v2134 = vadd.f32 %v1827, %v2026
      %v2135 = vadd.f32 %v1830, %v2029
      %v2136 = vadd.f32 %v1835, %v2034
      %v2137 = vadd.f32 %v1838, %v2037
      %v2138 = vadd.f32 %v1843, %v2042
      %v2139 = vadd.f32 %v1846, %v2045
      %v2140 = vadd.f32 %v1851, %v2050
      %v2141 = vadd.f32 %v1854, %v2053
      %v2142 = vadd.f32 %v1859, %v2058
      %v2143 = vadd.f32 %v1862, %v2061
      %v2144 = vadd.f32 %v1867, %v2066
      %v2145 = vadd.f32 %v1870, %v2069
      %v2146 = vadd.f32 %v1875, %v2074
      %v2147 = vadd.f32 %v1878, %v2077
      %v2148 = vadd.f32 %v1883, %v2082
      %v2149 = vadd.f32 %v1886, %v2085
      %v2150 = vadd.f32 %v1891, %v2090
      %v2151 = vadd.f32 %v1894, %v2093
      %v2152 = vadd.f32 %v1899, %v2098
      %v2153 = vadd.f32 %v1902, %v2101
      %v2154 = vadd.f32 %v1907, %v2106
      %v2155 = vadd.f32 %v1910, %v2109
      %v2156 = vadd.f32 %v1915, %v2114
      %v2157 = vadd.f32 %v1918, %v2117
      %v2158 = vadd.f32 %v1923, %v2122
      %v2159 = vadd.f32 %v1926, %v2125
      %v2160 = vadd.f32 %v1436, %v2128
      %v2161 = vadd.f32 %v1437, %v2129
      %v2162 = vadd.f32 %v1438, %v2130
      %v2163 = vadd.f32 %v1439, %v2131
      %v2164 = vadd.f32 %v1440, %v2132
      %v2165 = vadd.f32 %v1441, %v2133
      %v2166 = vadd.f32 %v1442, %v2134
      %v2167 = vadd.f32 %v1443, %v2135
      %v2168 = vadd.f32 %v1444, %v2136
      %v2169 = vadd.f32 %v1445, %v2137
      %v2170 = vadd.f32 %v1446, %v2138
      %v2171 = vadd.f32 %v1447, %v2139
      %v2172 = vadd.f32 %v1448, %v2140
      %v2173 = vadd.f32 %v1449, %v2141
      %v2174 = vadd.f32 %v1450, %v2142
      %v2175 = vadd.f32 %v1451, %v2143
      %v2176 = vadd.f32 %v1452, %v2144
      %v2177 = vadd.f32 %v1453, %v2145
      %v2178 = vadd.f32 %v1454, %v2146
      %v2179 = vadd.f32 %v1455, %v2147
      %v2180 = vadd.f32 %v1456, %v2148
      %v2181 = vadd.f32 %v1457, %v2149
      %v2182 = vadd.f32 %v1458, %v2150
      %v2183 = vadd.f32 %v1459, %v2151
      %v2184 = vadd.f32 %v1460, %v2152
      %v2185 = vadd.f32 %v1461, %v2153
      %v2186 = vadd.f32 %v1462, %v2154
      %v2187 = vadd.f32 %v1463, %v2155
      %v2188 = vadd.f32 %v1464, %v2156
      %v2189 = vadd.f32 %v1465, %v2157
      %v2190 = vadd.f32 %v1466, %v2158
      %v2191 = vadd.f32 %v1467, %v2159
      %v2193 = vshrl.u32 %v224, 16
      %v2195 = vrot.slane %v2193, 4
      %v2196 = vshll.u32 %v224, 16
      %v2198 = vrot.slane %v2196, 5
      %v2199 = vor.u32 %v2195, %v2198
      %v2200 = vrot.slane %v2199, 4
      %v2202 = vshll.u32 %v225, 16
      %v2204 = vrot.slane %v2202, 5
      %v2205 = vsel %vm264, %v2200, %v2204
      %v2207 = vshrl.u32 %v260, 16
      %v2209 = vrot.slane %v2207, 4
      %v2210 = vshll.u32 %v260, 16
      %v2212 = vrot.slane %v2210, 5
      %v2213 = vor.u32 %v2209, %v2212
      %v2214 = vrot.slane %v2213, 4
      %v2216 = vshll.u32 %v261, 16
      %v2218 = vrot.slane %v2216, 5
      %v2219 = vsel %vm264, %v2214, %v2218
      %s2220 = scalar_lea.vmem %s2, 12
      %v2221 = vld [vmem:[%s2220] sm:$0x3]
      %s2222 = scalar_lea.vmem %s2, 14
      %v2223 = vld [vmem:[%s2222] sm:$0x3]
      %v2225 = vunpack.c.l.b16 %v260
      %v2226 = vunpack.c.l.b16 %v2205
      %v2227 = vpack.c.b16 %v2225, %v1501
      %v2228 = vpack.c.b16 %v2226, %v1502
      %v2230 = vsel %vm780, %v2227, 0
      %v2233 = vsel %vm780, %v2228, 0
      %v2236 = vsel %vm829, %v2223, 0
      %2238 = vmatprep.subr.bf16.mxu0 0
      %2239 = vmatpush1.bf16.msra.mxu0 %v2236
      %2240 = vmatprep.subr.bf16.mxu0 0
      %2241 = vmatpush1.bf16.msra.mxu0 0
      %2242 = vmatprep.subr.bf16.mxu0 0
      %2243 = vmatpush1.bf16.msra.mxu0 0
      %2244 = vmatprep.subr.bf16.mxu0 0
      %2245 = vmatpush1.bf16.msra.mxu0 0
      %2246 = vmatprep.subr.bf16.mxu0 0
      %2247 = vmatpush1.bf16.msra.mxu0 0
      %2248 = vmatprep.subr.bf16.mxu0 0
      %2249 = vmatpush1.bf16.msra.mxu0 0
      %2250 = vmatprep.subr.bf16.mxu0 0
      %2251 = vmatpush1.bf16.msra.mxu0 0
      %2252 = vmatprep.subr.bf16.mxu0 0
      %2253 = vmatpush1.bf16.msra.mxu0 0
      %2254 = vmatprep.subr.bf16.mxu0 0
      %2255 = vmatpush1.bf16.msra.mxu0 0
      %2256 = vmatprep.subr.bf16.mxu0 0
      %2257 = vmatpush1.bf16.msra.mxu0 0
      %2258 = vmatprep.subr.bf16.mxu0 0
      %2259 = vmatpush1.bf16.msra.mxu0 0
      %2260 = vmatprep.subr.bf16.mxu0 0
      %2261 = vmatpush1.bf16.msra.mxu0 0
      %2262 = vmatprep.subr.bf16.mxu0 0
      %2263 = vmatpush1.bf16.msra.mxu0 0
      %2264 = vmatprep.subr.bf16.mxu0 0
      %2265 = vmatpush1.bf16.msra.mxu0 0
      %2266 = vmatprep.subr.bf16.mxu0 0
      %2267 = vmatpush1.bf16.msra.mxu0 0
      %2268 = vmatprep.subr.bf16.mxu0 0
      %2269 = vmatpush1.bf16.msra.mxu0 0
      %2270 = vmatprep.mubr.bf16.mxu0 0
      %2271 = vmatmul.mubr.bf16.gmra.mrb[0].mxu0 %v785
      %v2272 = vpop.f32.mrb[0].mxu0
      %v2273 = vadd.f32 0.0, %v2272
      %v2274 = vpop.f32.mrb[0].mxu0
      %v2275 = vpop.f32.mrb[0].mxu0
      %v2276 = vadd.f32 0.0, %v2275
      %v2277 = vpop.f32.mrb[0].mxu0
      %2278 = vmatprep.mubr.bf16.mxu0 0
      %2279 = vmatmul.mubr.bf16.gmra.mrb[0].mxu0 %v788
      %v2280 = vpop.f32.mrb[0].mxu0
      %v2281 = vadd.f32 0.0, %v2280
      %v2282 = vpop.f32.mrb[0].mxu0
      %v2283 = vpop.f32.mrb[0].mxu0
      %v2284 = vadd.f32 0.0, %v2283
      %v2285 = vpop.f32.mrb[0].mxu0
      %2286 = vmatprep.mubr.bf16.mxu0 0
      %2287 = vmatmul.mubr.bf16.gmra.mrb[0].mxu0 %v791
      %v2288 = vpop.f32.mrb[0].mxu0
      %v2289 = vadd.f32 0.0, %v2288
      %v2290 = vpop.f32.mrb[0].mxu0
      %v2291 = vpop.f32.mrb[0].mxu0
      %v2292 = vadd.f32 0.0, %v2291
      %v2293 = vpop.f32.mrb[0].mxu0
      %2294 = vmatprep.mubr.bf16.mxu0 0
      %2295 = vmatmul.mubr.bf16.gmra.mrb[0].mxu0 %v794
      %v2296 = vpop.f32.mrb[0].mxu0
      %v2297 = vadd.f32 0.0, %v2296
      %v2298 = vpop.f32.mrb[0].mxu0
      %v2299 = vpop.f32.mrb[0].mxu0
      %v2300 = vadd.f32 0.0, %v2299
      %v2301 = vpop.f32.mrb[0].mxu0
      %2302 = vmatprep.mubr.bf16.mxu0 0
      %2303 = vmatmul.mubr.bf16.gmra.mrb[0].mxu0 %v797
      %v2304 = vpop.f32.mrb[0].mxu0
      %v2305 = vadd.f32 0.0, %v2304
      %v2306 = vpop.f32.mrb[0].mxu0
      %v2307 = vpop.f32.mrb[0].mxu0
      %v2308 = vadd.f32 0.0, %v2307
      %v2309 = vpop.f32.mrb[0].mxu0
      %2310 = vmatprep.mubr.bf16.mxu0 0
      %2311 = vmatmul.mubr.bf16.gmra.mrb[0].mxu0 %v800
      %v2312 = vpop.f32.mrb[0].mxu0
      %v2313 = vadd.f32 0.0, %v2312
      %v2314 = vpop.f32.mrb[0].mxu0
      %v2315 = vpop.f32.mrb[0].mxu0
      %v2316 = vadd.f32 0.0, %v2315
      %v2317 = vpop.f32.mrb[0].mxu0
      %2318 = vmatprep.mubr.bf16.mxu0 0
      %2319 = vmatmul.mubr.bf16.gmra.mrb[0].mxu0 %v803
      %v2320 = vpop.f32.mrb[0].mxu0
      %v2321 = vadd.f32 0.0, %v2320
      %v2322 = vpop.f32.mrb[0].mxu0
      %v2323 = vpop.f32.mrb[0].mxu0
      %v2324 = vadd.f32 0.0, %v2323
      %v2325 = vpop.f32.mrb[0].mxu0
      %2326 = vmatprep.mubr.bf16.mxu0 0
      %2327 = vmatmul.mubr.bf16.gmra.mrb[0].mxu0 %v2230
      %v2328 = vpop.f32.mrb[0].mxu0
      %v2329 = vadd.f32 0.0, %v2328
      %v2330 = vpop.f32.mrb[0].mxu0
      %v2331 = vpop.f32.mrb[0].mxu0
      %v2332 = vadd.f32 0.0, %v2331
      %v2333 = vpop.f32.mrb[0].mxu0
      %2334 = vmatprep.mubr.bf16.mxu0 0
      %2335 = vmatmul.mubr.bf16.gmra.mrb[0].mxu0 %v809
      %v2336 = vpop.f32.mrb[0].mxu0
      %v2337 = vadd.f32 0.0, %v2336
      %v2338 = vpop.f32.mrb[0].mxu0
      %v2339 = vpop.f32.mrb[0].mxu0
      %v2340 = vadd.f32 0.0, %v2339
      %v2341 = vpop.f32.mrb[0].mxu0
      %2342 = vmatprep.mubr.bf16.mxu0 0
      %2343 = vmatmul.mubr.bf16.gmra.mrb[0].mxu0 %v812
      %v2344 = vpop.f32.mrb[0].mxu0
      %v2345 = vadd.f32 0.0, %v2344
      %v2346 = vpop.f32.mrb[0].mxu0
      %v2347 = vpop.f32.mrb[0].mxu0
      %v2348 = vadd.f32 0.0, %v2347
      %v2349 = vpop.f32.mrb[0].mxu0
      %2350 = vmatprep.mubr.bf16.mxu0 0
      %2351 = vmatmul.mubr.bf16.gmra.mrb[0].mxu0 %v815
      %v2352 = vpop.f32.mrb[0].mxu0
      %v2353 = vadd.f32 0.0, %v2352
      %v2354 = vpop.f32.mrb[0].mxu0
      %v2355 = vpop.f32.mrb[0].mxu0
      %v2356 = vadd.f32 0.0, %v2355
      %v2357 = vpop.f32.mrb[0].mxu0
      %2358 = vmatprep.mubr.bf16.mxu0 0
      %2359 = vmatmul.mubr.bf16.gmra.mrb[0].mxu0 %v818
      %v2360 = vpop.f32.mrb[0].mxu0
      %v2361 = vadd.f32 0.0, %v2360
      %v2362 = vpop.f32.mrb[0].mxu0
      %v2363 = vpop.f32.mrb[0].mxu0
      %v2364 = vadd.f32 0.0, %v2363
      %v2365 = vpop.f32.mrb[0].mxu0
      %2366 = vmatprep.mubr.bf16.mxu0 0
      %2367 = vmatmul.mubr.bf16.gmra.mrb[0].mxu0 %v821
      %v2368 = vpop.f32.mrb[0].mxu0
      %v2369 = vadd.f32 0.0, %v2368
      %v2370 = vpop.f32.mrb[0].mxu0
      %v2371 = vpop.f32.mrb[0].mxu0
      %v2372 = vadd.f32 0.0, %v2371
      %v2373 = vpop.f32.mrb[0].mxu0
      %2374 = vmatprep.mubr.bf16.mxu0 0
      %2375 = vmatmul.mubr.bf16.gmra.mrb[0].mxu0 %v824
      %v2376 = vpop.f32.mrb[0].mxu0
      %v2377 = vadd.f32 0.0, %v2376
      %v2378 = vpop.f32.mrb[0].mxu0
      %v2379 = vpop.f32.mrb[0].mxu0
      %v2380 = vadd.f32 0.0, %v2379
      %v2381 = vpop.f32.mrb[0].mxu0
      %2382 = vmatprep.mubr.bf16.mxu0 0
      %2383 = vmatmul.mubr.bf16.gmra.mrb[0].mxu0 %v827
      %v2384 = vpop.f32.mrb[0].mxu0
      %v2385 = vadd.f32 0.0, %v2384
      %v2386 = vpop.f32.mrb[0].mxu0
      %v2387 = vpop.f32.mrb[0].mxu0
      %v2388 = vadd.f32 0.0, %v2387
      %v2389 = vpop.f32.mrb[0].mxu0
      %2390 = vmatprep.mubr.bf16.mxu0 0
      %2391 = vmatmul.mubr.bf16.gmra.mrb[0].mxu0 %v2233
      %v2392 = vpop.f32.mrb[0].mxu0
      %v2393 = vadd.f32 0.0, %v2392
      %v2394 = vpop.f32.mrb[0].mxu0
      %v2395 = vpop.f32.mrb[0].mxu0
      %v2396 = vadd.f32 0.0, %v2395
      %v2397 = vpop.f32.mrb[0].mxu0
      %2398 = vdwg.mxu0
      %v2400 = vunpack.c.l.b16 %v224
      %v2401 = vpack.c.b16 %v2400, %v1732
      %v2403 = vsel %vm780, %v2401, 0
      %v2406 = vsel %vm829, %v2221, 0
      %2408 = vmatprep.subr.bf16.mxu0 0
      %2409 = vmatpush1.bf16.msra.mxu0 %v2406
      %2410 = vmatprep.subr.bf16.mxu0 0
      %2411 = vmatpush1.bf16.msra.mxu0 0
      %2412 = vmatprep.subr.bf16.mxu0 0
      %2413 = vmatpush1.bf16.msra.mxu0 0
      %2414 = vmatprep.subr.bf16.mxu0 0
      %2415 = vmatpush1.bf16.msra.mxu0 0
      %2416 = vmatprep.subr.bf16.mxu0 0
      %2417 = vmatpush1.bf16.msra.mxu0 0
      %2418 = vmatprep.subr.bf16.mxu0 0
      %2419 = vmatpush1.bf16.msra.mxu0 0
      %2420 = vmatprep.subr.bf16.mxu0 0
      %2421 = vmatpush1.bf16.msra.mxu0 0
      %2422 = vmatprep.subr.bf16.mxu0 0
      %2423 = vmatpush1.bf16.msra.mxu0 0
      %2424 = vmatprep.subr.bf16.mxu0 0
      %2425 = vmatpush1.bf16.msra.mxu0 0
      %2426 = vmatprep.subr.bf16.mxu0 0
      %2427 = vmatpush1.bf16.msra.mxu0 0
      %2428 = vmatprep.subr.bf16.mxu0 0
      %2429 = vmatpush1.bf16.msra.mxu0 0
      %2430 = vmatprep.subr.bf16.mxu0 0
      %2431 = vmatpush1.bf16.msra.mxu0 0
      %2432 = vmatprep.subr.bf16.mxu0 0
      %2433 = vmatpush1.bf16.msra.mxu0 0
      %2434 = vmatprep.subr.bf16.mxu0 0
      %2435 = vmatpush1.bf16.msra.mxu0 0
      %2436 = vmatprep.subr.bf16.mxu0 0
      %2437 = vmatpush1.bf16.msra.mxu0 0
      %2438 = vmatprep.subr.bf16.mxu0 0
      %2439 = vmatpush1.bf16.msra.mxu0 0
      %2440 = vmatprep.mubr.bf16.mxu0 0
      %2441 = vmatmul.mubr.bf16.gmra.mrb[0].mxu0 %v1038
      %v2442 = vpop.f32.mrb[0].mxu0
      %v2443 = vadd.f32 %v2273, %v2442
      %v2444 = vpop.f32.mrb[0].mxu0
      %v2445 = vpop.f32.mrb[0].mxu0
      %v2446 = vadd.f32 %v2276, %v2445
      %v2447 = vpop.f32.mrb[0].mxu0
      %2448 = vmatprep.mubr.bf16.mxu0 0
      %2449 = vmatmul.mubr.bf16.gmra.mrb[0].mxu0 %v1041
      %v2450 = vpop.f32.mrb[0].mxu0
      %v2451 = vadd.f32 %v2281, %v2450
      %v2452 = vpop.f32.mrb[0].mxu0
      %v2453 = vpop.f32.mrb[0].mxu0
      %v2454 = vadd.f32 %v2284, %v2453
      %v2455 = vpop.f32.mrb[0].mxu0
      %2456 = vmatprep.mubr.bf16.mxu0 0
      %2457 = vmatmul.mubr.bf16.gmra.mrb[0].mxu0 %v1044
      %v2458 = vpop.f32.mrb[0].mxu0
      %v2459 = vadd.f32 %v2289, %v2458
      %v2460 = vpop.f32.mrb[0].mxu0
      %v2461 = vpop.f32.mrb[0].mxu0
      %v2462 = vadd.f32 %v2292, %v2461
      %v2463 = vpop.f32.mrb[0].mxu0
      %2464 = vmatprep.mubr.bf16.mxu0 0
      %2465 = vmatmul.mubr.bf16.gmra.mrb[0].mxu0 %v1047
      %v2466 = vpop.f32.mrb[0].mxu0
      %v2467 = vadd.f32 %v2297, %v2466
      %v2468 = vpop.f32.mrb[0].mxu0
      %v2469 = vpop.f32.mrb[0].mxu0
      %v2470 = vadd.f32 %v2300, %v2469
      %v2471 = vpop.f32.mrb[0].mxu0
      %2472 = vmatprep.mubr.bf16.mxu0 0
      %2473 = vmatmul.mubr.bf16.gmra.mrb[0].mxu0 %v1050
      %v2474 = vpop.f32.mrb[0].mxu0
      %v2475 = vadd.f32 %v2305, %v2474
      %v2476 = vpop.f32.mrb[0].mxu0
      %v2477 = vpop.f32.mrb[0].mxu0
      %v2478 = vadd.f32 %v2308, %v2477
      %v2479 = vpop.f32.mrb[0].mxu0
      %2480 = vmatprep.mubr.bf16.mxu0 0
      %2481 = vmatmul.mubr.bf16.gmra.mrb[0].mxu0 %v1053
      %v2482 = vpop.f32.mrb[0].mxu0
      %v2483 = vadd.f32 %v2313, %v2482
      %v2484 = vpop.f32.mrb[0].mxu0
      %v2485 = vpop.f32.mrb[0].mxu0
      %v2486 = vadd.f32 %v2316, %v2485
      %v2487 = vpop.f32.mrb[0].mxu0
      %2488 = vmatprep.mubr.bf16.mxu0 0
      %2489 = vmatmul.mubr.bf16.gmra.mrb[0].mxu0 %v1056
      %v2490 = vpop.f32.mrb[0].mxu0
      %v2491 = vadd.f32 %v2321, %v2490
      %v2492 = vpop.f32.mrb[0].mxu0
      %v2493 = vpop.f32.mrb[0].mxu0
      %v2494 = vadd.f32 %v2324, %v2493
      %v2495 = vpop.f32.mrb[0].mxu0
      %2496 = vmatprep.mubr.bf16.mxu0 0
      %2497 = vmatmul.mubr.bf16.gmra.mrb[0].mxu0 %v2403
      %v2498 = vpop.f32.mrb[0].mxu0
      %v2499 = vadd.f32 %v2329, %v2498
      %v2500 = vpop.f32.mrb[0].mxu0
      %v2501 = vpop.f32.mrb[0].mxu0
      %v2502 = vadd.f32 %v2332, %v2501
      %v2503 = vpop.f32.mrb[0].mxu0
      %2504 = vmatprep.mubr.bf16.mxu0 0
      %2505 = vmatmul.mubr.bf16.gmra.mrb[0].mxu0 %v785
      %v2506 = vpop.f32.mrb[0].mxu0
      %v2507 = vadd.f32 %v2337, %v2506
      %v2508 = vpop.f32.mrb[0].mxu0
      %v2509 = vpop.f32.mrb[0].mxu0
      %v2510 = vadd.f32 %v2340, %v2509
      %v2511 = vpop.f32.mrb[0].mxu0
      %2512 = vmatprep.mubr.bf16.mxu0 0
      %2513 = vmatmul.mubr.bf16.gmra.mrb[0].mxu0 %v788
      %v2514 = vpop.f32.mrb[0].mxu0
      %v2515 = vadd.f32 %v2345, %v2514
      %v2516 = vpop.f32.mrb[0].mxu0
      %v2517 = vpop.f32.mrb[0].mxu0
      %v2518 = vadd.f32 %v2348, %v2517
      %v2519 = vpop.f32.mrb[0].mxu0
      %2520 = vmatprep.mubr.bf16.mxu0 0
      %2521 = vmatmul.mubr.bf16.gmra.mrb[0].mxu0 %v791
      %v2522 = vpop.f32.mrb[0].mxu0
      %v2523 = vadd.f32 %v2353, %v2522
      %v2524 = vpop.f32.mrb[0].mxu0
      %v2525 = vpop.f32.mrb[0].mxu0
      %v2526 = vadd.f32 %v2356, %v2525
      %v2527 = vpop.f32.mrb[0].mxu0
      %2528 = vmatprep.mubr.bf16.mxu0 0
      %2529 = vmatmul.mubr.bf16.gmra.mrb[0].mxu0 %v794
      %v2530 = vpop.f32.mrb[0].mxu0
      %v2531 = vadd.f32 %v2361, %v2530
      %v2532 = vpop.f32.mrb[0].mxu0
      %v2533 = vpop.f32.mrb[0].mxu0
      %v2534 = vadd.f32 %v2364, %v2533
      %v2535 = vpop.f32.mrb[0].mxu0
      %2536 = vmatprep.mubr.bf16.mxu0 0
      %2537 = vmatmul.mubr.bf16.gmra.mrb[0].mxu0 %v797
      %v2538 = vpop.f32.mrb[0].mxu0
      %v2539 = vadd.f32 %v2369, %v2538
      %v2540 = vpop.f32.mrb[0].mxu0
      %v2541 = vpop.f32.mrb[0].mxu0
      %v2542 = vadd.f32 %v2372, %v2541
      %v2543 = vpop.f32.mrb[0].mxu0
      %2544 = vmatprep.mubr.bf16.mxu0 0
      %2545 = vmatmul.mubr.bf16.gmra.mrb[0].mxu0 %v800
      %v2546 = vpop.f32.mrb[0].mxu0
      %v2547 = vadd.f32 %v2377, %v2546
      %v2548 = vpop.f32.mrb[0].mxu0
      %v2549 = vpop.f32.mrb[0].mxu0
      %v2550 = vadd.f32 %v2380, %v2549
      %v2551 = vpop.f32.mrb[0].mxu0
      %2552 = vmatprep.mubr.bf16.mxu0 0
      %2553 = vmatmul.mubr.bf16.gmra.mrb[0].mxu0 %v803
      %v2554 = vpop.f32.mrb[0].mxu0
      %v2555 = vadd.f32 %v2385, %v2554
      %v2556 = vpop.f32.mrb[0].mxu0
      %v2557 = vpop.f32.mrb[0].mxu0
      %v2558 = vadd.f32 %v2388, %v2557
      %v2559 = vpop.f32.mrb[0].mxu0
      %2560 = vmatprep.mubr.bf16.mxu0 0
      %2561 = vmatmul.mubr.bf16.gmra.mrb[0].mxu0 %v2230
      %v2562 = vpop.f32.mrb[0].mxu0
      %v2563 = vadd.f32 %v2393, %v2562
      %v2564 = vpop.f32.mrb[0].mxu0
      %v2565 = vpop.f32.mrb[0].mxu0
      %v2566 = vadd.f32 %v2396, %v2565
      %v2567 = vpop.f32.mrb[0].mxu0
      %2568 = vdwg.mxu0
      %s2569 = scalar_lea.vmem %s2, 16
      %v2570 = vld [vmem:[%s2569] sm:$0x3]
      %v2571 = vunpack.c.l.b16 %v2219
      %v2572 = vpack.c.b16 %v2571, %v1931
      %v2574 = vsel %vm780, %v2572, 0
      %v2577 = vsel %vm829, %v2570, 0
      %2579 = vmatprep.subr.bf16.mxu0 0
      %2580 = vmatpush1.bf16.msra.mxu0 %v2577
      %2581 = vmatprep.subr.bf16.mxu0 0
      %2582 = vmatpush1.bf16.msra.mxu0 0
      %2583 = vmatprep.subr.bf16.mxu0 0
      %2584 = vmatpush1.bf16.msra.mxu0 0
      %2585 = vmatprep.subr.bf16.mxu0 0
      %2586 = vmatpush1.bf16.msra.mxu0 0
      %2587 = vmatprep.subr.bf16.mxu0 0
      %2588 = vmatpush1.bf16.msra.mxu0 0
      %2589 = vmatprep.subr.bf16.mxu0 0
      %2590 = vmatpush1.bf16.msra.mxu0 0
      %2591 = vmatprep.subr.bf16.mxu0 0
      %2592 = vmatpush1.bf16.msra.mxu0 0
      %2593 = vmatprep.subr.bf16.mxu0 0
      %2594 = vmatpush1.bf16.msra.mxu0 0
      %2595 = vmatprep.subr.bf16.mxu0 0
      %2596 = vmatpush1.bf16.msra.mxu0 0
      %2597 = vmatprep.subr.bf16.mxu0 0
      %2598 = vmatpush1.bf16.msra.mxu0 0
      %2599 = vmatprep.subr.bf16.mxu0 0
      %2600 = vmatpush1.bf16.msra.mxu0 0
      %2601 = vmatprep.subr.bf16.mxu0 0
      %2602 = vmatpush1.bf16.msra.mxu0 0
      %2603 = vmatprep.subr.bf16.mxu0 0
      %2604 = vmatpush1.bf16.msra.mxu0 0
      %2605 = vmatprep.subr.bf16.mxu0 0
      %2606 = vmatpush1.bf16.msra.mxu0 0
      %2607 = vmatprep.subr.bf16.mxu0 0
      %2608 = vmatpush1.bf16.msra.mxu0 0
      %2609 = vmatprep.subr.bf16.mxu0 0
      %2610 = vmatpush1.bf16.msra.mxu0 0
      %2611 = vmatprep.mubr.bf16.mxu0 0
      %2612 = vmatmul.mubr.bf16.gmra.mrb[0].mxu0 %v809
      %v2613 = vpop.f32.mrb[0].mxu0
      %v2614 = vadd.f32 0.0, %v2613
      %v2615 = vpop.f32.mrb[0].mxu0
      %v2616 = vpop.f32.mrb[0].mxu0
      %v2617 = vadd.f32 0.0, %v2616
      %v2618 = vpop.f32.mrb[0].mxu0
      %2619 = vmatprep.mubr.bf16.mxu0 0
      %2620 = vmatmul.mubr.bf16.gmra.mrb[0].mxu0 %v812
      %v2621 = vpop.f32.mrb[0].mxu0
      %v2622 = vadd.f32 0.0, %v2621
      %v2623 = vpop.f32.mrb[0].mxu0
      %v2624 = vpop.f32.mrb[0].mxu0
      %v2625 = vadd.f32 0.0, %v2624
      %v2626 = vpop.f32.mrb[0].mxu0
      %2627 = vmatprep.mubr.bf16.mxu0 0
      %2628 = vmatmul.mubr.bf16.gmra.mrb[0].mxu0 %v815
      %v2629 = vpop.f32.mrb[0].mxu0
      %v2630 = vadd.f32 0.0, %v2629
      %v2631 = vpop.f32.mrb[0].mxu0
      %v2632 = vpop.f32.mrb[0].mxu0
      %v2633 = vadd.f32 0.0, %v2632
      %v2634 = vpop.f32.mrb[0].mxu0
      %2635 = vmatprep.mubr.bf16.mxu0 0
      %2636 = vmatmul.mubr.bf16.gmra.mrb[0].mxu0 %v818
      %v2637 = vpop.f32.mrb[0].mxu0
      %v2638 = vadd.f32 0.0, %v2637
      %v2639 = vpop.f32.mrb[0].mxu0
      %v2640 = vpop.f32.mrb[0].mxu0
      %v2641 = vadd.f32 0.0, %v2640
      %v2642 = vpop.f32.mrb[0].mxu0
      %2643 = vmatprep.mubr.bf16.mxu0 0
      %2644 = vmatmul.mubr.bf16.gmra.mrb[0].mxu0 %v821
      %v2645 = vpop.f32.mrb[0].mxu0
      %v2646 = vadd.f32 0.0, %v2645
      %v2647 = vpop.f32.mrb[0].mxu0
      %v2648 = vpop.f32.mrb[0].mxu0
      %v2649 = vadd.f32 0.0, %v2648
      %v2650 = vpop.f32.mrb[0].mxu0
      %2651 = vmatprep.mubr.bf16.mxu0 0
      %2652 = vmatmul.mubr.bf16.gmra.mrb[0].mxu0 %v824
      %v2653 = vpop.f32.mrb[0].mxu0
      %v2654 = vadd.f32 0.0, %v2653
      %v2655 = vpop.f32.mrb[0].mxu0
      %v2656 = vpop.f32.mrb[0].mxu0
      %v2657 = vadd.f32 0.0, %v2656
      %v2658 = vpop.f32.mrb[0].mxu0
      %2659 = vmatprep.mubr.bf16.mxu0 0
      %2660 = vmatmul.mubr.bf16.gmra.mrb[0].mxu0 %v827
      %v2661 = vpop.f32.mrb[0].mxu0
      %v2662 = vadd.f32 0.0, %v2661
      %v2663 = vpop.f32.mrb[0].mxu0
      %v2664 = vpop.f32.mrb[0].mxu0
      %v2665 = vadd.f32 0.0, %v2664
      %v2666 = vpop.f32.mrb[0].mxu0
      %2667 = vmatprep.mubr.bf16.mxu0 0
      %2668 = vmatmul.mubr.bf16.gmra.mrb[0].mxu0 %v2233
      %v2669 = vpop.f32.mrb[0].mxu0
      %v2670 = vadd.f32 0.0, %v2669
      %v2671 = vpop.f32.mrb[0].mxu0
      %v2672 = vpop.f32.mrb[0].mxu0
      %v2673 = vadd.f32 0.0, %v2672
      %v2674 = vpop.f32.mrb[0].mxu0
      %2675 = vmatprep.mubr.bf16.mxu0 0
      %2676 = vmatmul.mubr.bf16.gmra.mrb[0].mxu0 %v1252
      %v2677 = vpop.f32.mrb[0].mxu0
      %v2678 = vadd.f32 0.0, %v2677
      %v2679 = vpop.f32.mrb[0].mxu0
      %v2680 = vpop.f32.mrb[0].mxu0
      %v2681 = vadd.f32 0.0, %v2680
      %v2682 = vpop.f32.mrb[0].mxu0
      %2683 = vmatprep.mubr.bf16.mxu0 0
      %2684 = vmatmul.mubr.bf16.gmra.mrb[0].mxu0 %v1255
      %v2685 = vpop.f32.mrb[0].mxu0
      %v2686 = vadd.f32 0.0, %v2685
      %v2687 = vpop.f32.mrb[0].mxu0
      %v2688 = vpop.f32.mrb[0].mxu0
      %v2689 = vadd.f32 0.0, %v2688
      %v2690 = vpop.f32.mrb[0].mxu0
      %2691 = vmatprep.mubr.bf16.mxu0 0
      %2692 = vmatmul.mubr.bf16.gmra.mrb[0].mxu0 %v1258
      %v2693 = vpop.f32.mrb[0].mxu0
      %v2694 = vadd.f32 0.0, %v2693
      %v2695 = vpop.f32.mrb[0].mxu0
      %v2696 = vpop.f32.mrb[0].mxu0
      %v2697 = vadd.f32 0.0, %v2696
      %v2698 = vpop.f32.mrb[0].mxu0
      %2699 = vmatprep.mubr.bf16.mxu0 0
      %2700 = vmatmul.mubr.bf16.gmra.mrb[0].mxu0 %v1261
      %v2701 = vpop.f32.mrb[0].mxu0
      %v2702 = vadd.f32 0.0, %v2701
      %v2703 = vpop.f32.mrb[0].mxu0
      %v2704 = vpop.f32.mrb[0].mxu0
      %v2705 = vadd.f32 0.0, %v2704
      %v2706 = vpop.f32.mrb[0].mxu0
      %2707 = vmatprep.mubr.bf16.mxu0 0
      %2708 = vmatmul.mubr.bf16.gmra.mrb[0].mxu0 %v1264
      %v2709 = vpop.f32.mrb[0].mxu0
      %v2710 = vadd.f32 0.0, %v2709
      %v2711 = vpop.f32.mrb[0].mxu0
      %v2712 = vpop.f32.mrb[0].mxu0
      %v2713 = vadd.f32 0.0, %v2712
      %v2714 = vpop.f32.mrb[0].mxu0
      %2715 = vmatprep.mubr.bf16.mxu0 0
      %2716 = vmatmul.mubr.bf16.gmra.mrb[0].mxu0 %v1267
      %v2717 = vpop.f32.mrb[0].mxu0
      %v2718 = vadd.f32 0.0, %v2717
      %v2719 = vpop.f32.mrb[0].mxu0
      %v2720 = vpop.f32.mrb[0].mxu0
      %v2721 = vadd.f32 0.0, %v2720
      %v2722 = vpop.f32.mrb[0].mxu0
      %2723 = vmatprep.mubr.bf16.mxu0 0
      %2724 = vmatmul.mubr.bf16.gmra.mrb[0].mxu0 %v1270
      %v2725 = vpop.f32.mrb[0].mxu0
      %v2726 = vadd.f32 0.0, %v2725
      %v2727 = vpop.f32.mrb[0].mxu0
      %v2728 = vpop.f32.mrb[0].mxu0
      %v2729 = vadd.f32 0.0, %v2728
      %v2730 = vpop.f32.mrb[0].mxu0
      %2731 = vmatprep.mubr.bf16.mxu0 0
      %2732 = vmatmul.mubr.bf16.gmra.mrb[0].mxu0 %v2574
      %v2733 = vpop.f32.mrb[0].mxu0
      %v2734 = vadd.f32 0.0, %v2733
      %v2735 = vpop.f32.mrb[0].mxu0
      %v2736 = vpop.f32.mrb[0].mxu0
      %v2737 = vadd.f32 0.0, %v2736
      %v2738 = vpop.f32.mrb[0].mxu0
      %2739 = vdwg.mxu0
      %v2740 = vadd.f32 %v2443, %v2614
      %v2741 = vadd.f32 %v2446, %v2617
      %v2742 = vadd.f32 %v2451, %v2622
      %v2743 = vadd.f32 %v2454, %v2625
      %v2744 = vadd.f32 %v2459, %v2630
      %v2745 = vadd.f32 %v2462, %v2633
      %v2746 = vadd.f32 %v2467, %v2638
      %v2747 = vadd.f32 %v2470, %v2641
      %v2748 = vadd.f32 %v2475, %v2646
      %v2749 = vadd.f32 %v2478, %v2649
      %v2750 = vadd.f32 %v2483, %v2654
      %v2751 = vadd.f32 %v2486, %v2657
      %v2752 = vadd.f32 %v2491, %v2662
      %v2753 = vadd.f32 %v2494, %v2665
      %v2754 = vadd.f32 %v2499, %v2670
      %v2755 = vadd.f32 %v2502, %v2673
      %v2756 = vadd.f32 %v2507, %v2678
      %v2757 = vadd.f32 %v2510, %v2681
      %v2758 = vadd.f32 %v2515, %v2686
      %v2759 = vadd.f32 %v2518, %v2689
      %v2760 = vadd.f32 %v2523, %v2694
      %v2761 = vadd.f32 %v2526, %v2697
      %v2762 = vadd.f32 %v2531, %v2702
      %v2763 = vadd.f32 %v2534, %v2705
      %v2764 = vadd.f32 %v2539, %v2710
      %v2765 = vadd.f32 %v2542, %v2713
      %v2766 = vadd.f32 %v2547, %v2718
      %v2767 = vadd.f32 %v2550, %v2721
      %v2768 = vadd.f32 %v2555, %v2726
      %v2769 = vadd.f32 %v2558, %v2729
      %v2770 = vadd.f32 %v2563, %v2734
      %v2771 = vadd.f32 %v2566, %v2737
      %v2772 = vadd.f32 %v2160, %v2740
      %v2773 = vadd.f32 %v2161, %v2741
      %v2774 = vadd.f32 %v2162, %v2742
      %v2775 = vadd.f32 %v2163, %v2743
      %v2776 = vadd.f32 %v2164, %v2744
      %v2777 = vadd.f32 %v2165, %v2745
      %v2778 = vadd.f32 %v2166, %v2746
      %v2779 = vadd.f32 %v2167, %v2747
      %v2780 = vadd.f32 %v2168, %v2748
      %v2781 = vadd.f32 %v2169, %v2749
      %v2782 = vadd.f32 %v2170, %v2750
      %v2783 = vadd.f32 %v2171, %v2751
      %v2784 = vadd.f32 %v2172, %v2752
      %v2785 = vadd.f32 %v2173, %v2753
      %v2786 = vadd.f32 %v2174, %v2754
      %v2787 = vadd.f32 %v2175, %v2755
      %v2788 = vadd.f32 %v2176, %v2756
      %v2789 = vadd.f32 %v2177, %v2757
      %v2790 = vadd.f32 %v2178, %v2758
      %v2791 = vadd.f32 %v2179, %v2759
      %v2792 = vadd.f32 %v2180, %v2760
      %v2793 = vadd.f32 %v2181, %v2761
      %v2794 = vadd.f32 %v2182, %v2762
      %v2795 = vadd.f32 %v2183, %v2763
      %v2796 = vadd.f32 %v2184, %v2764
      %v2797 = vadd.f32 %v2185, %v2765
      %v2798 = vadd.f32 %v2186, %v2766
      %v2799 = vadd.f32 %v2187, %v2767
      %v2800 = vadd.f32 %v2188, %v2768
      %v2801 = vadd.f32 %v2189, %v2769
      %v2802 = vadd.f32 %v2190, %v2770
      %v2803 = vadd.f32 %v2191, %v2771
      %v2804 = vadd.f32 %v2772, %v2773
      %v2805 = vadd.f32 %v2804, %v2774
      %v2806 = vadd.f32 %v2805, %v2775
      %v2807 = vadd.f32 %v2806, %v2776
      %v2808 = vadd.f32 %v2807, %v2777
      %v2809 = vadd.f32 %v2808, %v2778
      %v2810 = vadd.f32 %v2809, %v2779
      %v2811 = vadd.f32 %v2810, %v2780
      %v2812 = vadd.f32 %v2811, %v2781
      %v2813 = vadd.f32 %v2812, %v2782
      %v2814 = vadd.f32 %v2813, %v2783
      %v2815 = vadd.f32 %v2814, %v2784
      %v2816 = vadd.f32 %v2815, %v2785
      %v2817 = vadd.f32 %v2816, %v2786
      %v2818 = vadd.f32 %v2817, %v2787
      %v2819 = vadd.f32 %v2818, %v2788
      %v2820 = vadd.f32 %v2819, %v2789
      %v2821 = vadd.f32 %v2820, %v2790
      %v2822 = vadd.f32 %v2821, %v2791
      %v2823 = vadd.f32 %v2822, %v2792
      %v2824 = vadd.f32 %v2823, %v2793
      %v2825 = vadd.f32 %v2824, %v2794
      %v2826 = vadd.f32 %v2825, %v2795
      %v2827 = vadd.f32 %v2826, %v2796
      %v2828 = vadd.f32 %v2827, %v2797
      %v2829 = vadd.f32 %v2828, %v2798
      %v2830 = vadd.f32 %v2829, %v2799
      %v2831 = vadd.f32 %v2830, %v2800
      %v2832 = vadd.f32 %v2831, %v2801
      %v2833 = vadd.f32 %v2832, %v2802
      %v2834 = vadd.f32 %v2833, %v2803
      %v2835 = vrot.slane %v2834, 4
      %v2836 = vadd.f32 %v2834, %v2835
      %v2837 = vrot.slane %v2836, 2
      %v2838 = vadd.f32 %v2836, %v2837
      %v2839 = vrot.slane %v2838, 1
      %v2840 = vadd.f32 %v2838, %v2839
      %2841 = vst [vmem:[%s188] sm:$0x1] %v2840
      %v2842 = vmul.f32 %v2772, %v2772
      %v2843 = vmul.f32 %v2773, %v2773
      %v2844 = vmul.f32 %v2774, %v2774
      %v2845 = vmul.f32 %v2775, %v2775
      %v2846 = vmul.f32 %v2776, %v2776
      %v2847 = vmul.f32 %v2777, %v2777
      %v2848 = vmul.f32 %v2778, %v2778
      %v2849 = vmul.f32 %v2779, %v2779
      %v2850 = vmul.f32 %v2780, %v2780
      %v2851 = vmul.f32 %v2781, %v2781
      %v2852 = vmul.f32 %v2782, %v2782
      %v2853 = vmul.f32 %v2783, %v2783
      %v2854 = vmul.f32 %v2784, %v2784
      %v2855 = vmul.f32 %v2785, %v2785
      %v2856 = vmul.f32 %v2786, %v2786
      %v2857 = vmul.f32 %v2787, %v2787
      %v2858 = vmul.f32 %v2788, %v2788
      %v2859 = vmul.f32 %v2789, %v2789
      %v2860 = vmul.f32 %v2790, %v2790
      %v2861 = vmul.f32 %v2791, %v2791
      %v2862 = vmul.f32 %v2792, %v2792
      %v2863 = vmul.f32 %v2793, %v2793
      %v2864 = vmul.f32 %v2794, %v2794
      %v2865 = vmul.f32 %v2795, %v2795
      %v2866 = vmul.f32 %v2796, %v2796
      %v2867 = vmul.f32 %v2797, %v2797
      %v2868 = vmul.f32 %v2798, %v2798
      %v2869 = vmul.f32 %v2799, %v2799
      %v2870 = vmul.f32 %v2800, %v2800
      %v2871 = vmul.f32 %v2801, %v2801
      %v2872 = vmul.f32 %v2802, %v2802
      %v2873 = vmul.f32 %v2803, %v2803
      %v2874 = vadd.f32 %v2842, %v2843
      %v2875 = vadd.f32 %v2874, %v2844
      %v2876 = vadd.f32 %v2875, %v2845
      %v2877 = vadd.f32 %v2876, %v2846
      %v2878 = vadd.f32 %v2877, %v2847
      %v2879 = vadd.f32 %v2878, %v2848
      %v2880 = vadd.f32 %v2879, %v2849
      %v2881 = vadd.f32 %v2880, %v2850
      %v2882 = vadd.f32 %v2881, %v2851
      %v2883 = vadd.f32 %v2882, %v2852
      %v2884 = vadd.f32 %v2883, %v2853
      %v2885 = vadd.f32 %v2884, %v2854
      %v2886 = vadd.f32 %v2885, %v2855
      %v2887 = vadd.f32 %v2886, %v2856
      %v2888 = vadd.f32 %v2887, %v2857
      %v2889 = vadd.f32 %v2888, %v2858
      %v2890 = vadd.f32 %v2889, %v2859
      %v2891 = vadd.f32 %v2890, %v2860
      %v2892 = vadd.f32 %v2891, %v2861
      %v2893 = vadd.f32 %v2892, %v2862
      %v2894 = vadd.f32 %v2893, %v2863
      %v2895 = vadd.f32 %v2894, %v2864
      %v2896 = vadd.f32 %v2895, %v2865
      %v2897 = vadd.f32 %v2896, %v2866
      %v2898 = vadd.f32 %v2897, %v2867
      %v2899 = vadd.f32 %v2898, %v2868
      %v2900 = vadd.f32 %v2899, %v2869
      %v2901 = vadd.f32 %v2900, %v2870
      %v2902 = vadd.f32 %v2901, %v2871
      %v2903 = vadd.f32 %v2902, %v2872
      %v2904 = vadd.f32 %v2903, %v2873
      %v2905 = vrot.slane %v2904, 4
      %v2906 = vadd.f32 %v2904, %v2905
      %v2907 = vrot.slane %v2906, 2
      %v2908 = vadd.f32 %v2906, %v2907
      %v2909 = vrot.slane %v2908, 1
      %v2910 = vadd.f32 %v2908, %v2909
      %2911 = vst [vmem:[%s188 + $0x1] sm:$0x1] %v2910
      %p2912 = scmp.lt.s32.totalorder %s14, 1
      %s2913 = scalar_select %p2912, %s14, 1
      %s2914 = smul.addr %s2913, 2
      %s2915 = scalar_lea.vmem %s3, %s2914
      // Predicated region
      $region33: #{_conv3_2d_forward.2} parent=31 // pred_check
        %p2916 = pneg %p105
      $region34: #{_conv3_2d_forward.2} parent=31 // pred_check_branch
        %2918 = sbr.rel (%p2916) target = $region36
      $region35: #{_conv3_2d_forward.2} parent=31 // pred_region
        _
      $region36: #{_conv3_2d_forward.2} parent=31 // pred_fallthru
        _
    $region32: #{_conv3_2d_forward.2} parent=5 // pred_fallthru
      _
    %p2919 = scmp.le.s32.totalorder 2, %s9
    // Predicated region
    $region37: #{_conv3_2d_forward.2} parent=5 // pred_check
      %p2920 = pneg %p2919
    $region38: #{_conv3_2d_forward.2} parent=5 // pred_check_branch
      %2922 = sbr.rel (%p2920) target = $region40
    $region39: #{_conv3_2d_forward.2} parent=5 // pred_region
      %s2923 = ssub.s32 %s9, 2
      // Predicated region
      $region41: #{_conv3_2d_forward.2} parent=39 // pred_check
        %p2924 = pneg %p111
      $region42: #{_conv3_2d_forward.2} parent=39 // pred_check_branch
        %2926 = sbr.rel (%p2924) target = $region44
      $region43: #{_conv3_2d_forward.2} parent=39 // pred_region
        %p2927 = scmp.lt.s32.totalorder %s15, 1
        %s2928 = scalar_select %p2927, %s15, 1
        %s2929 = smul.addr %s2928, 2
        %s2930 = scalar_lea.vmem %s3, %s2929
      $region44: #{_conv3_2d_forward.2} parent=39 // pred_fallthru
        _
    $region40: #{_conv3_2d_forward.2} parent=5 // pred_fallthru
      _
  $region6: #{_conv3_2d_forward.2} parent=0 // loop_footer
    %s13 = sadd.s32 1, %s9
  $region7: #{_conv3_2d_forward.2} parent=0 // loop_footer_branch
    %8 = sbr.rel target = $region3
  $region8: #{_conv3_2d_forward.2} parent=0 // loop_exit
    _

// kernel: _conv3_2d_forward.3
$region0: #{_conv3_2d_forward.3}
  #allocation0 [shape = 'u32[]', space=smem, size = 0x4, offset = 0x4, fixed_abs, tag = 'smem constant byte address 0x4 - core index']
  #allocation1 [shape = 'u32[144,128]{1,0:T(1,128)}', space=vmem, size = 0x12000, scoped, tag = 'internal scratch']
  %s0 = inlined_call_operand.vmem [shape: bf16[2,18,9,4], index: 0, kind: input, shape index: {}]
  %s1 = inlined_call_operand.vmem [shape: bf16[2,18,9,4], index: 1, kind: input, shape index: {}]
  %s2 = inlined_call_operand.vmem [shape: bf16[9,4,128], index: 2, kind: input, shape index: {}]
  %s3 = inlined_call_operand.vmem [shape: f32[2,128], index: 3, kind: input, shape index: {}]
  %s4 = inlined_call_operand.vmem [shape: f32[2,8,8,128], index: 4, kind: output, shape index: {}]
  %s5 = sld [smem:[#allocation0]]
  $region49: #{_conv3_2d_forward.3} parent=0
    _
  %s7 = ssub.s32 1, %s5
  %s8 = scalar_select 0, %s7, %s5
  loop: start=0, step=1, limit=4
  $region2: #{_conv3_2d_forward.3} parent=0 // loop_pre_header
    _
  $region3: #{_conv3_2d_forward.3} parent=0 // loop_header
    %s10 = sphi 0, %s14
    %p11 = scmp.ge.s32.totalorder %s10, 4
    %s20 = sphi 0, %s22
    %s23 = sphi 0, %s20
    %s24 = sphi 0, %s23
    %s40 = sphi 0, %s24
    %s46 = sphi 0, %s48
    %s49 = sphi 0, %s46
    %s50 = sphi 0, %s49
    %s66 = sphi 0, %s50
    %s70 = sphi 0, %s70
    %s72 = sphi 0, %s70
    %s73 = sphi 0, %s72
    %s87 = sphi 0, %s73
    %s91 = sphi 0, %s91
    %s93 = sphi 0, %s91
    %s94 = sphi 0, %s93
    %s108 = sphi 0, %s94
    %s114 = sphi 0, %s116
    %s117 = sphi 0, %s114
    %s118 = sphi 0, %s117
    %s134 = sphi 0, %s118
  $region4: #{_conv3_2d_forward.3} parent=0 // loop_header_branch
    %13 = sbr.rel (%p11) target = $region8
  $region5: #{_conv3_2d_forward.3} parent=0 // loop_body
    %s15 = ssub.s32 %s10, 1
    %s16 = ssub.s32 %s10, 2
    %s17 = sadd.s32 %s10, 1
    %s18 = ssub.s32 %s10, %s17
    %p19 = scmp.eq.s32.totalorder %s18, 0
    %s21 = sadd.s32 %s20, 1
    %s22 = scalar_select %p19, %s20, %s21
    %p25 = pneg %p19
    %p26 = scmp.eq.s32.totalorder %s10, 1
    %p27 = por %p25, %p26
    %p28 = scmp.ne.s32.totalorder %s20, %s23
    %p29 = scmp.eq.s32.totalorder %s10, 0
    %p30 = por %p28, %p29
    %p31 = scmp.ne.s32.totalorder %s20, %s23
    %p32 = scmp.eq.s32.totalorder %s15, 1
    %p33 = por %p31, %p32
    %p34 = scmp.ne.s32.totalorder %s23, %s24
    %p35 = scmp.eq.s32.totalorder %s15, 0
    %p36 = por %p34, %p35
    %p37 = scmp.ne.s32.totalorder %s23, %s24
    %p38 = scmp.eq.s32.totalorder %s16, 1
    %p39 = por %p37, %p38
    %p41 = scmp.ne.s32.totalorder %s24, %s40
    %p42 = scmp.eq.s32.totalorder %s16, 0
    %p43 = por %p41, %p42
    %s44 = ssub.s32 %s10, %s17
    %p45 = scmp.eq.s32.totalorder %s44, 0
    %s47 = sadd.s32 %s46, 1
    %s48 = scalar_select %p45, %s46, %s47
    %p51 = pneg %p45
    %p52 = scmp.eq.s32.totalorder %s10, 1
    %p53 = por %p51, %p52
    %p54 = scmp.ne.s32.totalorder %s46, %s49
    %p55 = scmp.eq.s32.totalorder %s10, 0
    %p56 = por %p54, %p55
    %p57 = scmp.ne.s32.totalorder %s46, %s49
    %p58 = scmp.eq.s32.totalorder %s15, 1
    %p59 = por %p57, %p58
    %p60 = scmp.ne.s32.totalorder %s49, %s50
    %p61 = scmp.eq.s32.totalorder %s15, 0
    %p62 = por %p60, %p61
    %p63 = scmp.ne.s32.totalorder %s49, %s50
    %p64 = scmp.eq.s32.totalorder %s16, 1
    %p65 = por %p63, %p64
    %p67 = scmp.ne.s32.totalorder %s50, %s66
    %p68 = scmp.eq.s32.totalorder %s16, 0
    %p69 = por %p67, %p68
    %s71 = sadd.s32 %s70, 1
    %p74 = scmp.eq.s32.totalorder %s10, 1
    %p75 = scmp.ne.s32.totalorder %s70, %s72
    %p76 = scmp.eq.s32.totalorder %s10, 0
    %p77 = por %p75, %p76
    %p78 = scmp.ne.s32.totalorder %s70, %s72
    %p79 = scmp.eq.s32.totalorder %s15, 1
    %p80 = por %p78, %p79
    %p81 = scmp.ne.s32.totalorder %s72, %s73
    %p82 = scmp.eq.s32.totalorder %s15, 0
    %p83 = por %p81, %p82
    %p84 = scmp.ne.s32.totalorder %s72, %s73
    %p85 = scmp.eq.s32.totalorder %s16, 1
    %p86 = por %p84, %p85
    %p88 = scmp.ne.s32.totalorder %s73, %s87
    %p89 = scmp.eq.s32.totalorder %s16, 0
    %p90 = por %p88, %p89
    %s92 = sadd.s32 %s91, 1
    %p95 = scmp.eq.s32.totalorder %s10, 1
    %p96 = scmp.ne.s32.totalorder %s91, %s93
    %p97 = scmp.eq.s32.totalorder %s10, 0
    %p98 = por %p96, %p97
    %p99 = scmp.ne.s32.totalorder %s91, %s93
    %p100 = scmp.eq.s32.totalorder %s15, 1
    %p101 = por %p99, %p100
    %p102 = scmp.ne.s32.totalorder %s93, %s94
    %p103 = scmp.eq.s32.totalorder %s15, 0
    %p104 = por %p102, %p103
    %p105 = scmp.ne.s32.totalorder %s93, %s94
    %p106 = scmp.eq.s32.totalorder %s16, 1
    %p107 = por %p105, %p106
    %p109 = scmp.ne.s32.totalorder %s94, %s108
    %p110 = scmp.eq.s32.totalorder %s16, 0
    %p111 = por %p109, %p110
    %s112 = ssub.s32 %s10, %s17
    %p113 = scmp.eq.s32.totalorder %s112, 0
    %s115 = sadd.s32 %s114, 1
    %s116 = scalar_select %p113, %s114, %s115
    %p119 = pneg %p113
    %p120 = scmp.eq.s32.totalorder %s10, 1
    %p121 = por %p119, %p120
    %p122 = scmp.ne.s32.totalorder %s114, %s117
    %p123 = scmp.eq.s32.totalorder %s10, 0
    %p124 = por %p122, %p123
    %p125 = scmp.ne.s32.totalorder %s114, %s117
    %p126 = scmp.eq.s32.totalorder %s15, 1
    %p127 = por %p125, %p126
    %p128 = scmp.ne.s32.totalorder %s117, %s118
    %p129 = scmp.eq.s32.totalorder %s15, 0
    %p130 = por %p128, %p129
    %p131 = scmp.ne.s32.totalorder %s117, %s118
    %p132 = scmp.eq.s32.totalorder %s16, 1
    %p133 = por %p131, %p132
    %p135 = scmp.ne.s32.totalorder %s118, %s134
    %p136 = scmp.eq.s32.totalorder %s16, 0
    %p137 = por %p135, %p136
    %p138 = scmp.le.s32.totalorder 1, %s10
    %p139 = scmp.lt.s32.totalorder %s10, 3
    %p140 = pnand %p138, %p139
    %p141 = pneg %p140
    // Predicated region
    $region9: #{_conv3_2d_forward.3} parent=5 // pred_check
      _
    $region10: #{_conv3_2d_forward.3} parent=5 // pred_check_branch
      %143 = sbr.rel (%p140) target = $region12
    $region11: #{_conv3_2d_forward.3} parent=5 // pred_region
      %s144 = ssub.s32 %s10, 1
      // Predicated region
      $region13: #{_conv3_2d_forward.3} parent=11 // pred_check
        %p145 = pneg %p83
      $region14: #{_conv3_2d_forward.3} parent=11 // pred_check_branch
        %147 = sbr.rel (%p145) target = $region16
      $region15: #{_conv3_2d_forward.3} parent=11 // pred_region
        _
      $region16: #{_conv3_2d_forward.3} parent=11 // pred_fallthru
        _
      // Predicated region
      $region17: #{_conv3_2d_forward.3} parent=11 // pred_check
        %p148 = pneg %p104
      $region18: #{_conv3_2d_forward.3} parent=11 // pred_check_branch
        %150 = sbr.rel (%p148) target = $region20
      $region19: #{_conv3_2d_forward.3} parent=11 // pred_region
        _
      $region20: #{_conv3_2d_forward.3} parent=11 // pred_fallthru
        _
    $region12: #{_conv3_2d_forward.3} parent=5 // pred_fallthru
      _
    %p151 = scmp.lt.s32.totalorder %s10, 2
    // Predicated region
    $region21: #{_conv3_2d_forward.3} parent=5 // pred_check
      %p152 = pneg %p151
    $region22: #{_conv3_2d_forward.3} parent=5 // pred_check_branch
      %154 = sbr.rel (%p152) target = $region24
    $region23: #{_conv3_2d_forward.3} parent=5 // pred_region
      // Predicated region
      $region25: #{_conv3_2d_forward.3} parent=23 // pred_check
        %p155 = pneg %p30
      $region26: #{_conv3_2d_forward.3} parent=23 // pred_check_branch
        %157 = sbr.rel (%p155) target = $region28
      $region27: #{_conv3_2d_forward.3} parent=23 // pred_region
        %p158 = scmp.lt.s32.totalorder %s10, 1
        %s159 = scalar_select %p158, %s10, 1
        %s160 = smul.addr %s159, 36
        %s161 = smul.addr %s160, 4
        %s162 = scalar_lea.vmem %s0, %s161
      $region28: #{_conv3_2d_forward.3} parent=23 // pred_fallthru
        _
      // Predicated region
      $region29: #{_conv3_2d_forward.3} parent=23 // pred_check
        %p163 = pneg %p56
      $region30: #{_conv3_2d_forward.3} parent=23 // pred_check_branch
        %165 = sbr.rel (%p163) target = $region32
      $region31: #{_conv3_2d_forward.3} parent=23 // pred_region
        %p166 = scmp.lt.s32.totalorder %s10, 1
        %s167 = scalar_select %p166, %s10, 1
        %s168 = smul.addr %s167, 36
        %s169 = smul.addr %s168, 4
        %s170 = scalar_lea.vmem %s1, %s169
      $region32: #{_conv3_2d_forward.3} parent=23 // pred_fallthru
        _
    $region24: #{_conv3_2d_forward.3} parent=5 // pred_fallthru
      _
    %p171 = scmp.le.s32.totalorder 1, %s10
    %p172 = scmp.lt.s32.totalorder %s10, 3
    %p173 = pnand %p171, %p172
    %p174 = pneg %p173
    // Predicated region
    $region33: #{_conv3_2d_forward.3} parent=5 // pred_check
      _
    $region34: #{_conv3_2d_forward.3} parent=5 // pred_check_branch
      %176 = sbr.rel (%p173) target = $region36
    $region35: #{_conv3_2d_forward.3} parent=5 // pred_region
      %s177 = ssub.s32 %s10, 1
      %p178 = scmp.lt.s32.totalorder %s15, 1
      %s179 = scalar_select %p178, %s15, 1
      %s180 = smul.addr %s179, 36
      %s181 = smul.addr %s180, 4
      %s182 = scalar_lea.vmem %s0, %s181
      %p183 = pneg %p36
      %p184 = pneg %p33
      %p185 = scmp.lt.s32.totalorder %s15, 1
      %s186 = scalar_select %p185, %s15, 1
      %s187 = smul.addr %s186, 36
      %s188 = smul.addr %s187, 4
      %s189 = scalar_lea.vmem %s1, %s188
      %p190 = pneg %p62
      %p191 = pneg %p59
      %p192 = pneg %p83
      %p193 = pneg %p80
      %p194 = pneg %p104
      %p195 = pneg %p101
      %p196 = pneg %p130
      %p197 = pneg %p127
      %p198 = scmp.lt.s32.totalorder %s15, 1
      %s199 = scalar_select %p198, %s15, 1
      %s200 = smul.addr %s199, 8
      %s201 = smul.addr %s200, 8
      %s202 = scalar_lea.vmem %s4, %s201
      %p203 = scmp.lt.s32.totalorder %s15, 1
      %s204 = scalar_select %p203, %s15, 1
      %s205 = smul.addr %s204, 36
      %s206 = smul.addr %s205, 4
      %s207 = scalar_lea.vmem %s0, %s206
      %p208 = scmp.lt.s32.totalorder %s15, 1
      %s209 = scalar_select %p208, %s15, 1
      %s210 = smul.addr %s209, 36
      %s211 = smul.addr %s210, 4
      %s212 = scalar_lea.vmem %s1, %s211
      %p213 = scmp.lt.s32.totalorder %s15, 1
      %s214 = scalar_select %p213, %s15, 1
      %s215 = smul.addr %s214, 8
      %s216 = smul.addr %s215, 8
      %s217 = scalar_lea.vmem %s4, %s216
      %v219 = vld [vmem:[%s207] sm:$0xf]
      %v220 = vld [vmem:[%s207 + $0x4] sm:$0x1]
      %v221 = vld [vmem:[%s207 + $0x8] sm:$0xf]
      %v222 = vld [vmem:[%s207 + $0xc] sm:$0x1]
      %v223 = vld [vmem:[%s207 + $0x10] sm:$0xf]
      %v224 = vld [vmem:[%s207 + $0x14] sm:$0x1]
      %v225 = vld [vmem:[%s207 + $0x18] sm:$0xf]
      %v226 = vld [vmem:[%s207 + $0x1c] sm:$0x1]
      %v227 = vld [vmem:[%s207 + $0x20] sm:$0xf]
      %v228 = vld [vmem:[%s207 + $0x24] sm:$0x1]
      %v229 = vld [vmem:[%s207 + $0x28] sm:$0xf]
      %v230 = vld [vmem:[%s207 + $0x2c] sm:$0x1]
      %v231 = vld [vmem:[%s207 + $0x30] sm:$0xf]
      %v232 = vld [vmem:[%s207 + $0x34] sm:$0x1]
      %v233 = vld [vmem:[%s207 + $0x38] sm:$0xf]
      %v234 = vld [vmem:[%s207 + $0x3c] sm:$0x1]
      %v235 = vld [vmem:[%s207 + $0x40] sm:$0xf]
      %v236 = vld [vmem:[%s207 + $0x44] sm:$0x1]
      %v237 = vld [vmem:[%s207 + $0x48] sm:$0xf]
      %v238 = vld [vmem:[%s207 + $0x4c] sm:$0x1]
      %v239 = vld [vmem:[%s207 + $0x50] sm:$0xf]
      %v240 = vld [vmem:[%s207 + $0x54] sm:$0x1]
      %v241 = vld [vmem:[%s207 + $0x58] sm:$0xf]
      %v242 = vld [vmem:[%s207 + $0x5c] sm:$0x1]
      %v243 = vld [vmem:[%s207 + $0x60] sm:$0xf]
      %v244 = vld [vmem:[%s207 + $0x64] sm:$0x1]
      %v245 = vld [vmem:[%s207 + $0x68] sm:$0xf]
      %v246 = vld [vmem:[%s207 + $0x6c] sm:$0x1]
      %v247 = vld [vmem:[%s207 + $0x70] sm:$0xf]
      %v248 = vld [vmem:[%s207 + $0x74] sm:$0x1]
      %v249 = vld [vmem:[%s207 + $0x78] sm:$0xf]
      %v250 = vld [vmem:[%s207 + $0x7c] sm:$0x1]
      %v251 = vld [vmem:[%s207 + $0x80] sm:$0xf]
      %v252 = vld [vmem:[%s207 + $0x84] sm:$0x1]
      %v253 = vld [vmem:[%s207 + $0x88] sm:$0xf]
      %v254 = vld [vmem:[%s207 + $0x8c] sm:$0x1]
      %v255 = vld [vmem:[%s212] sm:$0xf]
      %v256 = vld [vmem:[%s212 + $0x4] sm:$0x1]
      %v257 = vld [vmem:[%s212 + $0x8] sm:$0xf]
      %v258 = vld [vmem:[%s212 + $0xc] sm:$0x1]
      %v259 = vld [vmem:[%s212 + $0x10] sm:$0xf]
      %v260 = vld [vmem:[%s212 + $0x14] sm:$0x1]
      %v261 = vld [vmem:[%s212 + $0x18] sm:$0xf]
      %v262 = vld [vmem:[%s212 + $0x1c] sm:$0x1]
      %v263 = vld [vmem:[%s212 + $0x20] sm:$0xf]
      %v264 = vld [vmem:[%s212 + $0x24] sm:$0x1]
      %v265 = vld [vmem:[%s212 + $0x28] sm:$0xf]
      %v266 = vld [vmem:[%s212 + $0x2c] sm:$0x1]
      %v267 = vld [vmem:[%s212 + $0x30] sm:$0xf]
      %v268 = vld [vmem:[%s212 + $0x34] sm:$0x1]
      %v269 = vld [vmem:[%s212 + $0x38] sm:$0xf]
      %v270 = vld [vmem:[%s212 + $0x3c] sm:$0x1]
      %v271 = vld [vmem:[%s212 + $0x40] sm:$0xf]
      %v272 = vld [vmem:[%s212 + $0x44] sm:$0x1]
      %v273 = vld [vmem:[%s212 + $0x48] sm:$0xf]
      %v274 = vld [vmem:[%s212 + $0x4c] sm:$0x1]
      %v275 = vld [vmem:[%s212 + $0x50] sm:$0xf]
      %v276 = vld [vmem:[%s212 + $0x54] sm:$0x1]
      %v277 = vld [vmem:[%s212 + $0x58] sm:$0xf]
      %v278 = vld [vmem:[%s212 + $0x5c] sm:$0x1]
      %v279 = vld [vmem:[%s212 + $0x60] sm:$0xf]
      %v280 = vld [vmem:[%s212 + $0x64] sm:$0x1]
      %v281 = vld [vmem:[%s212 + $0x68] sm:$0xf]
      %v282 = vld [vmem:[%s212 + $0x6c] sm:$0x1]
      %v283 = vld [vmem:[%s212 + $0x70] sm:$0xf]
      %v284 = vld [vmem:[%s212 + $0x74] sm:$0x1]
      %v285 = vld [vmem:[%s212 + $0x78] sm:$0xf]
      %v286 = vld [vmem:[%s212 + $0x7c] sm:$0x1]
      %v287 = vld [vmem:[%s212 + $0x80] sm:$0xf]
      %v288 = vld [vmem:[%s212 + $0x84] sm:$0x1]
      %v289 = vld [vmem:[%s212 + $0x88] sm:$0xf]
      %v290 = vld [vmem:[%s212 + $0x8c] sm:$0x1]
      %vm291 = vsmask.f32 3328
      %vm292 = vsmask.f32 7440
      %vm293 = vmor %vm291, %vm292
      %v295 = vshrl.u32 %v219, 16
      %v297 = vrot.slane %v295, 4
      %v298 = vshll.u32 %v219, 16
      %v300 = vrot.slane %v298, 5
      %v301 = vor.u32 %v297, %v300
      %v302 = vrot.slane %v301, 4
      %v304 = vshll.u32 %v220, 16
      %v306 = vrot.slane %v304, 5
      %v307 = vsel %vm293, %v302, %v306
      %v309 = vshrl.u32 %v221, 16
      %v311 = vrot.slane %v309, 4
      %v312 = vshll.u32 %v221, 16
      %v314 = vrot.slane %v312, 5
      %v315 = vor.u32 %v311, %v314
      %v316 = vrot.slane %v315, 4
      %v318 = vshll.u32 %v222, 16
      %v320 = vrot.slane %v318, 5
      %v321 = vsel %vm293, %v316, %v320
      %v323 = vshrl.u32 %v223, 16
      %v325 = vrot.slane %v323, 4
      %v326 = vshll.u32 %v223, 16
      %v328 = vrot.slane %v326, 5
      %v329 = vor.u32 %v325, %v328
      %v330 = vrot.slane %v329, 4
      %v332 = vshll.u32 %v224, 16
      %v334 = vrot.slane %v332, 5
      %v335 = vsel %vm293, %v330, %v334
      %v337 = vshrl.u32 %v225, 16
      %v339 = vrot.slane %v337, 4
      %v340 = vshll.u32 %v225, 16
      %v342 = vrot.slane %v340, 5
      %v343 = vor.u32 %v339, %v342
      %v344 = vrot.slane %v343, 4
      %v346 = vshll.u32 %v226, 16
      %v348 = vrot.slane %v346, 5
      %v349 = vsel %vm293, %v344, %v348
      %v351 = vshrl.u32 %v227, 16
      %v353 = vrot.slane %v351, 4
      %v354 = vshll.u32 %v227, 16
      %v356 = vrot.slane %v354, 5
      %v357 = vor.u32 %v353, %v356
      %v358 = vrot.slane %v357, 4
      %v360 = vshll.u32 %v228, 16
      %v362 = vrot.slane %v360, 5
      %v363 = vsel %vm293, %v358, %v362
      %v365 = vshrl.u32 %v229, 16
      %v367 = vrot.slane %v365, 4
      %v368 = vshll.u32 %v229, 16
      %v370 = vrot.slane %v368, 5
      %v371 = vor.u32 %v367, %v370
      %v372 = vrot.slane %v371, 4
      %v374 = vshll.u32 %v230, 16
      %v376 = vrot.slane %v374, 5
      %v377 = vsel %vm293, %v372, %v376
      %v379 = vshrl.u32 %v231, 16
      %v381 = vrot.slane %v379, 4
      %v382 = vshll.u32 %v231, 16
      %v384 = vrot.slane %v382, 5
      %v385 = vor.u32 %v381, %v384
      %v386 = vrot.slane %v385, 4
      %v388 = vshll.u32 %v232, 16
      %v390 = vrot.slane %v388, 5
      %v391 = vsel %vm293, %v386, %v390
      %v393 = vshrl.u32 %v233, 16
      %v395 = vrot.slane %v393, 4
      %v396 = vshll.u32 %v233, 16
      %v398 = vrot.slane %v396, 5
      %v399 = vor.u32 %v395, %v398
      %v400 = vrot.slane %v399, 4
      %v402 = vshll.u32 %v234, 16
      %v404 = vrot.slane %v402, 5
      %v405 = vsel %vm293, %v400, %v404
      %v407 = vshrl.u32 %v235, 16
      %v409 = vrot.slane %v407, 4
      %v410 = vshll.u32 %v235, 16
      %v412 = vrot.slane %v410, 5
      %v413 = vor.u32 %v409, %v412
      %v414 = vrot.slane %v413, 4
      %v416 = vshll.u32 %v236, 16
      %v418 = vrot.slane %v416, 5
      %v419 = vsel %vm293, %v414, %v418
      %v421 = vshrl.u32 %v237, 16
      %v423 = vrot.slane %v421, 4
      %v424 = vshll.u32 %v237, 16
      %v426 = vrot.slane %v424, 5
      %v427 = vor.u32 %v423, %v426
      %v428 = vrot.slane %v427, 4
      %v430 = vshll.u32 %v238, 16
      %v432 = vrot.slane %v430, 5
      %v433 = vsel %vm293, %v428, %v432
      %v435 = vshrl.u32 %v239, 16
      %v437 = vrot.slane %v435, 4
      %v438 = vshll.u32 %v239, 16
      %v440 = vrot.slane %v438, 5
      %v441 = vor.u32 %v437, %v440
      %v442 = vrot.slane %v441, 4
      %v444 = vshll.u32 %v240, 16
      %v446 = vrot.slane %v444, 5
      %v447 = vsel %vm293, %v442, %v446
      %v449 = vshrl.u32 %v241, 16
      %v451 = vrot.slane %v449, 4
      %v452 = vshll.u32 %v241, 16
      %v454 = vrot.slane %v452, 5
      %v455 = vor.u32 %v451, %v454
      %v456 = vrot.slane %v455, 4
      %v458 = vshll.u32 %v242, 16
      %v460 = vrot.slane %v458, 5
      %v461 = vsel %vm293, %v456, %v460
      %v463 = vshrl.u32 %v243, 16
      %v465 = vrot.slane %v463, 4
      %v466 = vshll.u32 %v243, 16
      %v468 = vrot.slane %v466, 5
      %v469 = vor.u32 %v465, %v468
      %v470 = vrot.slane %v469, 4
      %v472 = vshll.u32 %v244, 16
      %v474 = vrot.slane %v472, 5
      %v475 = vsel %vm293, %v470, %v474
      %v477 = vshrl.u32 %v245, 16
      %v479 = vrot.slane %v477, 4
      %v480 = vshll.u32 %v245, 16
      %v482 = vrot.slane %v480, 5
      %v483 = vor.u32 %v479, %v482
      %v484 = vrot.slane %v483, 4
      %v486 = vshll.u32 %v246, 16
      %v488 = vrot.slane %v486, 5
      %v489 = vsel %vm293, %v484, %v488
      %v491 = vshrl.u32 %v247, 16
      %v493 = vrot.slane %v491, 4
      %v494 = vshll.u32 %v247, 16
      %v496 = vrot.slane %v494, 5
      %v497 = vor.u32 %v493, %v496
      %v498 = vrot.slane %v497, 4
      %v500 = vshll.u32 %v248, 16
      %v502 = vrot.slane %v500, 5
      %v503 = vsel %vm293, %v498, %v502
      %v505 = vshrl.u32 %v249, 16
      %v507 = vrot.slane %v505, 4
      %v508 = vshll.u32 %v249, 16
      %v510 = vrot.slane %v508, 5
      %v511 = vor.u32 %v507, %v510
      %v512 = vrot.slane %v511, 4
      %v514 = vshll.u32 %v250, 16
      %v516 = vrot.slane %v514, 5
      %v517 = vsel %vm293, %v512, %v516
      %v519 = vshrl.u32 %v255, 16
      %v521 = vrot.slane %v519, 4
      %v522 = vshll.u32 %v255, 16
      %v524 = vrot.slane %v522, 5
      %v525 = vor.u32 %v521, %v524
      %v526 = vrot.slane %v525, 4
      %v528 = vshll.u32 %v256, 16
      %v530 = vrot.slane %v528, 5
      %v531 = vsel %vm293, %v526, %v530
      %v533 = vshrl.u32 %v257, 16
      %v535 = vrot.slane %v533, 4
      %v536 = vshll.u32 %v257, 16
      %v538 = vrot.slane %v536, 5
      %v539 = vor.u32 %v535, %v538
      %v540 = vrot.slane %v539, 4
      %v542 = vshll.u32 %v258, 16
      %v544 = vrot.slane %v542, 5
      %v545 = vsel %vm293, %v540, %v544
      %v547 = vshrl.u32 %v259, 16
      %v549 = vrot.slane %v547, 4
      %v550 = vshll.u32 %v259, 16
      %v552 = vrot.slane %v550, 5
      %v553 = vor.u32 %v549, %v552
      %v554 = vrot.slane %v553, 4
      %v556 = vshll.u32 %v260, 16
      %v558 = vrot.slane %v556, 5
      %v559 = vsel %vm293, %v554, %v558
      %v561 = vshrl.u32 %v261, 16
      %v563 = vrot.slane %v561, 4
      %v564 = vshll.u32 %v261, 16
      %v566 = vrot.slane %v564, 5
      %v567 = vor.u32 %v563, %v566
      %v568 = vrot.slane %v567, 4
      %v570 = vshll.u32 %v262, 16
      %v572 = vrot.slane %v570, 5
      %v573 = vsel %vm293, %v568, %v572
      %v575 = vshrl.u32 %v263, 16
      %v577 = vrot.slane %v575, 4
      %v578 = vshll.u32 %v263, 16
      %v580 = vrot.slane %v578, 5
      %v581 = vor.u32 %v577, %v580
      %v582 = vrot.slane %v581, 4
      %v584 = vshll.u32 %v264, 16
      %v586 = vrot.slane %v584, 5
      %v587 = vsel %vm293, %v582, %v586
      %v589 = vshrl.u32 %v265, 16
      %v591 = vrot.slane %v589, 4
      %v592 = vshll.u32 %v265, 16
      %v594 = vrot.slane %v592, 5
      %v595 = vor.u32 %v591, %v594
      %v596 = vrot.slane %v595, 4
      %v598 = vshll.u32 %v266, 16
      %v600 = vrot.slane %v598, 5
      %v601 = vsel %vm293, %v596, %v600
      %v603 = vshrl.u32 %v267, 16
      %v605 = vrot.slane %v603, 4
      %v606 = vshll.u32 %v267, 16
      %v608 = vrot.slane %v606, 5
      %v609 = vor.u32 %v605, %v608
      %v610 = vrot.slane %v609, 4
      %v612 = vshll.u32 %v268, 16
      %v614 = vrot.slane %v612, 5
      %v615 = vsel %vm293, %v610, %v614
      %v617 = vshrl.u32 %v269, 16
      %v619 = vrot.slane %v617, 4
      %v620 = vshll.u32 %v269, 16
      %v622 = vrot.slane %v620, 5
      %v623 = vor.u32 %v619, %v622
      %v624 = vrot.slane %v623, 4
      %v626 = vshll.u32 %v270, 16
      %v628 = vrot.slane %v626, 5
      %v629 = vsel %vm293, %v624, %v628
      %v631 = vshrl.u32 %v271, 16
      %v633 = vrot.slane %v631, 4
      %v634 = vshll.u32 %v271, 16
      %v636 = vrot.slane %v634, 5
      %v637 = vor.u32 %v633, %v636
      %v638 = vrot.slane %v637, 4
      %v640 = vshll.u32 %v272, 16
      %v642 = vrot.slane %v640, 5
      %v643 = vsel %vm293, %v638, %v642
      %v645 = vshrl.u32 %v273, 16
      %v647 = vrot.slane %v645, 4
      %v648 = vshll.u32 %v273, 16
      %v650 = vrot.slane %v648, 5
      %v651 = vor.u32 %v647, %v650
      %v652 = vrot.slane %v651, 4
      %v654 = vshll.u32 %v274, 16
      %v656 = vrot.slane %v654, 5
      %v657 = vsel %vm293, %v652, %v656
      %v659 = vshrl.u32 %v275, 16
      %v661 = vrot.slane %v659, 4
      %v662 = vshll.u32 %v275, 16
      %v664 = vrot.slane %v662, 5
      %v665 = vor.u32 %v661, %v664
      %v666 = vrot.slane %v665, 4
      %v668 = vshll.u32 %v276, 16
      %v670 = vrot.slane %v668, 5
      %v671 = vsel %vm293, %v666, %v670
      %v673 = vshrl.u32 %v277, 16
      %v675 = vrot.slane %v673, 4
      %v676 = vshll.u32 %v277, 16
      %v678 = vrot.slane %v676, 5
      %v679 = vor.u32 %v675, %v678
      %v680 = vrot.slane %v679, 4
      %v682 = vshll.u32 %v278, 16
      %v684 = vrot.slane %v682, 5
      %v685 = vsel %vm293, %v680, %v684
      %v687 = vshrl.u32 %v279, 16
      %v689 = vrot.slane %v687, 4
      %v690 = vshll.u32 %v279, 16
      %v692 = vrot.slane %v690, 5
      %v693 = vor.u32 %v689, %v692
      %v694 = vrot.slane %v693, 4
      %v696 = vshll.u32 %v280, 16
      %v698 = vrot.slane %v696, 5
      %v699 = vsel %vm293, %v694, %v698
      %v701 = vshrl.u32 %v281, 16
      %v703 = vrot.slane %v701, 4
      %v704 = vshll.u32 %v281, 16
      %v706 = vrot.slane %v704, 5
      %v707 = vor.u32 %v703, %v706
      %v708 = vrot.slane %v707, 4
      %v710 = vshll.u32 %v282, 16
      %v712 = vrot.slane %v710, 5
      %v713 = vsel %vm293, %v708, %v712
      %v715 = vshrl.u32 %v283, 16
      %v717 = vrot.slane %v715, 4
      %v718 = vshll.u32 %v283, 16
      %v720 = vrot.slane %v718, 5
      %v721 = vor.u32 %v717, %v720
      %v722 = vrot.slane %v721, 4
      %v724 = vshll.u32 %v284, 16
      %v726 = vrot.slane %v724, 5
      %v727 = vsel %vm293, %v722, %v726
      %v729 = vshrl.u32 %v285, 16
      %v731 = vrot.slane %v729, 4
      %v732 = vshll.u32 %v285, 16
      %v734 = vrot.slane %v732, 5
      %v735 = vor.u32 %v731, %v734
      %v736 = vrot.slane %v735, 4
      %v738 = vshll.u32 %v286, 16
      %v740 = vrot.slane %v738, 5
      %v741 = vsel %vm293, %v736, %v740
      %v742 = vld [vmem:[%s2] sm:$0x3]
      %s743 = scalar_lea.vmem %s2, 2
      %v744 = vld [vmem:[%s743] sm:$0x3]
      %v761 = vunpack.c.l.b16 %v255
      %v762 = vunpack.c.l.b16 %v257
      %v763 = vunpack.c.l.b16 %v259
      %v764 = vunpack.c.l.b16 %v261
      %v765 = vunpack.c.l.b16 %v263
      %v766 = vunpack.c.l.b16 %v265
      %v767 = vunpack.c.l.b16 %v267
      %v768 = vunpack.c.l.b16 %v269
      %v769 = vunpack.c.l.b16 %v271
      %v770 = vunpack.c.l.b16 %v273
      %v771 = vunpack.c.l.b16 %v275
      %v772 = vunpack.c.l.b16 %v277
      %v773 = vunpack.c.l.b16 %v279
      %v774 = vunpack.c.l.b16 %v281
      %v775 = vunpack.c.l.b16 %v283
      %v776 = vunpack.c.l.b16 %v285
      %v777 = vunpack.c.l.b16 %v307
      %v778 = vunpack.c.l.b16 %v321
      %v779 = vunpack.c.l.b16 %v335
      %v780 = vunpack.c.l.b16 %v349
      %v781 = vunpack.c.l.b16 %v363
      %v782 = vunpack.c.l.b16 %v377
      %v783 = vunpack.c.l.b16 %v391
      %v784 = vunpack.c.l.b16 %v405
      %v785 = vunpack.c.l.b16 %v419
      %v786 = vunpack.c.l.b16 %v433
      %v787 = vunpack.c.l.b16 %v447
      %v788 = vunpack.c.l.b16 %v461
      %v789 = vunpack.c.l.b16 %v475
      %v790 = vunpack.c.l.b16 %v489
      %v791 = vunpack.c.l.b16 %v503
      %v792 = vunpack.c.l.b16 %v517
      %v793 = vpack.c.b16 %v762, %v761
      %v794 = vpack.c.b16 %v764, %v763
      %v795 = vpack.c.b16 %v766, %v765
      %v796 = vpack.c.b16 %v768, %v767
      %v797 = vpack.c.b16 %v770, %v769
      %v798 = vpack.c.b16 %v772, %v771
      %v799 = vpack.c.b16 %v774, %v773
      %v800 = vpack.c.b16 %v776, %v775
      %v801 = vpack.c.b16 %v778, %v777
      %v802 = vpack.c.b16 %v780, %v779
      %v803 = vpack.c.b16 %v782, %v781
      %v804 = vpack.c.b16 %v784, %v783
      %v805 = vpack.c.b16 %v786, %v785
      %v806 = vpack.c.b16 %v788, %v787
      %v807 = vpack.c.b16 %v790, %v789
      %v808 = vpack.c.b16 %v792, %v791
      %vm809 = vcmask 31744
      %v811 = vsel %vm809, %v793, 0
      %v814 = vsel %vm809, %v794, 0
      %v817 = vsel %vm809, %v795, 0
      %v820 = vsel %vm809, %v796, 0
      %v823 = vsel %vm809, %v797, 0
      %v826 = vsel %vm809, %v798, 0
      %v829 = vsel %vm809, %v799, 0
      %v832 = vsel %vm809, %v800, 0
      %v835 = vsel %vm809, %v801, 0
      %v838 = vsel %vm809, %v802, 0
      %v841 = vsel %vm809, %v803, 0
      %v844 = vsel %vm809, %v804, 0
      %v847 = vsel %vm809, %v805, 0
      %v850 = vsel %vm809, %v806, 0
      %v853 = vsel %vm809, %v807, 0
      %v856 = vsel %vm809, %v808, 0
      %vm858 = vcmask 1041408
      %v860 = vsel %vm858, %v744, 0
      %862 = vmatprep.subr.bf16.mxu0 0
      %863 = vmatpush1.bf16.msra.mxu0 %v860
      %864 = vmatprep.subr.bf16.mxu0 0
      %865 = vmatpush1.bf16.msra.mxu0 0
      %866 = vmatprep.subr.bf16.mxu0 0
      %867 = vmatpush1.bf16.msra.mxu0 0
      %868 = vmatprep.subr.bf16.mxu0 0
      %869 = vmatpush1.bf16.msra.mxu0 0
      %870 = vmatprep.subr.bf16.mxu0 0
      %871 = vmatpush1.bf16.msra.mxu0 0
      %872 = vmatprep.subr.bf16.mxu0 0
      %873 = vmatpush1.bf16.msra.mxu0 0
      %874 = vmatprep.subr.bf16.mxu0 0
      %875 = vmatpush1.bf16.msra.mxu0 0
      %876 = vmatprep.subr.bf16.mxu0 0
      %877 = vmatpush1.bf16.msra.mxu0 0
      %878 = vmatprep.subr.bf16.mxu0 0
      %879 = vmatpush1.bf16.msra.mxu0 0
      %880 = vmatprep.subr.bf16.mxu0 0
      %881 = vmatpush1.bf16.msra.mxu0 0
      %882 = vmatprep.subr.bf16.mxu0 0
      %883 = vmatpush1.bf16.msra.mxu0 0
      %884 = vmatprep.subr.bf16.mxu0 0
      %885 = vmatpush1.bf16.msra.mxu0 0
      %886 = vmatprep.subr.bf16.mxu0 0
      %887 = vmatpush1.bf16.msra.mxu0 0
      %888 = vmatprep.subr.bf16.mxu0 0
      %889 = vmatpush1.bf16.msra.mxu0 0
      %890 = vmatprep.subr.bf16.mxu0 0
      %891 = vmatpush1.bf16.msra.mxu0 0
      %892 = vmatprep.subr.bf16.mxu0 0
      %893 = vmatpush1.bf16.msra.mxu0 0
      %894 = vmatprep.mubr.bf16.mxu0 0
      %895 = vmatmul.mubr.bf16.gmra.mrb[0].mxu0 %v811
      %v896 = vpop.f32.mrb[0].mxu0
      %v897 = vadd.f32 0.0, %v896
      %v898 = vpop.f32.mrb[0].mxu0
      %v899 = vpop.f32.mrb[0].mxu0
      %v900 = vadd.f32 0.0, %v899
      %v901 = vpop.f32.mrb[0].mxu0
      %902 = vmatprep.mubr.bf16.mxu0 0
      %903 = vmatmul.mubr.bf16.gmra.mrb[0].mxu0 %v814
      %v904 = vpop.f32.mrb[0].mxu0
      %v905 = vadd.f32 0.0, %v904
      %v906 = vpop.f32.mrb[0].mxu0
      %v907 = vpop.f32.mrb[0].mxu0
      %v908 = vadd.f32 0.0, %v907
      %v909 = vpop.f32.mrb[0].mxu0
      %910 = vmatprep.mubr.bf16.mxu0 0
      %911 = vmatmul.mubr.bf16.gmra.mrb[0].mxu0 %v817
      %v912 = vpop.f32.mrb[0].mxu0
      %v913 = vadd.f32 0.0, %v912
      %v914 = vpop.f32.mrb[0].mxu0
      %v915 = vpop.f32.mrb[0].mxu0
      %v916 = vadd.f32 0.0, %v915
      %v917 = vpop.f32.mrb[0].mxu0
      %918 = vmatprep.mubr.bf16.mxu0 0
      %919 = vmatmul.mubr.bf16.gmra.mrb[0].mxu0 %v820
      %v920 = vpop.f32.mrb[0].mxu0
      %v921 = vadd.f32 0.0, %v920
      %v922 = vpop.f32.mrb[0].mxu0
      %v923 = vpop.f32.mrb[0].mxu0
      %v924 = vadd.f32 0.0, %v923
      %v925 = vpop.f32.mrb[0].mxu0
      %926 = vmatprep.mubr.bf16.mxu0 0
      %927 = vmatmul.mubr.bf16.gmra.mrb[0].mxu0 %v823
      %v928 = vpop.f32.mrb[0].mxu0
      %v929 = vadd.f32 0.0, %v928
      %v930 = vpop.f32.mrb[0].mxu0
      %v931 = vpop.f32.mrb[0].mxu0
      %v932 = vadd.f32 0.0, %v931
      %v933 = vpop.f32.mrb[0].mxu0
      %934 = vmatprep.mubr.bf16.mxu0 0
      %935 = vmatmul.mubr.bf16.gmra.mrb[0].mxu0 %v826
      %v936 = vpop.f32.mrb[0].mxu0
      %v937 = vadd.f32 0.0, %v936
      %v938 = vpop.f32.mrb[0].mxu0
      %v939 = vpop.f32.mrb[0].mxu0
      %v940 = vadd.f32 0.0, %v939
      %v941 = vpop.f32.mrb[0].mxu0
      %942 = vmatprep.mubr.bf16.mxu0 0
      %943 = vmatmul.mubr.bf16.gmra.mrb[0].mxu0 %v829
      %v944 = vpop.f32.mrb[0].mxu0
      %v945 = vadd.f32 0.0, %v944
      %v946 = vpop.f32.mrb[0].mxu0
      %v947 = vpop.f32.mrb[0].mxu0
      %v948 = vadd.f32 0.0, %v947
      %v949 = vpop.f32.mrb[0].mxu0
      %950 = vmatprep.mubr.bf16.mxu0 0
      %951 = vmatmul.mubr.bf16.gmra.mrb[0].mxu0 %v832
      %v952 = vpop.f32.mrb[0].mxu0
      %v953 = vadd.f32 0.0, %v952
      %v954 = vpop.f32.mrb[0].mxu0
      %v955 = vpop.f32.mrb[0].mxu0
      %v956 = vadd.f32 0.0, %v955
      %v957 = vpop.f32.mrb[0].mxu0
      %958 = vmatprep.mubr.bf16.mxu0 0
      %959 = vmatmul.mubr.bf16.gmra.mrb[0].mxu0 %v835
      %v960 = vpop.f32.mrb[0].mxu0
      %v961 = vadd.f32 0.0, %v960
      %v962 = vpop.f32.mrb[0].mxu0
      %v963 = vpop.f32.mrb[0].mxu0
      %v964 = vadd.f32 0.0, %v963
      %v965 = vpop.f32.mrb[0].mxu0
      %966 = vmatprep.mubr.bf16.mxu0 0
      %967 = vmatmul.mubr.bf16.gmra.mrb[0].mxu0 %v838
      %v968 = vpop.f32.mrb[0].mxu0
      %v969 = vadd.f32 0.0, %v968
      %v970 = vpop.f32.mrb[0].mxu0
      %v971 = vpop.f32.mrb[0].mxu0
      %v972 = vadd.f32 0.0, %v971
      %v973 = vpop.f32.mrb[0].mxu0
      %974 = vmatprep.mubr.bf16.mxu0 0
      %975 = vmatmul.mubr.bf16.gmra.mrb[0].mxu0 %v841
      %v976 = vpop.f32.mrb[0].mxu0
      %v977 = vadd.f32 0.0, %v976
      %v978 = vpop.f32.mrb[0].mxu0
      %v979 = vpop.f32.mrb[0].mxu0
      %v980 = vadd.f32 0.0, %v979
      %v981 = vpop.f32.mrb[0].mxu0
      %982 = vmatprep.mubr.bf16.mxu0 0
      %983 = vmatmul.mubr.bf16.gmra.mrb[0].mxu0 %v844
      %v984 = vpop.f32.mrb[0].mxu0
      %v985 = vadd.f32 0.0, %v984
      %v986 = vpop.f32.mrb[0].mxu0
      %v987 = vpop.f32.mrb[0].mxu0
      %v988 = vadd.f32 0.0, %v987
      %v989 = vpop.f32.mrb[0].mxu0
      %990 = vmatprep.mubr.bf16.mxu0 0
      %991 = vmatmul.mubr.bf16.gmra.mrb[0].mxu0 %v847
      %v992 = vpop.f32.mrb[0].mxu0
      %v993 = vadd.f32 0.0, %v992
      %v994 = vpop.f32.mrb[0].mxu0
      %v995 = vpop.f32.mrb[0].mxu0
      %v996 = vadd.f32 0.0, %v995
      %v997 = vpop.f32.mrb[0].mxu0
      %998 = vmatprep.mubr.bf16.mxu0 0
      %999 = vmatmul.mubr.bf16.gmra.mrb[0].mxu0 %v850
      %v1000 = vpop.f32.mrb[0].mxu0
      %v1001 = vadd.f32 0.0, %v1000
      %v1002 = vpop.f32.mrb[0].mxu0
      %v1003 = vpop.f32.mrb[0].mxu0
      %v1004 = vadd.f32 0.0, %v1003
      %v1005 = vpop.f32.mrb[0].mxu0
      %1006 = vmatprep.mubr.bf16.mxu0 0
      %1007 = vmatmul.mubr.bf16.gmra.mrb[0].mxu0 %v853
      %v1008 = vpop.f32.mrb[0].mxu0
      %v1009 = vadd.f32 0.0, %v1008
      %v1010 = vpop.f32.mrb[0].mxu0
      %v1011 = vpop.f32.mrb[0].mxu0
      %v1012 = vadd.f32 0.0, %v1011
      %v1013 = vpop.f32.mrb[0].mxu0
      %1014 = vmatprep.mubr.bf16.mxu0 0
      %1015 = vmatmul.mubr.bf16.gmra.mrb[0].mxu0 %v856
      %v1016 = vpop.f32.mrb[0].mxu0
      %v1017 = vadd.f32 0.0, %v1016
      %v1018 = vpop.f32.mrb[0].mxu0
      %v1019 = vpop.f32.mrb[0].mxu0
      %v1020 = vadd.f32 0.0, %v1019
      %v1021 = vpop.f32.mrb[0].mxu0
      %1022 = vdwg.mxu0
      %v1039 = vunpack.c.l.b16 %v219
      %v1040 = vunpack.c.l.b16 %v221
      %v1041 = vunpack.c.l.b16 %v223
      %v1042 = vunpack.c.l.b16 %v225
      %v1043 = vunpack.c.l.b16 %v227
      %v1044 = vunpack.c.l.b16 %v229
      %v1045 = vunpack.c.l.b16 %v231
      %v1046 = vunpack.c.l.b16 %v233
      %v1047 = vunpack.c.l.b16 %v235
      %v1048 = vunpack.c.l.b16 %v237
      %v1049 = vunpack.c.l.b16 %v239
      %v1050 = vunpack.c.l.b16 %v241
      %v1051 = vunpack.c.l.b16 %v243
      %v1052 = vunpack.c.l.b16 %v245
      %v1053 = vunpack.c.l.b16 %v247
      %v1054 = vunpack.c.l.b16 %v249
      %v1055 = vpack.c.b16 %v1040, %v1039
      %v1056 = vpack.c.b16 %v1042, %v1041
      %v1057 = vpack.c.b16 %v1044, %v1043
      %v1058 = vpack.c.b16 %v1046, %v1045
      %v1059 = vpack.c.b16 %v1048, %v1047
      %v1060 = vpack.c.b16 %v1050, %v1049
      %v1061 = vpack.c.b16 %v1052, %v1051
      %v1062 = vpack.c.b16 %v1054, %v1053
      %v1064 = vsel %vm809, %v1055, 0
      %v1067 = vsel %vm809, %v1056, 0
      %v1070 = vsel %vm809, %v1057, 0
      %v1073 = vsel %vm809, %v1058, 0
      %v1076 = vsel %vm809, %v1059, 0
      %v1079 = vsel %vm809, %v1060, 0
      %v1082 = vsel %vm809, %v1061, 0
      %v1085 = vsel %vm809, %v1062, 0
      %v1088 = vsel %vm858, %v742, 0
      %1090 = vmatprep.subr.bf16.mxu0 0
      %1091 = vmatpush1.bf16.msra.mxu0 %v1088
      %1092 = vmatprep.subr.bf16.mxu0 0
      %1093 = vmatpush1.bf16.msra.mxu0 0
      %1094 = vmatprep.subr.bf16.mxu0 0
      %1095 = vmatpush1.bf16.msra.mxu0 0
      %1096 = vmatprep.subr.bf16.mxu0 0
      %1097 = vmatpush1.bf16.msra.mxu0 0
      %1098 = vmatprep.subr.bf16.mxu0 0
      %1099 = vmatpush1.bf16.msra.mxu0 0
      %1100 = vmatprep.subr.bf16.mxu0 0
      %1101 = vmatpush1.bf16.msra.mxu0 0
      %1102 = vmatprep.subr.bf16.mxu0 0
      %1103 = vmatpush1.bf16.msra.mxu0 0
      %1104 = vmatprep.subr.bf16.mxu0 0
      %1105 = vmatpush1.bf16.msra.mxu0 0
      %1106 = vmatprep.subr.bf16.mxu0 0
      %1107 = vmatpush1.bf16.msra.mxu0 0
      %1108 = vmatprep.subr.bf16.mxu0 0
      %1109 = vmatpush1.bf16.msra.mxu0 0
      %1110 = vmatprep.subr.bf16.mxu0 0
      %1111 = vmatpush1.bf16.msra.mxu0 0
      %1112 = vmatprep.subr.bf16.mxu0 0
      %1113 = vmatpush1.bf16.msra.mxu0 0
      %1114 = vmatprep.subr.bf16.mxu0 0
      %1115 = vmatpush1.bf16.msra.mxu0 0
      %1116 = vmatprep.subr.bf16.mxu0 0
      %1117 = vmatpush1.bf16.msra.mxu0 0
      %1118 = vmatprep.subr.bf16.mxu0 0
      %1119 = vmatpush1.bf16.msra.mxu0 0
      %1120 = vmatprep.subr.bf16.mxu0 0
      %1121 = vmatpush1.bf16.msra.mxu0 0
      %1122 = vmatprep.mubr.bf16.mxu0 0
      %1123 = vmatmul.mubr.bf16.gmra.mrb[0].mxu0 %v1064
      %v1124 = vpop.f32.mrb[0].mxu0
      %v1125 = vadd.f32 %v897, %v1124
      %v1126 = vpop.f32.mrb[0].mxu0
      %v1127 = vpop.f32.mrb[0].mxu0
      %v1128 = vadd.f32 %v900, %v1127
      %v1129 = vpop.f32.mrb[0].mxu0
      %1130 = vmatprep.mubr.bf16.mxu0 0
      %1131 = vmatmul.mubr.bf16.gmra.mrb[0].mxu0 %v1067
      %v1132 = vpop.f32.mrb[0].mxu0
      %v1133 = vadd.f32 %v905, %v1132
      %v1134 = vpop.f32.mrb[0].mxu0
      %v1135 = vpop.f32.mrb[0].mxu0
      %v1136 = vadd.f32 %v908, %v1135
      %v1137 = vpop.f32.mrb[0].mxu0
      %1138 = vmatprep.mubr.bf16.mxu0 0
      %1139 = vmatmul.mubr.bf16.gmra.mrb[0].mxu0 %v1070
      %v1140 = vpop.f32.mrb[0].mxu0
      %v1141 = vadd.f32 %v913, %v1140
      %v1142 = vpop.f32.mrb[0].mxu0
      %v1143 = vpop.f32.mrb[0].mxu0
      %v1144 = vadd.f32 %v916, %v1143
      %v1145 = vpop.f32.mrb[0].mxu0
      %1146 = vmatprep.mubr.bf16.mxu0 0
      %1147 = vmatmul.mubr.bf16.gmra.mrb[0].mxu0 %v1073
      %v1148 = vpop.f32.mrb[0].mxu0
      %v1149 = vadd.f32 %v921, %v1148
      %v1150 = vpop.f32.mrb[0].mxu0
      %v1151 = vpop.f32.mrb[0].mxu0
      %v1152 = vadd.f32 %v924, %v1151
      %v1153 = vpop.f32.mrb[0].mxu0
      %1154 = vmatprep.mubr.bf16.mxu0 0
      %1155 = vmatmul.mubr.bf16.gmra.mrb[0].mxu0 %v1076
      %v1156 = vpop.f32.mrb[0].mxu0
      %v1157 = vadd.f32 %v929, %v1156
      %v1158 = vpop.f32.mrb[0].mxu0
      %v1159 = vpop.f32.mrb[0].mxu0
      %v1160 = vadd.f32 %v932, %v1159
      %v1161 = vpop.f32.mrb[0].mxu0
      %1162 = vmatprep.mubr.bf16.mxu0 0
      %1163 = vmatmul.mubr.bf16.gmra.mrb[0].mxu0 %v1079
      %v1164 = vpop.f32.mrb[0].mxu0
      %v1165 = vadd.f32 %v937, %v1164
      %v1166 = vpop.f32.mrb[0].mxu0
      %v1167 = vpop.f32.mrb[0].mxu0
      %v1168 = vadd.f32 %v940, %v1167
      %v1169 = vpop.f32.mrb[0].mxu0
      %1170 = vmatprep.mubr.bf16.mxu0 0
      %1171 = vmatmul.mubr.bf16.gmra.mrb[0].mxu0 %v1082
      %v1172 = vpop.f32.mrb[0].mxu0
      %v1173 = vadd.f32 %v945, %v1172
      %v1174 = vpop.f32.mrb[0].mxu0
      %v1175 = vpop.f32.mrb[0].mxu0
      %v1176 = vadd.f32 %v948, %v1175
      %v1177 = vpop.f32.mrb[0].mxu0
      %1178 = vmatprep.mubr.bf16.mxu0 0
      %1179 = vmatmul.mubr.bf16.gmra.mrb[0].mxu0 %v1085
      %v1180 = vpop.f32.mrb[0].mxu0
      %v1181 = vadd.f32 %v953, %v1180
      %v1182 = vpop.f32.mrb[0].mxu0
      %v1183 = vpop.f32.mrb[0].mxu0
      %v1184 = vadd.f32 %v956, %v1183
      %v1185 = vpop.f32.mrb[0].mxu0
      %1186 = vmatprep.mubr.bf16.mxu0 0
      %1187 = vmatmul.mubr.bf16.gmra.mrb[0].mxu0 %v811
      %v1188 = vpop.f32.mrb[0].mxu0
      %v1189 = vadd.f32 %v961, %v1188
      %v1190 = vpop.f32.mrb[0].mxu0
      %v1191 = vpop.f32.mrb[0].mxu0
      %v1192 = vadd.f32 %v964, %v1191
      %v1193 = vpop.f32.mrb[0].mxu0
      %1194 = vmatprep.mubr.bf16.mxu0 0
      %1195 = vmatmul.mubr.bf16.gmra.mrb[0].mxu0 %v814
      %v1196 = vpop.f32.mrb[0].mxu0
      %v1197 = vadd.f32 %v969, %v1196
      %v1198 = vpop.f32.mrb[0].mxu0
      %v1199 = vpop.f32.mrb[0].mxu0
      %v1200 = vadd.f32 %v972, %v1199
      %v1201 = vpop.f32.mrb[0].mxu0
      %1202 = vmatprep.mubr.bf16.mxu0 0
      %1203 = vmatmul.mubr.bf16.gmra.mrb[0].mxu0 %v817
      %v1204 = vpop.f32.mrb[0].mxu0
      %v1205 = vadd.f32 %v977, %v1204
      %v1206 = vpop.f32.mrb[0].mxu0
      %v1207 = vpop.f32.mrb[0].mxu0
      %v1208 = vadd.f32 %v980, %v1207
      %v1209 = vpop.f32.mrb[0].mxu0
      %1210 = vmatprep.mubr.bf16.mxu0 0
      %1211 = vmatmul.mubr.bf16.gmra.mrb[0].mxu0 %v820
      %v1212 = vpop.f32.mrb[0].mxu0
      %v1213 = vadd.f32 %v985, %v1212
      %v1214 = vpop.f32.mrb[0].mxu0
      %v1215 = vpop.f32.mrb[0].mxu0
      %v1216 = vadd.f32 %v988, %v1215
      %v1217 = vpop.f32.mrb[0].mxu0
      %1218 = vmatprep.mubr.bf16.mxu0 0
      %1219 = vmatmul.mubr.bf16.gmra.mrb[0].mxu0 %v823
      %v1220 = vpop.f32.mrb[0].mxu0
      %v1221 = vadd.f32 %v993, %v1220
      %v1222 = vpop.f32.mrb[0].mxu0
      %v1223 = vpop.f32.mrb[0].mxu0
      %v1224 = vadd.f32 %v996, %v1223
      %v1225 = vpop.f32.mrb[0].mxu0
      %1226 = vmatprep.mubr.bf16.mxu0 0
      %1227 = vmatmul.mubr.bf16.gmra.mrb[0].mxu0 %v826
      %v1228 = vpop.f32.mrb[0].mxu0
      %v1229 = vadd.f32 %v1001, %v1228
      %v1230 = vpop.f32.mrb[0].mxu0
      %v1231 = vpop.f32.mrb[0].mxu0
      %v1232 = vadd.f32 %v1004, %v1231
      %v1233 = vpop.f32.mrb[0].mxu0
      %1234 = vmatprep.mubr.bf16.mxu0 0
      %1235 = vmatmul.mubr.bf16.gmra.mrb[0].mxu0 %v829
      %v1236 = vpop.f32.mrb[0].mxu0
      %v1237 = vadd.f32 %v1009, %v1236
      %v1238 = vpop.f32.mrb[0].mxu0
      %v1239 = vpop.f32.mrb[0].mxu0
      %v1240 = vadd.f32 %v1012, %v1239
      %v1241 = vpop.f32.mrb[0].mxu0
      %1242 = vmatprep.mubr.bf16.mxu0 0
      %1243 = vmatmul.mubr.bf16.gmra.mrb[0].mxu0 %v832
      %v1244 = vpop.f32.mrb[0].mxu0
      %v1245 = vadd.f32 %v1017, %v1244
      %v1246 = vpop.f32.mrb[0].mxu0
      %v1247 = vpop.f32.mrb[0].mxu0
      %v1248 = vadd.f32 %v1020, %v1247
      %v1249 = vpop.f32.mrb[0].mxu0
      %1250 = vdwg.mxu0
      %s1251 = scalar_lea.vmem %s2, 4
      %v1252 = vld [vmem:[%s1251] sm:$0x3]
      %v1253 = vunpack.c.l.b16 %v531
      %v1254 = vunpack.c.l.b16 %v545
      %v1255 = vunpack.c.l.b16 %v559
      %v1256 = vunpack.c.l.b16 %v573
      %v1257 = vunpack.c.l.b16 %v587
      %v1258 = vunpack.c.l.b16 %v601
      %v1259 = vunpack.c.l.b16 %v615
      %v1260 = vunpack.c.l.b16 %v629
      %v1261 = vunpack.c.l.b16 %v643
      %v1262 = vunpack.c.l.b16 %v657
      %v1263 = vunpack.c.l.b16 %v671
      %v1264 = vunpack.c.l.b16 %v685
      %v1265 = vunpack.c.l.b16 %v699
      %v1266 = vunpack.c.l.b16 %v713
      %v1267 = vunpack.c.l.b16 %v727
      %v1268 = vunpack.c.l.b16 %v741
      %v1269 = vpack.c.b16 %v1254, %v1253
      %v1270 = vpack.c.b16 %v1256, %v1255
      %v1271 = vpack.c.b16 %v1258, %v1257
      %v1272 = vpack.c.b16 %v1260, %v1259
      %v1273 = vpack.c.b16 %v1262, %v1261
      %v1274 = vpack.c.b16 %v1264, %v1263
      %v1275 = vpack.c.b16 %v1266, %v1265
      %v1276 = vpack.c.b16 %v1268, %v1267
      %v1278 = vsel %vm809, %v1269, 0
      %v1281 = vsel %vm809, %v1270, 0
      %v1284 = vsel %vm809, %v1271, 0
      %v1287 = vsel %vm809, %v1272, 0
      %v1290 = vsel %vm809, %v1273, 0
      %v1293 = vsel %vm809, %v1274, 0
      %v1296 = vsel %vm809, %v1275, 0
      %v1299 = vsel %vm809, %v1276, 0
      %v1302 = vsel %vm858, %v1252, 0
      %1304 = vmatprep.subr.bf16.mxu0 0
      %1305 = vmatpush1.bf16.msra.mxu0 %v1302
      %1306 = vmatprep.subr.bf16.mxu0 0
      %1307 = vmatpush1.bf16.msra.mxu0 0
      %1308 = vmatprep.subr.bf16.mxu0 0
      %1309 = vmatpush1.bf16.msra.mxu0 0
      %1310 = vmatprep.subr.bf16.mxu0 0
      %1311 = vmatpush1.bf16.msra.mxu0 0
      %1312 = vmatprep.subr.bf16.mxu0 0
      %1313 = vmatpush1.bf16.msra.mxu0 0
      %1314 = vmatprep.subr.bf16.mxu0 0
      %1315 = vmatpush1.bf16.msra.mxu0 0
      %1316 = vmatprep.subr.bf16.mxu0 0
      %1317 = vmatpush1.bf16.msra.mxu0 0
      %1318 = vmatprep.subr.bf16.mxu0 0
      %1319 = vmatpush1.bf16.msra.mxu0 0
      %1320 = vmatprep.subr.bf16.mxu0 0
      %1321 = vmatpush1.bf16.msra.mxu0 0
      %1322 = vmatprep.subr.bf16.mxu0 0
      %1323 = vmatpush1.bf16.msra.mxu0 0
      %1324 = vmatprep.subr.bf16.mxu0 0
      %1325 = vmatpush1.bf16.msra.mxu0 0
      %1326 = vmatprep.subr.bf16.mxu0 0
      %1327 = vmatpush1.bf16.msra.mxu0 0
      %1328 = vmatprep.subr.bf16.mxu0 0
      %1329 = vmatpush1.bf16.msra.mxu0 0
      %1330 = vmatprep.subr.bf16.mxu0 0
      %1331 = vmatpush1.bf16.msra.mxu0 0
      %1332 = vmatprep.subr.bf16.mxu0 0
      %1333 = vmatpush1.bf16.msra.mxu0 0
      %1334 = vmatprep.subr.bf16.mxu0 0
      %1335 = vmatpush1.bf16.msra.mxu0 0
      %1336 = vmatprep.mubr.bf16.mxu0 0
      %1337 = vmatmul.mubr.bf16.gmra.mrb[0].mxu0 %v835
      %v1338 = vpop.f32.mrb[0].mxu0
      %v1339 = vadd.f32 0.0, %v1338
      %v1340 = vpop.f32.mrb[0].mxu0
      %v1341 = vpop.f32.mrb[0].mxu0
      %v1342 = vadd.f32 0.0, %v1341
      %v1343 = vpop.f32.mrb[0].mxu0
      %1344 = vmatprep.mubr.bf16.mxu0 0
      %1345 = vmatmul.mubr.bf16.gmra.mrb[0].mxu0 %v838
      %v1346 = vpop.f32.mrb[0].mxu0
      %v1347 = vadd.f32 0.0, %v1346
      %v1348 = vpop.f32.mrb[0].mxu0
      %v1349 = vpop.f32.mrb[0].mxu0
      %v1350 = vadd.f32 0.0, %v1349
      %v1351 = vpop.f32.mrb[0].mxu0
      %1352 = vmatprep.mubr.bf16.mxu0 0
      %1353 = vmatmul.mubr.bf16.gmra.mrb[0].mxu0 %v841
      %v1354 = vpop.f32.mrb[0].mxu0
      %v1355 = vadd.f32 0.0, %v1354
      %v1356 = vpop.f32.mrb[0].mxu0
      %v1357 = vpop.f32.mrb[0].mxu0
      %v1358 = vadd.f32 0.0, %v1357
      %v1359 = vpop.f32.mrb[0].mxu0
      %1360 = vmatprep.mubr.bf16.mxu0 0
      %1361 = vmatmul.mubr.bf16.gmra.mrb[0].mxu0 %v844
      %v1362 = vpop.f32.mrb[0].mxu0
      %v1363 = vadd.f32 0.0, %v1362
      %v1364 = vpop.f32.mrb[0].mxu0
      %v1365 = vpop.f32.mrb[0].mxu0
      %v1366 = vadd.f32 0.0, %v1365
      %v1367 = vpop.f32.mrb[0].mxu0
      %1368 = vmatprep.mubr.bf16.mxu0 0
      %1369 = vmatmul.mubr.bf16.gmra.mrb[0].mxu0 %v847
      %v1370 = vpop.f32.mrb[0].mxu0
      %v1371 = vadd.f32 0.0, %v1370
      %v1372 = vpop.f32.mrb[0].mxu0
      %v1373 = vpop.f32.mrb[0].mxu0
      %v1374 = vadd.f32 0.0, %v1373
      %v1375 = vpop.f32.mrb[0].mxu0
      %1376 = vmatprep.mubr.bf16.mxu0 0
      %1377 = vmatmul.mubr.bf16.gmra.mrb[0].mxu0 %v850
      %v1378 = vpop.f32.mrb[0].mxu0
      %v1379 = vadd.f32 0.0, %v1378
      %v1380 = vpop.f32.mrb[0].mxu0
      %v1381 = vpop.f32.mrb[0].mxu0
      %v1382 = vadd.f32 0.0, %v1381
      %v1383 = vpop.f32.mrb[0].mxu0
      %1384 = vmatprep.mubr.bf16.mxu0 0
      %1385 = vmatmul.mubr.bf16.gmra.mrb[0].mxu0 %v853
      %v1386 = vpop.f32.mrb[0].mxu0
      %v1387 = vadd.f32 0.0, %v1386
      %v1388 = vpop.f32.mrb[0].mxu0
      %v1389 = vpop.f32.mrb[0].mxu0
      %v1390 = vadd.f32 0.0, %v1389
      %v1391 = vpop.f32.mrb[0].mxu0
      %1392 = vmatprep.mubr.bf16.mxu0 0
      %1393 = vmatmul.mubr.bf16.gmra.mrb[0].mxu0 %v856
      %v1394 = vpop.f32.mrb[0].mxu0
      %v1395 = vadd.f32 0.0, %v1394
      %v1396 = vpop.f32.mrb[0].mxu0
      %v1397 = vpop.f32.mrb[0].mxu0
      %v1398 = vadd.f32 0.0, %v1397
      %v1399 = vpop.f32.mrb[0].mxu0
      %1400 = vmatprep.mubr.bf16.mxu0 0
      %1401 = vmatmul.mubr.bf16.gmra.mrb[0].mxu0 %v1278
      %v1402 = vpop.f32.mrb[0].mxu0
      %v1403 = vadd.f32 0.0, %v1402
      %v1404 = vpop.f32.mrb[0].mxu0
      %v1405 = vpop.f32.mrb[0].mxu0
      %v1406 = vadd.f32 0.0, %v1405
      %v1407 = vpop.f32.mrb[0].mxu0
      %1408 = vmatprep.mubr.bf16.mxu0 0
      %1409 = vmatmul.mubr.bf16.gmra.mrb[0].mxu0 %v1281
      %v1410 = vpop.f32.mrb[0].mxu0
      %v1411 = vadd.f32 0.0, %v1410
      %v1412 = vpop.f32.mrb[0].mxu0
      %v1413 = vpop.f32.mrb[0].mxu0
      %v1414 = vadd.f32 0.0, %v1413
      %v1415 = vpop.f32.mrb[0].mxu0
      %1416 = vmatprep.mubr.bf16.mxu0 0
      %1417 = vmatmul.mubr.bf16.gmra.mrb[0].mxu0 %v1284
      %v1418 = vpop.f32.mrb[0].mxu0
      %v1419 = vadd.f32 0.0, %v1418
      %v1420 = vpop.f32.mrb[0].mxu0
      %v1421 = vpop.f32.mrb[0].mxu0
      %v1422 = vadd.f32 0.0, %v1421
      %v1423 = vpop.f32.mrb[0].mxu0
      %1424 = vmatprep.mubr.bf16.mxu0 0
      %1425 = vmatmul.mubr.bf16.gmra.mrb[0].mxu0 %v1287
      %v1426 = vpop.f32.mrb[0].mxu0
      %v1427 = vadd.f32 0.0, %v1426
      %v1428 = vpop.f32.mrb[0].mxu0
      %v1429 = vpop.f32.mrb[0].mxu0
      %v1430 = vadd.f32 0.0, %v1429
      %v1431 = vpop.f32.mrb[0].mxu0
      %1432 = vmatprep.mubr.bf16.mxu0 0
      %1433 = vmatmul.mubr.bf16.gmra.mrb[0].mxu0 %v1290
      %v1434 = vpop.f32.mrb[0].mxu0
      %v1435 = vadd.f32 0.0, %v1434
      %v1436 = vpop.f32.mrb[0].mxu0
      %v1437 = vpop.f32.mrb[0].mxu0
      %v1438 = vadd.f32 0.0, %v1437
      %v1439 = vpop.f32.mrb[0].mxu0
      %1440 = vmatprep.mubr.bf16.mxu0 0
      %1441 = vmatmul.mubr.bf16.gmra.mrb[0].mxu0 %v1293
      %v1442 = vpop.f32.mrb[0].mxu0
      %v1443 = vadd.f32 0.0, %v1442
      %v1444 = vpop.f32.mrb[0].mxu0
      %v1445 = vpop.f32.mrb[0].mxu0
      %v1446 = vadd.f32 0.0, %v1445
      %v1447 = vpop.f32.mrb[0].mxu0
      %1448 = vmatprep.mubr.bf16.mxu0 0
      %1449 = vmatmul.mubr.bf16.gmra.mrb[0].mxu0 %v1296
      %v1450 = vpop.f32.mrb[0].mxu0
      %v1451 = vadd.f32 0.0, %v1450
      %v1452 = vpop.f32.mrb[0].mxu0
      %v1453 = vpop.f32.mrb[0].mxu0
      %v1454 = vadd.f32 0.0, %v1453
      %v1455 = vpop.f32.mrb[0].mxu0
      %1456 = vmatprep.mubr.bf16.mxu0 0
      %1457 = vmatmul.mubr.bf16.gmra.mrb[0].mxu0 %v1299
      %v1458 = vpop.f32.mrb[0].mxu0
      %v1459 = vadd.f32 0.0, %v1458
      %v1460 = vpop.f32.mrb[0].mxu0
      %v1461 = vpop.f32.mrb[0].mxu0
      %v1462 = vadd.f32 0.0, %v1461
      %v1463 = vpop.f32.mrb[0].mxu0
      %1464 = vdwg.mxu0
      %v1465 = vadd.f32 %v1125, %v1339
      %v1466 = vadd.f32 %v1128, %v1342
      %v1467 = vadd.f32 %v1133, %v1347
      %v1468 = vadd.f32 %v1136, %v1350
      %v1469 = vadd.f32 %v1141, %v1355
      %v1470 = vadd.f32 %v1144, %v1358
      %v1471 = vadd.f32 %v1149, %v1363
      %v1472 = vadd.f32 %v1152, %v1366
      %v1473 = vadd.f32 %v1157, %v1371
      %v1474 = vadd.f32 %v1160, %v1374
      %v1475 = vadd.f32 %v1165, %v1379
      %v1476 = vadd.f32 %v1168, %v1382
      %v1477 = vadd.f32 %v1173, %v1387
      %v1478 = vadd.f32 %v1176, %v1390
      %v1479 = vadd.f32 %v1181, %v1395
      %v1480 = vadd.f32 %v1184, %v1398
      %v1481 = vadd.f32 %v1189, %v1403
      %v1482 = vadd.f32 %v1192, %v1406
      %v1483 = vadd.f32 %v1197, %v1411
      %v1484 = vadd.f32 %v1200, %v1414
      %v1485 = vadd.f32 %v1205, %v1419
      %v1486 = vadd.f32 %v1208, %v1422
      %v1487 = vadd.f32 %v1213, %v1427
      %v1488 = vadd.f32 %v1216, %v1430
      %v1489 = vadd.f32 %v1221, %v1435
      %v1490 = vadd.f32 %v1224, %v1438
      %v1491 = vadd.f32 %v1229, %v1443
      %v1492 = vadd.f32 %v1232, %v1446
      %v1493 = vadd.f32 %v1237, %v1451
      %v1494 = vadd.f32 %v1240, %v1454
      %v1495 = vadd.f32 %v1245, %v1459
      %v1496 = vadd.f32 %v1248, %v1462
      %v1498 = vshrl.u32 %v251, 16
      %v1500 = vrot.slane %v1498, 4
      %v1501 = vshll.u32 %v251, 16
      %v1503 = vrot.slane %v1501, 5
      %v1504 = vor.u32 %v1500, %v1503
      %v1505 = vrot.slane %v1504, 4
      %v1507 = vshll.u32 %v252, 16
      %v1509 = vrot.slane %v1507, 5
      %v1510 = vsel %vm293, %v1505, %v1509
      %v1512 = vshrl.u32 %v287, 16
      %v1514 = vrot.slane %v1512, 4
      %v1515 = vshll.u32 %v287, 16
      %v1517 = vrot.slane %v1515, 5
      %v1518 = vor.u32 %v1514, %v1517
      %v1519 = vrot.slane %v1518, 4
      %v1521 = vshll.u32 %v288, 16
      %v1523 = vrot.slane %v1521, 5
      %v1524 = vsel %vm293, %v1519, %v1523
      %s1525 = scalar_lea.vmem %s2, 6
      %v1526 = vld [vmem:[%s1525] sm:$0x3]
      %s1527 = scalar_lea.vmem %s2, 8
      %v1528 = vld [vmem:[%s1527] sm:$0x3]
      %v1530 = vunpack.c.l.b16 %v287
      %v1531 = vunpack.c.l.b16 %v1510
      %v1532 = vpack.c.b16 %v763, %v762
      %v1533 = vpack.c.b16 %v765, %v764
      %v1534 = vpack.c.b16 %v767, %v766
      %v1535 = vpack.c.b16 %v769, %v768
      %v1536 = vpack.c.b16 %v771, %v770
      %v1537 = vpack.c.b16 %v773, %v772
      %v1538 = vpack.c.b16 %v775, %v774
      %v1539 = vpack.c.b16 %v1530, %v776
      %v1540 = vpack.c.b16 %v779, %v778
      %v1541 = vpack.c.b16 %v781, %v780
      %v1542 = vpack.c.b16 %v783, %v782
      %v1543 = vpack.c.b16 %v785, %v784
      %v1544 = vpack.c.b16 %v787, %v786
      %v1545 = vpack.c.b16 %v789, %v788
      %v1546 = vpack.c.b16 %v791, %v790
      %v1547 = vpack.c.b16 %v1531, %v792
      %v1549 = vsel %vm809, %v1532, 0
      %v1552 = vsel %vm809, %v1533, 0
      %v1555 = vsel %vm809, %v1534, 0
      %v1558 = vsel %vm809, %v1535, 0
      %v1561 = vsel %vm809, %v1536, 0
      %v1564 = vsel %vm809, %v1537, 0
      %v1567 = vsel %vm809, %v1538, 0
      %v1570 = vsel %vm809, %v1539, 0
      %v1573 = vsel %vm809, %v1540, 0
      %v1576 = vsel %vm809, %v1541, 0
      %v1579 = vsel %vm809, %v1542, 0
      %v1582 = vsel %vm809, %v1543, 0
      %v1585 = vsel %vm809, %v1544, 0
      %v1588 = vsel %vm809, %v1545, 0
      %v1591 = vsel %vm809, %v1546, 0
      %v1594 = vsel %vm809, %v1547, 0
      %v1597 = vsel %vm858, %v1528, 0
      %1599 = vmatprep.subr.bf16.mxu0 0
      %1600 = vmatpush1.bf16.msra.mxu0 %v1597
      %1601 = vmatprep.subr.bf16.mxu0 0
      %1602 = vmatpush1.bf16.msra.mxu0 0
      %1603 = vmatprep.subr.bf16.mxu0 0
      %1604 = vmatpush1.bf16.msra.mxu0 0
      %1605 = vmatprep.subr.bf16.mxu0 0
      %1606 = vmatpush1.bf16.msra.mxu0 0
      %1607 = vmatprep.subr.bf16.mxu0 0
      %1608 = vmatpush1.bf16.msra.mxu0 0
      %1609 = vmatprep.subr.bf16.mxu0 0
      %1610 = vmatpush1.bf16.msra.mxu0 0
      %1611 = vmatprep.subr.bf16.mxu0 0
      %1612 = vmatpush1.bf16.msra.mxu0 0
      %1613 = vmatprep.subr.bf16.mxu0 0
      %1614 = vmatpush1.bf16.msra.mxu0 0
      %1615 = vmatprep.subr.bf16.mxu0 0
      %1616 = vmatpush1.bf16.msra.mxu0 0
      %1617 = vmatprep.subr.bf16.mxu0 0
      %1618 = vmatpush1.bf16.msra.mxu0 0
      %1619 = vmatprep.subr.bf16.mxu0 0
      %1620 = vmatpush1.bf16.msra.mxu0 0
      %1621 = vmatprep.subr.bf16.mxu0 0
      %1622 = vmatpush1.bf16.msra.mxu0 0
      %1623 = vmatprep.subr.bf16.mxu0 0
      %1624 = vmatpush1.bf16.msra.mxu0 0
      %1625 = vmatprep.subr.bf16.mxu0 0
      %1626 = vmatpush1.bf16.msra.mxu0 0
      %1627 = vmatprep.subr.bf16.mxu0 0
      %1628 = vmatpush1.bf16.msra.mxu0 0
      %1629 = vmatprep.subr.bf16.mxu0 0
      %1630 = vmatpush1.bf16.msra.mxu0 0
      %1631 = vmatprep.mubr.bf16.mxu0 0
      %1632 = vmatmul.mubr.bf16.gmra.mrb[0].mxu0 %v1549
      %v1633 = vpop.f32.mrb[0].mxu0
      %v1634 = vadd.f32 0.0, %v1633
      %v1635 = vpop.f32.mrb[0].mxu0
      %v1636 = vpop.f32.mrb[0].mxu0
      %v1637 = vadd.f32 0.0, %v1636
      %v1638 = vpop.f32.mrb[0].mxu0
      %1639 = vmatprep.mubr.bf16.mxu0 0
      %1640 = vmatmul.mubr.bf16.gmra.mrb[0].mxu0 %v1552
      %v1641 = vpop.f32.mrb[0].mxu0
      %v1642 = vadd.f32 0.0, %v1641
      %v1643 = vpop.f32.mrb[0].mxu0
      %v1644 = vpop.f32.mrb[0].mxu0
      %v1645 = vadd.f32 0.0, %v1644
      %v1646 = vpop.f32.mrb[0].mxu0
      %1647 = vmatprep.mubr.bf16.mxu0 0
      %1648 = vmatmul.mubr.bf16.gmra.mrb[0].mxu0 %v1555
      %v1649 = vpop.f32.mrb[0].mxu0
      %v1650 = vadd.f32 0.0, %v1649
      %v1651 = vpop.f32.mrb[0].mxu0
      %v1652 = vpop.f32.mrb[0].mxu0
      %v1653 = vadd.f32 0.0, %v1652
      %v1654 = vpop.f32.mrb[0].mxu0
      %1655 = vmatprep.mubr.bf16.mxu0 0
      %1656 = vmatmul.mubr.bf16.gmra.mrb[0].mxu0 %v1558
      %v1657 = vpop.f32.mrb[0].mxu0
      %v1658 = vadd.f32 0.0, %v1657
      %v1659 = vpop.f32.mrb[0].mxu0
      %v1660 = vpop.f32.mrb[0].mxu0
      %v1661 = vadd.f32 0.0, %v1660
      %v1662 = vpop.f32.mrb[0].mxu0
      %1663 = vmatprep.mubr.bf16.mxu0 0
      %1664 = vmatmul.mubr.bf16.gmra.mrb[0].mxu0 %v1561
      %v1665 = vpop.f32.mrb[0].mxu0
      %v1666 = vadd.f32 0.0, %v1665
      %v1667 = vpop.f32.mrb[0].mxu0
      %v1668 = vpop.f32.mrb[0].mxu0
      %v1669 = vadd.f32 0.0, %v1668
      %v1670 = vpop.f32.mrb[0].mxu0
      %1671 = vmatprep.mubr.bf16.mxu0 0
      %1672 = vmatmul.mubr.bf16.gmra.mrb[0].mxu0 %v1564
      %v1673 = vpop.f32.mrb[0].mxu0
      %v1674 = vadd.f32 0.0, %v1673
      %v1675 = vpop.f32.mrb[0].mxu0
      %v1676 = vpop.f32.mrb[0].mxu0
      %v1677 = vadd.f32 0.0, %v1676
      %v1678 = vpop.f32.mrb[0].mxu0
      %1679 = vmatprep.mubr.bf16.mxu0 0
      %1680 = vmatmul.mubr.bf16.gmra.mrb[0].mxu0 %v1567
      %v1681 = vpop.f32.mrb[0].mxu0
      %v1682 = vadd.f32 0.0, %v1681
      %v1683 = vpop.f32.mrb[0].mxu0
      %v1684 = vpop.f32.mrb[0].mxu0
      %v1685 = vadd.f32 0.0, %v1684
      %v1686 = vpop.f32.mrb[0].mxu0
      %1687 = vmatprep.mubr.bf16.mxu0 0
      %1688 = vmatmul.mubr.bf16.gmra.mrb[0].mxu0 %v1570
      %v1689 = vpop.f32.mrb[0].mxu0
      %v1690 = vadd.f32 0.0, %v1689
      %v1691 = vpop.f32.mrb[0].mxu0
      %v1692 = vpop.f32.mrb[0].mxu0
      %v1693 = vadd.f32 0.0, %v1692
      %v1694 = vpop.f32.mrb[0].mxu0
      %1695 = vmatprep.mubr.bf16.mxu0 0
      %1696 = vmatmul.mubr.bf16.gmra.mrb[0].mxu0 %v1573
      %v1697 = vpop.f32.mrb[0].mxu0
      %v1698 = vadd.f32 0.0, %v1697
      %v1699 = vpop.f32.mrb[0].mxu0
      %v1700 = vpop.f32.mrb[0].mxu0
      %v1701 = vadd.f32 0.0, %v1700
      %v1702 = vpop.f32.mrb[0].mxu0
      %1703 = vmatprep.mubr.bf16.mxu0 0
      %1704 = vmatmul.mubr.bf16.gmra.mrb[0].mxu0 %v1576
      %v1705 = vpop.f32.mrb[0].mxu0
      %v1706 = vadd.f32 0.0, %v1705
      %v1707 = vpop.f32.mrb[0].mxu0
      %v1708 = vpop.f32.mrb[0].mxu0
      %v1709 = vadd.f32 0.0, %v1708
      %v1710 = vpop.f32.mrb[0].mxu0
      %1711 = vmatprep.mubr.bf16.mxu0 0
      %1712 = vmatmul.mubr.bf16.gmra.mrb[0].mxu0 %v1579
      %v1713 = vpop.f32.mrb[0].mxu0
      %v1714 = vadd.f32 0.0, %v1713
      %v1715 = vpop.f32.mrb[0].mxu0
      %v1716 = vpop.f32.mrb[0].mxu0
      %v1717 = vadd.f32 0.0, %v1716
      %v1718 = vpop.f32.mrb[0].mxu0
      %1719 = vmatprep.mubr.bf16.mxu0 0
      %1720 = vmatmul.mubr.bf16.gmra.mrb[0].mxu0 %v1582
      %v1721 = vpop.f32.mrb[0].mxu0
      %v1722 = vadd.f32 0.0, %v1721
      %v1723 = vpop.f32.mrb[0].mxu0
      %v1724 = vpop.f32.mrb[0].mxu0
      %v1725 = vadd.f32 0.0, %v1724
      %v1726 = vpop.f32.mrb[0].mxu0
      %1727 = vmatprep.mubr.bf16.mxu0 0
      %1728 = vmatmul.mubr.bf16.gmra.mrb[0].mxu0 %v1585
      %v1729 = vpop.f32.mrb[0].mxu0
      %v1730 = vadd.f32 0.0, %v1729
      %v1731 = vpop.f32.mrb[0].mxu0
      %v1732 = vpop.f32.mrb[0].mxu0
      %v1733 = vadd.f32 0.0, %v1732
      %v1734 = vpop.f32.mrb[0].mxu0
      %1735 = vmatprep.mubr.bf16.mxu0 0
      %1736 = vmatmul.mubr.bf16.gmra.mrb[0].mxu0 %v1588
      %v1737 = vpop.f32.mrb[0].mxu0
      %v1738 = vadd.f32 0.0, %v1737
      %v1739 = vpop.f32.mrb[0].mxu0
      %v1740 = vpop.f32.mrb[0].mxu0
      %v1741 = vadd.f32 0.0, %v1740
      %v1742 = vpop.f32.mrb[0].mxu0
      %1743 = vmatprep.mubr.bf16.mxu0 0
      %1744 = vmatmul.mubr.bf16.gmra.mrb[0].mxu0 %v1591
      %v1745 = vpop.f32.mrb[0].mxu0
      %v1746 = vadd.f32 0.0, %v1745
      %v1747 = vpop.f32.mrb[0].mxu0
      %v1748 = vpop.f32.mrb[0].mxu0
      %v1749 = vadd.f32 0.0, %v1748
      %v1750 = vpop.f32.mrb[0].mxu0
      %1751 = vmatprep.mubr.bf16.mxu0 0
      %1752 = vmatmul.mubr.bf16.gmra.mrb[0].mxu0 %v1594
      %v1753 = vpop.f32.mrb[0].mxu0
      %v1754 = vadd.f32 0.0, %v1753
      %v1755 = vpop.f32.mrb[0].mxu0
      %v1756 = vpop.f32.mrb[0].mxu0
      %v1757 = vadd.f32 0.0, %v1756
      %v1758 = vpop.f32.mrb[0].mxu0
      %1759 = vdwg.mxu0
      %v1761 = vunpack.c.l.b16 %v251
      %v1762 = vpack.c.b16 %v1041, %v1040
      %v1763 = vpack.c.b16 %v1043, %v1042
      %v1764 = vpack.c.b16 %v1045, %v1044
      %v1765 = vpack.c.b16 %v1047, %v1046
      %v1766 = vpack.c.b16 %v1049, %v1048
      %v1767 = vpack.c.b16 %v1051, %v1050
      %v1768 = vpack.c.b16 %v1053, %v1052
      %v1769 = vpack.c.b16 %v1761, %v1054
      %v1771 = vsel %vm809, %v1762, 0
      %v1774 = vsel %vm809, %v1763, 0
      %v1777 = vsel %vm809, %v1764, 0
      %v1780 = vsel %vm809, %v1765, 0
      %v1783 = vsel %vm809, %v1766, 0
      %v1786 = vsel %vm809, %v1767, 0
      %v1789 = vsel %vm809, %v1768, 0
      %v1792 = vsel %vm809, %v1769, 0
      %v1795 = vsel %vm858, %v1526, 0
      %1797 = vmatprep.subr.bf16.mxu0 0
      %1798 = vmatpush1.bf16.msra.mxu0 %v1795
      %1799 = vmatprep.subr.bf16.mxu0 0
      %1800 = vmatpush1.bf16.msra.mxu0 0
      %1801 = vmatprep.subr.bf16.mxu0 0
      %1802 = vmatpush1.bf16.msra.mxu0 0
      %1803 = vmatprep.subr.bf16.mxu0 0
      %1804 = vmatpush1.bf16.msra.mxu0 0
      %1805 = vmatprep.subr.bf16.mxu0 0
      %1806 = vmatpush1.bf16.msra.mxu0 0
      %1807 = vmatprep.subr.bf16.mxu0 0
      %1808 = vmatpush1.bf16.msra.mxu0 0
      %1809 = vmatprep.subr.bf16.mxu0 0
      %1810 = vmatpush1.bf16.msra.mxu0 0
      %1811 = vmatprep.subr.bf16.mxu0 0
      %1812 = vmatpush1.bf16.msra.mxu0 0
      %1813 = vmatprep.subr.bf16.mxu0 0
      %1814 = vmatpush1.bf16.msra.mxu0 0
      %1815 = vmatprep.subr.bf16.mxu0 0
      %1816 = vmatpush1.bf16.msra.mxu0 0
      %1817 = vmatprep.subr.bf16.mxu0 0
      %1818 = vmatpush1.bf16.msra.mxu0 0
      %1819 = vmatprep.subr.bf16.mxu0 0
      %1820 = vmatpush1.bf16.msra.mxu0 0
      %1821 = vmatprep.subr.bf16.mxu0 0
      %1822 = vmatpush1.bf16.msra.mxu0 0
      %1823 = vmatprep.subr.bf16.mxu0 0
      %1824 = vmatpush1.bf16.msra.mxu0 0
      %1825 = vmatprep.subr.bf16.mxu0 0
      %1826 = vmatpush1.bf16.msra.mxu0 0
      %1827 = vmatprep.subr.bf16.mxu0 0
      %1828 = vmatpush1.bf16.msra.mxu0 0
      %1829 = vmatprep.mubr.bf16.mxu0 0
      %1830 = vmatmul.mubr.bf16.gmra.mrb[0].mxu0 %v1771
      %v1831 = vpop.f32.mrb[0].mxu0
      %v1832 = vadd.f32 %v1634, %v1831
      %v1833 = vpop.f32.mrb[0].mxu0
      %v1834 = vpop.f32.mrb[0].mxu0
      %v1835 = vadd.f32 %v1637, %v1834
      %v1836 = vpop.f32.mrb[0].mxu0
      %1837 = vmatprep.mubr.bf16.mxu0 0
      %1838 = vmatmul.mubr.bf16.gmra.mrb[0].mxu0 %v1774
      %v1839 = vpop.f32.mrb[0].mxu0
      %v1840 = vadd.f32 %v1642, %v1839
      %v1841 = vpop.f32.mrb[0].mxu0
      %v1842 = vpop.f32.mrb[0].mxu0
      %v1843 = vadd.f32 %v1645, %v1842
      %v1844 = vpop.f32.mrb[0].mxu0
      %1845 = vmatprep.mubr.bf16.mxu0 0
      %1846 = vmatmul.mubr.bf16.gmra.mrb[0].mxu0 %v1777
      %v1847 = vpop.f32.mrb[0].mxu0
      %v1848 = vadd.f32 %v1650, %v1847
      %v1849 = vpop.f32.mrb[0].mxu0
      %v1850 = vpop.f32.mrb[0].mxu0
      %v1851 = vadd.f32 %v1653, %v1850
      %v1852 = vpop.f32.mrb[0].mxu0
      %1853 = vmatprep.mubr.bf16.mxu0 0
      %1854 = vmatmul.mubr.bf16.gmra.mrb[0].mxu0 %v1780
      %v1855 = vpop.f32.mrb[0].mxu0
      %v1856 = vadd.f32 %v1658, %v1855
      %v1857 = vpop.f32.mrb[0].mxu0
      %v1858 = vpop.f32.mrb[0].mxu0
      %v1859 = vadd.f32 %v1661, %v1858
      %v1860 = vpop.f32.mrb[0].mxu0
      %1861 = vmatprep.mubr.bf16.mxu0 0
      %1862 = vmatmul.mubr.bf16.gmra.mrb[0].mxu0 %v1783
      %v1863 = vpop.f32.mrb[0].mxu0
      %v1864 = vadd.f32 %v1666, %v1863
      %v1865 = vpop.f32.mrb[0].mxu0
      %v1866 = vpop.f32.mrb[0].mxu0
      %v1867 = vadd.f32 %v1669, %v1866
      %v1868 = vpop.f32.mrb[0].mxu0
      %1869 = vmatprep.mubr.bf16.mxu0 0
      %1870 = vmatmul.mubr.bf16.gmra.mrb[0].mxu0 %v1786
      %v1871 = vpop.f32.mrb[0].mxu0
      %v1872 = vadd.f32 %v1674, %v1871
      %v1873 = vpop.f32.mrb[0].mxu0
      %v1874 = vpop.f32.mrb[0].mxu0
      %v1875 = vadd.f32 %v1677, %v1874
      %v1876 = vpop.f32.mrb[0].mxu0
      %1877 = vmatprep.mubr.bf16.mxu0 0
      %1878 = vmatmul.mubr.bf16.gmra.mrb[0].mxu0 %v1789
      %v1879 = vpop.f32.mrb[0].mxu0
      %v1880 = vadd.f32 %v1682, %v1879
      %v1881 = vpop.f32.mrb[0].mxu0
      %v1882 = vpop.f32.mrb[0].mxu0
      %v1883 = vadd.f32 %v1685, %v1882
      %v1884 = vpop.f32.mrb[0].mxu0
      %1885 = vmatprep.mubr.bf16.mxu0 0
      %1886 = vmatmul.mubr.bf16.gmra.mrb[0].mxu0 %v1792
      %v1887 = vpop.f32.mrb[0].mxu0
      %v1888 = vadd.f32 %v1690, %v1887
      %v1889 = vpop.f32.mrb[0].mxu0
      %v1890 = vpop.f32.mrb[0].mxu0
      %v1891 = vadd.f32 %v1693, %v1890
      %v1892 = vpop.f32.mrb[0].mxu0
      %1893 = vmatprep.mubr.bf16.mxu0 0
      %1894 = vmatmul.mubr.bf16.gmra.mrb[0].mxu0 %v1549
      %v1895 = vpop.f32.mrb[0].mxu0
      %v1896 = vadd.f32 %v1698, %v1895
      %v1897 = vpop.f32.mrb[0].mxu0
      %v1898 = vpop.f32.mrb[0].mxu0
      %v1899 = vadd.f32 %v1701, %v1898
      %v1900 = vpop.f32.mrb[0].mxu0
      %1901 = vmatprep.mubr.bf16.mxu0 0
      %1902 = vmatmul.mubr.bf16.gmra.mrb[0].mxu0 %v1552
      %v1903 = vpop.f32.mrb[0].mxu0
      %v1904 = vadd.f32 %v1706, %v1903
      %v1905 = vpop.f32.mrb[0].mxu0
      %v1906 = vpop.f32.mrb[0].mxu0
      %v1907 = vadd.f32 %v1709, %v1906
      %v1908 = vpop.f32.mrb[0].mxu0
      %1909 = vmatprep.mubr.bf16.mxu0 0
      %1910 = vmatmul.mubr.bf16.gmra.mrb[0].mxu0 %v1555
      %v1911 = vpop.f32.mrb[0].mxu0
      %v1912 = vadd.f32 %v1714, %v1911
      %v1913 = vpop.f32.mrb[0].mxu0
      %v1914 = vpop.f32.mrb[0].mxu0
      %v1915 = vadd.f32 %v1717, %v1914
      %v1916 = vpop.f32.mrb[0].mxu0
      %1917 = vmatprep.mubr.bf16.mxu0 0
      %1918 = vmatmul.mubr.bf16.gmra.mrb[0].mxu0 %v1558
      %v1919 = vpop.f32.mrb[0].mxu0
      %v1920 = vadd.f32 %v1722, %v1919
      %v1921 = vpop.f32.mrb[0].mxu0
      %v1922 = vpop.f32.mrb[0].mxu0
      %v1923 = vadd.f32 %v1725, %v1922
      %v1924 = vpop.f32.mrb[0].mxu0
      %1925 = vmatprep.mubr.bf16.mxu0 0
      %1926 = vmatmul.mubr.bf16.gmra.mrb[0].mxu0 %v1561
      %v1927 = vpop.f32.mrb[0].mxu0
      %v1928 = vadd.f32 %v1730, %v1927
      %v1929 = vpop.f32.mrb[0].mxu0
      %v1930 = vpop.f32.mrb[0].mxu0
      %v1931 = vadd.f32 %v1733, %v1930
      %v1932 = vpop.f32.mrb[0].mxu0
      %1933 = vmatprep.mubr.bf16.mxu0 0
      %1934 = vmatmul.mubr.bf16.gmra.mrb[0].mxu0 %v1564
      %v1935 = vpop.f32.mrb[0].mxu0
      %v1936 = vadd.f32 %v1738, %v1935
      %v1937 = vpop.f32.mrb[0].mxu0
      %v1938 = vpop.f32.mrb[0].mxu0
      %v1939 = vadd.f32 %v1741, %v1938
      %v1940 = vpop.f32.mrb[0].mxu0
      %1941 = vmatprep.mubr.bf16.mxu0 0
      %1942 = vmatmul.mubr.bf16.gmra.mrb[0].mxu0 %v1567
      %v1943 = vpop.f32.mrb[0].mxu0
      %v1944 = vadd.f32 %v1746, %v1943
      %v1945 = vpop.f32.mrb[0].mxu0
      %v1946 = vpop.f32.mrb[0].mxu0
      %v1947 = vadd.f32 %v1749, %v1946
      %v1948 = vpop.f32.mrb[0].mxu0
      %1949 = vmatprep.mubr.bf16.mxu0 0
      %1950 = vmatmul.mubr.bf16.gmra.mrb[0].mxu0 %v1570
      %v1951 = vpop.f32.mrb[0].mxu0
      %v1952 = vadd.f32 %v1754, %v1951
      %v1953 = vpop.f32.mrb[0].mxu0
      %v1954 = vpop.f32.mrb[0].mxu0
      %v1955 = vadd.f32 %v1757, %v1954
      %v1956 = vpop.f32.mrb[0].mxu0
      %1957 = vdwg.mxu0
      %s1958 = scalar_lea.vmem %s2, 10
      %v1959 = vld [vmem:[%s1958] sm:$0x3]
      %v1960 = vunpack.c.l.b16 %v1524
      %v1961 = vpack.c.b16 %v1255, %v1254
      %v1962 = vpack.c.b16 %v1257, %v1256
      %v1963 = vpack.c.b16 %v1259, %v1258
      %v1964 = vpack.c.b16 %v1261, %v1260
      %v1965 = vpack.c.b16 %v1263, %v1262
      %v1966 = vpack.c.b16 %v1265, %v1264
      %v1967 = vpack.c.b16 %v1267, %v1266
      %v1968 = vpack.c.b16 %v1960, %v1268
      %v1970 = vsel %vm809, %v1961, 0
      %v1973 = vsel %vm809, %v1962, 0
      %v1976 = vsel %vm809, %v1963, 0
      %v1979 = vsel %vm809, %v1964, 0
      %v1982 = vsel %vm809, %v1965, 0
      %v1985 = vsel %vm809, %v1966, 0
      %v1988 = vsel %vm809, %v1967, 0
      %v1991 = vsel %vm809, %v1968, 0
      %v1994 = vsel %vm858, %v1959, 0
      %1996 = vmatprep.subr.bf16.mxu0 0
      %1997 = vmatpush1.bf16.msra.mxu0 %v1994
      %1998 = vmatprep.subr.bf16.mxu0 0
      %1999 = vmatpush1.bf16.msra.mxu0 0
      %2000 = vmatprep.subr.bf16.mxu0 0
      %2001 = vmatpush1.bf16.msra.mxu0 0
      %2002 = vmatprep.subr.bf16.mxu0 0
      %2003 = vmatpush1.bf16.msra.mxu0 0
      %2004 = vmatprep.subr.bf16.mxu0 0
      %2005 = vmatpush1.bf16.msra.mxu0 0
      %2006 = vmatprep.subr.bf16.mxu0 0
      %2007 = vmatpush1.bf16.msra.mxu0 0
      %2008 = vmatprep.subr.bf16.mxu0 0
      %2009 = vmatpush1.bf16.msra.mxu0 0
      %2010 = vmatprep.subr.bf16.mxu0 0
      %2011 = vmatpush1.bf16.msra.mxu0 0
      %2012 = vmatprep.subr.bf16.mxu0 0
      %2013 = vmatpush1.bf16.msra.mxu0 0
      %2014 = vmatprep.subr.bf16.mxu0 0
      %2015 = vmatpush1.bf16.msra.mxu0 0
      %2016 = vmatprep.subr.bf16.mxu0 0
      %2017 = vmatpush1.bf16.msra.mxu0 0
      %2018 = vmatprep.subr.bf16.mxu0 0
      %2019 = vmatpush1.bf16.msra.mxu0 0
      %2020 = vmatprep.subr.bf16.mxu0 0
      %2021 = vmatpush1.bf16.msra.mxu0 0
      %2022 = vmatprep.subr.bf16.mxu0 0
      %2023 = vmatpush1.bf16.msra.mxu0 0
      %2024 = vmatprep.subr.bf16.mxu0 0
      %2025 = vmatpush1.bf16.msra.mxu0 0
      %2026 = vmatprep.subr.bf16.mxu0 0
      %2027 = vmatpush1.bf16.msra.mxu0 0
      %2028 = vmatprep.mubr.bf16.mxu0 0
      %2029 = vmatmul.mubr.bf16.gmra.mrb[0].mxu0 %v1573
      %v2030 = vpop.f32.mrb[0].mxu0
      %v2031 = vadd.f32 0.0, %v2030
      %v2032 = vpop.f32.mrb[0].mxu0
      %v2033 = vpop.f32.mrb[0].mxu0
      %v2034 = vadd.f32 0.0, %v2033
      %v2035 = vpop.f32.mrb[0].mxu0
      %2036 = vmatprep.mubr.bf16.mxu0 0
      %2037 = vmatmul.mubr.bf16.gmra.mrb[0].mxu0 %v1576
      %v2038 = vpop.f32.mrb[0].mxu0
      %v2039 = vadd.f32 0.0, %v2038
      %v2040 = vpop.f32.mrb[0].mxu0
      %v2041 = vpop.f32.mrb[0].mxu0
      %v2042 = vadd.f32 0.0, %v2041
      %v2043 = vpop.f32.mrb[0].mxu0
      %2044 = vmatprep.mubr.bf16.mxu0 0
      %2045 = vmatmul.mubr.bf16.gmra.mrb[0].mxu0 %v1579
      %v2046 = vpop.f32.mrb[0].mxu0
      %v2047 = vadd.f32 0.0, %v2046
      %v2048 = vpop.f32.mrb[0].mxu0
      %v2049 = vpop.f32.mrb[0].mxu0
      %v2050 = vadd.f32 0.0, %v2049
      %v2051 = vpop.f32.mrb[0].mxu0
      %2052 = vmatprep.mubr.bf16.mxu0 0
      %2053 = vmatmul.mubr.bf16.gmra.mrb[0].mxu0 %v1582
      %v2054 = vpop.f32.mrb[0].mxu0
      %v2055 = vadd.f32 0.0, %v2054
      %v2056 = vpop.f32.mrb[0].mxu0
      %v2057 = vpop.f32.mrb[0].mxu0
      %v2058 = vadd.f32 0.0, %v2057
      %v2059 = vpop.f32.mrb[0].mxu0
      %2060 = vmatprep.mubr.bf16.mxu0 0
      %2061 = vmatmul.mubr.bf16.gmra.mrb[0].mxu0 %v1585
      %v2062 = vpop.f32.mrb[0].mxu0
      %v2063 = vadd.f32 0.0, %v2062
      %v2064 = vpop.f32.mrb[0].mxu0
      %v2065 = vpop.f32.mrb[0].mxu0
      %v2066 = vadd.f32 0.0, %v2065
      %v2067 = vpop.f32.mrb[0].mxu0
      %2068 = vmatprep.mubr.bf16.mxu0 0
      %2069 = vmatmul.mubr.bf16.gmra.mrb[0].mxu0 %v1588
      %v2070 = vpop.f32.mrb[0].mxu0
      %v2071 = vadd.f32 0.0, %v2070
      %v2072 = vpop.f32.mrb[0].mxu0
      %v2073 = vpop.f32.mrb[0].mxu0
      %v2074 = vadd.f32 0.0, %v2073
      %v2075 = vpop.f32.mrb[0].mxu0
      %2076 = vmatprep.mubr.bf16.mxu0 0
      %2077 = vmatmul.mubr.bf16.gmra.mrb[0].mxu0 %v1591
      %v2078 = vpop.f32.mrb[0].mxu0
      %v2079 = vadd.f32 0.0, %v2078
      %v2080 = vpop.f32.mrb[0].mxu0
      %v2081 = vpop.f32.mrb[0].mxu0
      %v2082 = vadd.f32 0.0, %v2081
      %v2083 = vpop.f32.mrb[0].mxu0
      %2084 = vmatprep.mubr.bf16.mxu0 0
      %2085 = vmatmul.mubr.bf16.gmra.mrb[0].mxu0 %v1594
      %v2086 = vpop.f32.mrb[0].mxu0
      %v2087 = vadd.f32 0.0, %v2086
      %v2088 = vpop.f32.mrb[0].mxu0
      %v2089 = vpop.f32.mrb[0].mxu0
      %v2090 = vadd.f32 0.0, %v2089
      %v2091 = vpop.f32.mrb[0].mxu0
      %2092 = vmatprep.mubr.bf16.mxu0 0
      %2093 = vmatmul.mubr.bf16.gmra.mrb[0].mxu0 %v1970
      %v2094 = vpop.f32.mrb[0].mxu0
      %v2095 = vadd.f32 0.0, %v2094
      %v2096 = vpop.f32.mrb[0].mxu0
      %v2097 = vpop.f32.mrb[0].mxu0
      %v2098 = vadd.f32 0.0, %v2097
      %v2099 = vpop.f32.mrb[0].mxu0
      %2100 = vmatprep.mubr.bf16.mxu0 0
      %2101 = vmatmul.mubr.bf16.gmra.mrb[0].mxu0 %v1973
      %v2102 = vpop.f32.mrb[0].mxu0
      %v2103 = vadd.f32 0.0, %v2102
      %v2104 = vpop.f32.mrb[0].mxu0
      %v2105 = vpop.f32.mrb[0].mxu0
      %v2106 = vadd.f32 0.0, %v2105
      %v2107 = vpop.f32.mrb[0].mxu0
      %2108 = vmatprep.mubr.bf16.mxu0 0
      %2109 = vmatmul.mubr.bf16.gmra.mrb[0].mxu0 %v1976
      %v2110 = vpop.f32.mrb[0].mxu0
      %v2111 = vadd.f32 0.0, %v2110
      %v2112 = vpop.f32.mrb[0].mxu0
      %v2113 = vpop.f32.mrb[0].mxu0
      %v2114 = vadd.f32 0.0, %v2113
      %v2115 = vpop.f32.mrb[0].mxu0
      %2116 = vmatprep.mubr.bf16.mxu0 0
      %2117 = vmatmul.mubr.bf16.gmra.mrb[0].mxu0 %v1979
      %v2118 = vpop.f32.mrb[0].mxu0
      %v2119 = vadd.f32 0.0, %v2118
      %v2120 = vpop.f32.mrb[0].mxu0
      %v2121 = vpop.f32.mrb[0].mxu0
      %v2122 = vadd.f32 0.0, %v2121
      %v2123 = vpop.f32.mrb[0].mxu0
      %2124 = vmatprep.mubr.bf16.mxu0 0
      %2125 = vmatmul.mubr.bf16.gmra.mrb[0].mxu0 %v1982
      %v2126 = vpop.f32.mrb[0].mxu0
      %v2127 = vadd.f32 0.0, %v2126
      %v2128 = vpop.f32.mrb[0].mxu0
      %v2129 = vpop.f32.mrb[0].mxu0
      %v2130 = vadd.f32 0.0, %v2129
      %v2131 = vpop.f32.mrb[0].mxu0
      %2132 = vmatprep.mubr.bf16.mxu0 0
      %2133 = vmatmul.mubr.bf16.gmra.mrb[0].mxu0 %v1985
      %v2134 = vpop.f32.mrb[0].mxu0
      %v2135 = vadd.f32 0.0, %v2134
      %v2136 = vpop.f32.mrb[0].mxu0
      %v2137 = vpop.f32.mrb[0].mxu0
      %v2138 = vadd.f32 0.0, %v2137
      %v2139 = vpop.f32.mrb[0].mxu0
      %2140 = vmatprep.mubr.bf16.mxu0 0
      %2141 = vmatmul.mubr.bf16.gmra.mrb[0].mxu0 %v1988
      %v2142 = vpop.f32.mrb[0].mxu0
      %v2143 = vadd.f32 0.0, %v2142
      %v2144 = vpop.f32.mrb[0].mxu0
      %v2145 = vpop.f32.mrb[0].mxu0
      %v2146 = vadd.f32 0.0, %v2145
      %v2147 = vpop.f32.mrb[0].mxu0
      %2148 = vmatprep.mubr.bf16.mxu0 0
      %2149 = vmatmul.mubr.bf16.gmra.mrb[0].mxu0 %v1991
      %v2150 = vpop.f32.mrb[0].mxu0
      %v2151 = vadd.f32 0.0, %v2150
      %v2152 = vpop.f32.mrb[0].mxu0
      %v2153 = vpop.f32.mrb[0].mxu0
      %v2154 = vadd.f32 0.0, %v2153
      %v2155 = vpop.f32.mrb[0].mxu0
      %2156 = vdwg.mxu0
      %v2157 = vadd.f32 %v1832, %v2031
      %v2158 = vadd.f32 %v1835, %v2034
      %v2159 = vadd.f32 %v1840, %v2039
      %v2160 = vadd.f32 %v1843, %v2042
      %v2161 = vadd.f32 %v1848, %v2047
      %v2162 = vadd.f32 %v1851, %v2050
      %v2163 = vadd.f32 %v1856, %v2055
      %v2164 = vadd.f32 %v1859, %v2058
      %v2165 = vadd.f32 %v1864, %v2063
      %v2166 = vadd.f32 %v1867, %v2066
      %v2167 = vadd.f32 %v1872, %v2071
      %v2168 = vadd.f32 %v1875, %v2074
      %v2169 = vadd.f32 %v1880, %v2079
      %v2170 = vadd.f32 %v1883, %v2082
      %v2171 = vadd.f32 %v1888, %v2087
      %v2172 = vadd.f32 %v1891, %v2090
      %v2173 = vadd.f32 %v1896, %v2095
      %v2174 = vadd.f32 %v1899, %v2098
      %v2175 = vadd.f32 %v1904, %v2103
      %v2176 = vadd.f32 %v1907, %v2106
      %v2177 = vadd.f32 %v1912, %v2111
      %v2178 = vadd.f32 %v1915, %v2114
      %v2179 = vadd.f32 %v1920, %v2119
      %v2180 = vadd.f32 %v1923, %v2122
      %v2181 = vadd.f32 %v1928, %v2127
      %v2182 = vadd.f32 %v1931, %v2130
      %v2183 = vadd.f32 %v1936, %v2135
      %v2184 = vadd.f32 %v1939, %v2138
      %v2185 = vadd.f32 %v1944, %v2143
      %v2186 = vadd.f32 %v1947, %v2146
      %v2187 = vadd.f32 %v1952, %v2151
      %v2188 = vadd.f32 %v1955, %v2154
      %v2189 = vadd.f32 %v1465, %v2157
      %v2190 = vadd.f32 %v1466, %v2158
      %v2191 = vadd.f32 %v1467, %v2159
      %v2192 = vadd.f32 %v1468, %v2160
      %v2193 = vadd.f32 %v1469, %v2161
      %v2194 = vadd.f32 %v1470, %v2162
      %v2195 = vadd.f32 %v1471, %v2163
      %v2196 = vadd.f32 %v1472, %v2164
      %v2197 = vadd.f32 %v1473, %v2165
      %v2198 = vadd.f32 %v1474, %v2166
      %v2199 = vadd.f32 %v1475, %v2167
      %v2200 = vadd.f32 %v1476, %v2168
      %v2201 = vadd.f32 %v1477, %v2169
      %v2202 = vadd.f32 %v1478, %v2170
      %v2203 = vadd.f32 %v1479, %v2171
      %v2204 = vadd.f32 %v1480, %v2172
      %v2205 = vadd.f32 %v1481, %v2173
      %v2206 = vadd.f32 %v1482, %v2174
      %v2207 = vadd.f32 %v1483, %v2175
      %v2208 = vadd.f32 %v1484, %v2176
      %v2209 = vadd.f32 %v1485, %v2177
      %v2210 = vadd.f32 %v1486, %v2178
      %v2211 = vadd.f32 %v1487, %v2179
      %v2212 = vadd.f32 %v1488, %v2180
      %v2213 = vadd.f32 %v1489, %v2181
      %v2214 = vadd.f32 %v1490, %v2182
      %v2215 = vadd.f32 %v1491, %v2183
      %v2216 = vadd.f32 %v1492, %v2184
      %v2217 = vadd.f32 %v1493, %v2185
      %v2218 = vadd.f32 %v1494, %v2186
      %v2219 = vadd.f32 %v1495, %v2187
      %v2220 = vadd.f32 %v1496, %v2188
      %v2222 = vshrl.u32 %v253, 16
      %v2224 = vrot.slane %v2222, 4
      %v2225 = vshll.u32 %v253, 16
      %v2227 = vrot.slane %v2225, 5
      %v2228 = vor.u32 %v2224, %v2227
      %v2229 = vrot.slane %v2228, 4
      %v2231 = vshll.u32 %v254, 16
      %v2233 = vrot.slane %v2231, 5
      %v2234 = vsel %vm293, %v2229, %v2233
      %v2236 = vshrl.u32 %v289, 16
      %v2238 = vrot.slane %v2236, 4
      %v2239 = vshll.u32 %v289, 16
      %v2241 = vrot.slane %v2239, 5
      %v2242 = vor.u32 %v2238, %v2241
      %v2243 = vrot.slane %v2242, 4
      %v2245 = vshll.u32 %v290, 16
      %v2247 = vrot.slane %v2245, 5
      %v2248 = vsel %vm293, %v2243, %v2247
      %s2249 = scalar_lea.vmem %s2, 12
      %v2250 = vld [vmem:[%s2249] sm:$0x3]
      %s2251 = scalar_lea.vmem %s2, 14
      %v2252 = vld [vmem:[%s2251] sm:$0x3]
      %v2254 = vunpack.c.l.b16 %v289
      %v2255 = vunpack.c.l.b16 %v2234
      %v2256 = vpack.c.b16 %v2254, %v1530
      %v2257 = vpack.c.b16 %v2255, %v1531
      %v2259 = vsel %vm809, %v2256, 0
      %v2262 = vsel %vm809, %v2257, 0
      %v2265 = vsel %vm858, %v2252, 0
      %2267 = vmatprep.subr.bf16.mxu0 0
      %2268 = vmatpush1.bf16.msra.mxu0 %v2265
      %2269 = vmatprep.subr.bf16.mxu0 0
      %2270 = vmatpush1.bf16.msra.mxu0 0
      %2271 = vmatprep.subr.bf16.mxu0 0
      %2272 = vmatpush1.bf16.msra.mxu0 0
      %2273 = vmatprep.subr.bf16.mxu0 0
      %2274 = vmatpush1.bf16.msra.mxu0 0
      %2275 = vmatprep.subr.bf16.mxu0 0
      %2276 = vmatpush1.bf16.msra.mxu0 0
      %2277 = vmatprep.subr.bf16.mxu0 0
      %2278 = vmatpush1.bf16.msra.mxu0 0
      %2279 = vmatprep.subr.bf16.mxu0 0
      %2280 = vmatpush1.bf16.msra.mxu0 0
      %2281 = vmatprep.subr.bf16.mxu0 0
      %2282 = vmatpush1.bf16.msra.mxu0 0
      %2283 = vmatprep.subr.bf16.mxu0 0
      %2284 = vmatpush1.bf16.msra.mxu0 0
      %2285 = vmatprep.subr.bf16.mxu0 0
      %2286 = vmatpush1.bf16.msra.mxu0 0
      %2287 = vmatprep.subr.bf16.mxu0 0
      %2288 = vmatpush1.bf16.msra.mxu0 0
      %2289 = vmatprep.subr.bf16.mxu0 0
      %2290 = vmatpush1.bf16.msra.mxu0 0
      %2291 = vmatprep.subr.bf16.mxu0 0
      %2292 = vmatpush1.bf16.msra.mxu0 0
      %2293 = vmatprep.subr.bf16.mxu0 0
      %2294 = vmatpush1.bf16.msra.mxu0 0
      %2295 = vmatprep.subr.bf16.mxu0 0
      %2296 = vmatpush1.bf16.msra.mxu0 0
      %2297 = vmatprep.subr.bf16.mxu0 0
      %2298 = vmatpush1.bf16.msra.mxu0 0
      %2299 = vmatprep.mubr.bf16.mxu0 0
      %2300 = vmatmul.mubr.bf16.gmra.mrb[0].mxu0 %v814
      %v2301 = vpop.f32.mrb[0].mxu0
      %v2302 = vadd.f32 0.0, %v2301
      %v2303 = vpop.f32.mrb[0].mxu0
      %v2304 = vpop.f32.mrb[0].mxu0
      %v2305 = vadd.f32 0.0, %v2304
      %v2306 = vpop.f32.mrb[0].mxu0
      %2307 = vmatprep.mubr.bf16.mxu0 0
      %2308 = vmatmul.mubr.bf16.gmra.mrb[0].mxu0 %v817
      %v2309 = vpop.f32.mrb[0].mxu0
      %v2310 = vadd.f32 0.0, %v2309
      %v2311 = vpop.f32.mrb[0].mxu0
      %v2312 = vpop.f32.mrb[0].mxu0
      %v2313 = vadd.f32 0.0, %v2312
      %v2314 = vpop.f32.mrb[0].mxu0
      %2315 = vmatprep.mubr.bf16.mxu0 0
      %2316 = vmatmul.mubr.bf16.gmra.mrb[0].mxu0 %v820
      %v2317 = vpop.f32.mrb[0].mxu0
      %v2318 = vadd.f32 0.0, %v2317
      %v2319 = vpop.f32.mrb[0].mxu0
      %v2320 = vpop.f32.mrb[0].mxu0
      %v2321 = vadd.f32 0.0, %v2320
      %v2322 = vpop.f32.mrb[0].mxu0
      %2323 = vmatprep.mubr.bf16.mxu0 0
      %2324 = vmatmul.mubr.bf16.gmra.mrb[0].mxu0 %v823
      %v2325 = vpop.f32.mrb[0].mxu0
      %v2326 = vadd.f32 0.0, %v2325
      %v2327 = vpop.f32.mrb[0].mxu0
      %v2328 = vpop.f32.mrb[0].mxu0
      %v2329 = vadd.f32 0.0, %v2328
      %v2330 = vpop.f32.mrb[0].mxu0
      %2331 = vmatprep.mubr.bf16.mxu0 0
      %2332 = vmatmul.mubr.bf16.gmra.mrb[0].mxu0 %v826
      %v2333 = vpop.f32.mrb[0].mxu0
      %v2334 = vadd.f32 0.0, %v2333
      %v2335 = vpop.f32.mrb[0].mxu0
      %v2336 = vpop.f32.mrb[0].mxu0
      %v2337 = vadd.f32 0.0, %v2336
      %v2338 = vpop.f32.mrb[0].mxu0
      %2339 = vmatprep.mubr.bf16.mxu0 0
      %2340 = vmatmul.mubr.bf16.gmra.mrb[0].mxu0 %v829
      %v2341 = vpop.f32.mrb[0].mxu0
      %v2342 = vadd.f32 0.0, %v2341
      %v2343 = vpop.f32.mrb[0].mxu0
      %v2344 = vpop.f32.mrb[0].mxu0
      %v2345 = vadd.f32 0.0, %v2344
      %v2346 = vpop.f32.mrb[0].mxu0
      %2347 = vmatprep.mubr.bf16.mxu0 0
      %2348 = vmatmul.mubr.bf16.gmra.mrb[0].mxu0 %v832
      %v2349 = vpop.f32.mrb[0].mxu0
      %v2350 = vadd.f32 0.0, %v2349
      %v2351 = vpop.f32.mrb[0].mxu0
      %v2352 = vpop.f32.mrb[0].mxu0
      %v2353 = vadd.f32 0.0, %v2352
      %v2354 = vpop.f32.mrb[0].mxu0
      %2355 = vmatprep.mubr.bf16.mxu0 0
      %2356 = vmatmul.mubr.bf16.gmra.mrb[0].mxu0 %v2259
      %v2357 = vpop.f32.mrb[0].mxu0
      %v2358 = vadd.f32 0.0, %v2357
      %v2359 = vpop.f32.mrb[0].mxu0
      %v2360 = vpop.f32.mrb[0].mxu0
      %v2361 = vadd.f32 0.0, %v2360
      %v2362 = vpop.f32.mrb[0].mxu0
      %2363 = vmatprep.mubr.bf16.mxu0 0
      %2364 = vmatmul.mubr.bf16.gmra.mrb[0].mxu0 %v838
      %v2365 = vpop.f32.mrb[0].mxu0
      %v2366 = vadd.f32 0.0, %v2365
      %v2367 = vpop.f32.mrb[0].mxu0
      %v2368 = vpop.f32.mrb[0].mxu0
      %v2369 = vadd.f32 0.0, %v2368
      %v2370 = vpop.f32.mrb[0].mxu0
      %2371 = vmatprep.mubr.bf16.mxu0 0
      %2372 = vmatmul.mubr.bf16.gmra.mrb[0].mxu0 %v841
      %v2373 = vpop.f32.mrb[0].mxu0
      %v2374 = vadd.f32 0.0, %v2373
      %v2375 = vpop.f32.mrb[0].mxu0
      %v2376 = vpop.f32.mrb[0].mxu0
      %v2377 = vadd.f32 0.0, %v2376
      %v2378 = vpop.f32.mrb[0].mxu0
      %2379 = vmatprep.mubr.bf16.mxu0 0
      %2380 = vmatmul.mubr.bf16.gmra.mrb[0].mxu0 %v844
      %v2381 = vpop.f32.mrb[0].mxu0
      %v2382 = vadd.f32 0.0, %v2381
      %v2383 = vpop.f32.mrb[0].mxu0
      %v2384 = vpop.f32.mrb[0].mxu0
      %v2385 = vadd.f32 0.0, %v2384
      %v2386 = vpop.f32.mrb[0].mxu0
      %2387 = vmatprep.mubr.bf16.mxu0 0
      %2388 = vmatmul.mubr.bf16.gmra.mrb[0].mxu0 %v847
      %v2389 = vpop.f32.mrb[0].mxu0
      %v2390 = vadd.f32 0.0, %v2389
      %v2391 = vpop.f32.mrb[0].mxu0
      %v2392 = vpop.f32.mrb[0].mxu0
      %v2393 = vadd.f32 0.0, %v2392
      %v2394 = vpop.f32.mrb[0].mxu0
      %2395 = vmatprep.mubr.bf16.mxu0 0
      %2396 = vmatmul.mubr.bf16.gmra.mrb[0].mxu0 %v850
      %v2397 = vpop.f32.mrb[0].mxu0
      %v2398 = vadd.f32 0.0, %v2397
      %v2399 = vpop.f32.mrb[0].mxu0
      %v2400 = vpop.f32.mrb[0].mxu0
      %v2401 = vadd.f32 0.0, %v2400
      %v2402 = vpop.f32.mrb[0].mxu0
      %2403 = vmatprep.mubr.bf16.mxu0 0
      %2404 = vmatmul.mubr.bf16.gmra.mrb[0].mxu0 %v853
      %v2405 = vpop.f32.mrb[0].mxu0
      %v2406 = vadd.f32 0.0, %v2405
      %v2407 = vpop.f32.mrb[0].mxu0
      %v2408 = vpop.f32.mrb[0].mxu0
      %v2409 = vadd.f32 0.0, %v2408
      %v2410 = vpop.f32.mrb[0].mxu0
      %2411 = vmatprep.mubr.bf16.mxu0 0
      %2412 = vmatmul.mubr.bf16.gmra.mrb[0].mxu0 %v856
      %v2413 = vpop.f32.mrb[0].mxu0
      %v2414 = vadd.f32 0.0, %v2413
      %v2415 = vpop.f32.mrb[0].mxu0
      %v2416 = vpop.f32.mrb[0].mxu0
      %v2417 = vadd.f32 0.0, %v2416
      %v2418 = vpop.f32.mrb[0].mxu0
      %2419 = vmatprep.mubr.bf16.mxu0 0
      %2420 = vmatmul.mubr.bf16.gmra.mrb[0].mxu0 %v2262
      %v2421 = vpop.f32.mrb[0].mxu0
      %v2422 = vadd.f32 0.0, %v2421
      %v2423 = vpop.f32.mrb[0].mxu0
      %v2424 = vpop.f32.mrb[0].mxu0
      %v2425 = vadd.f32 0.0, %v2424
      %v2426 = vpop.f32.mrb[0].mxu0
      %2427 = vdwg.mxu0
      %v2429 = vunpack.c.l.b16 %v253
      %v2430 = vpack.c.b16 %v2429, %v1761
      %v2432 = vsel %vm809, %v2430, 0
      %v2435 = vsel %vm858, %v2250, 0
      %2437 = vmatprep.subr.bf16.mxu0 0
      %2438 = vmatpush1.bf16.msra.mxu0 %v2435
      %2439 = vmatprep.subr.bf16.mxu0 0
      %2440 = vmatpush1.bf16.msra.mxu0 0
      %2441 = vmatprep.subr.bf16.mxu0 0
      %2442 = vmatpush1.bf16.msra.mxu0 0
      %2443 = vmatprep.subr.bf16.mxu0 0
      %2444 = vmatpush1.bf16.msra.mxu0 0
      %2445 = vmatprep.subr.bf16.mxu0 0
      %2446 = vmatpush1.bf16.msra.mxu0 0
      %2447 = vmatprep.subr.bf16.mxu0 0
      %2448 = vmatpush1.bf16.msra.mxu0 0
      %2449 = vmatprep.subr.bf16.mxu0 0
      %2450 = vmatpush1.bf16.msra.mxu0 0
      %2451 = vmatprep.subr.bf16.mxu0 0
      %2452 = vmatpush1.bf16.msra.mxu0 0
      %2453 = vmatprep.subr.bf16.mxu0 0
      %2454 = vmatpush1.bf16.msra.mxu0 0
      %2455 = vmatprep.subr.bf16.mxu0 0
      %2456 = vmatpush1.bf16.msra.mxu0 0
      %2457 = vmatprep.subr.bf16.mxu0 0
      %2458 = vmatpush1.bf16.msra.mxu0 0
      %2459 = vmatprep.subr.bf16.mxu0 0
      %2460 = vmatpush1.bf16.msra.mxu0 0
      %2461 = vmatprep.subr.bf16.mxu0 0
      %2462 = vmatpush1.bf16.msra.mxu0 0
      %2463 = vmatprep.subr.bf16.mxu0 0
      %2464 = vmatpush1.bf16.msra.mxu0 0
      %2465 = vmatprep.subr.bf16.mxu0 0
      %2466 = vmatpush1.bf16.msra.mxu0 0
      %2467 = vmatprep.subr.bf16.mxu0 0
      %2468 = vmatpush1.bf16.msra.mxu0 0
      %2469 = vmatprep.mubr.bf16.mxu0 0
      %2470 = vmatmul.mubr.bf16.gmra.mrb[0].mxu0 %v1067
      %v2471 = vpop.f32.mrb[0].mxu0
      %v2472 = vadd.f32 %v2302, %v2471
      %v2473 = vpop.f32.mrb[0].mxu0
      %v2474 = vpop.f32.mrb[0].mxu0
      %v2475 = vadd.f32 %v2305, %v2474
      %v2476 = vpop.f32.mrb[0].mxu0
      %2477 = vmatprep.mubr.bf16.mxu0 0
      %2478 = vmatmul.mubr.bf16.gmra.mrb[0].mxu0 %v1070
      %v2479 = vpop.f32.mrb[0].mxu0
      %v2480 = vadd.f32 %v2310, %v2479
      %v2481 = vpop.f32.mrb[0].mxu0
      %v2482 = vpop.f32.mrb[0].mxu0
      %v2483 = vadd.f32 %v2313, %v2482
      %v2484 = vpop.f32.mrb[0].mxu0
      %2485 = vmatprep.mubr.bf16.mxu0 0
      %2486 = vmatmul.mubr.bf16.gmra.mrb[0].mxu0 %v1073
      %v2487 = vpop.f32.mrb[0].mxu0
      %v2488 = vadd.f32 %v2318, %v2487
      %v2489 = vpop.f32.mrb[0].mxu0
      %v2490 = vpop.f32.mrb[0].mxu0
      %v2491 = vadd.f32 %v2321, %v2490
      %v2492 = vpop.f32.mrb[0].mxu0
      %2493 = vmatprep.mubr.bf16.mxu0 0
      %2494 = vmatmul.mubr.bf16.gmra.mrb[0].mxu0 %v1076
      %v2495 = vpop.f32.mrb[0].mxu0
      %v2496 = vadd.f32 %v2326, %v2495
      %v2497 = vpop.f32.mrb[0].mxu0
      %v2498 = vpop.f32.mrb[0].mxu0
      %v2499 = vadd.f32 %v2329, %v2498
      %v2500 = vpop.f32.mrb[0].mxu0
      %2501 = vmatprep.mubr.bf16.mxu0 0
      %2502 = vmatmul.mubr.bf16.gmra.mrb[0].mxu0 %v1079
      %v2503 = vpop.f32.mrb[0].mxu0
      %v2504 = vadd.f32 %v2334, %v2503
      %v2505 = vpop.f32.mrb[0].mxu0
      %v2506 = vpop.f32.mrb[0].mxu0
      %v2507 = vadd.f32 %v2337, %v2506
      %v2508 = vpop.f32.mrb[0].mxu0
      %2509 = vmatprep.mubr.bf16.mxu0 0
      %2510 = vmatmul.mubr.bf16.gmra.mrb[0].mxu0 %v1082
      %v2511 = vpop.f32.mrb[0].mxu0
      %v2512 = vadd.f32 %v2342, %v2511
      %v2513 = vpop.f32.mrb[0].mxu0
      %v2514 = vpop.f32.mrb[0].mxu0
      %v2515 = vadd.f32 %v2345, %v2514
      %v2516 = vpop.f32.mrb[0].mxu0
      %2517 = vmatprep.mubr.bf16.mxu0 0
      %2518 = vmatmul.mubr.bf16.gmra.mrb[0].mxu0 %v1085
      %v2519 = vpop.f32.mrb[0].mxu0
      %v2520 = vadd.f32 %v2350, %v2519
      %v2521 = vpop.f32.mrb[0].mxu0
      %v2522 = vpop.f32.mrb[0].mxu0
      %v2523 = vadd.f32 %v2353, %v2522
      %v2524 = vpop.f32.mrb[0].mxu0
      %2525 = vmatprep.mubr.bf16.mxu0 0
      %2526 = vmatmul.mubr.bf16.gmra.mrb[0].mxu0 %v2432
      %v2527 = vpop.f32.mrb[0].mxu0
      %v2528 = vadd.f32 %v2358, %v2527
      %v2529 = vpop.f32.mrb[0].mxu0
      %v2530 = vpop.f32.mrb[0].mxu0
      %v2531 = vadd.f32 %v2361, %v2530
      %v2532 = vpop.f32.mrb[0].mxu0
      %2533 = vmatprep.mubr.bf16.mxu0 0
      %2534 = vmatmul.mubr.bf16.gmra.mrb[0].mxu0 %v814
      %v2535 = vpop.f32.mrb[0].mxu0
      %v2536 = vadd.f32 %v2366, %v2535
      %v2537 = vpop.f32.mrb[0].mxu0
      %v2538 = vpop.f32.mrb[0].mxu0
      %v2539 = vadd.f32 %v2369, %v2538
      %v2540 = vpop.f32.mrb[0].mxu0
      %2541 = vmatprep.mubr.bf16.mxu0 0
      %2542 = vmatmul.mubr.bf16.gmra.mrb[0].mxu0 %v817
      %v2543 = vpop.f32.mrb[0].mxu0
      %v2544 = vadd.f32 %v2374, %v2543
      %v2545 = vpop.f32.mrb[0].mxu0
      %v2546 = vpop.f32.mrb[0].mxu0
      %v2547 = vadd.f32 %v2377, %v2546
      %v2548 = vpop.f32.mrb[0].mxu0
      %2549 = vmatprep.mubr.bf16.mxu0 0
      %2550 = vmatmul.mubr.bf16.gmra.mrb[0].mxu0 %v820
      %v2551 = vpop.f32.mrb[0].mxu0
      %v2552 = vadd.f32 %v2382, %v2551
      %v2553 = vpop.f32.mrb[0].mxu0
      %v2554 = vpop.f32.mrb[0].mxu0
      %v2555 = vadd.f32 %v2385, %v2554
      %v2556 = vpop.f32.mrb[0].mxu0
      %2557 = vmatprep.mubr.bf16.mxu0 0
      %2558 = vmatmul.mubr.bf16.gmra.mrb[0].mxu0 %v823
      %v2559 = vpop.f32.mrb[0].mxu0
      %v2560 = vadd.f32 %v2390, %v2559
      %v2561 = vpop.f32.mrb[0].mxu0
      %v2562 = vpop.f32.mrb[0].mxu0
      %v2563 = vadd.f32 %v2393, %v2562
      %v2564 = vpop.f32.mrb[0].mxu0
      %2565 = vmatprep.mubr.bf16.mxu0 0
      %2566 = vmatmul.mubr.bf16.gmra.mrb[0].mxu0 %v826
      %v2567 = vpop.f32.mrb[0].mxu0
      %v2568 = vadd.f32 %v2398, %v2567
      %v2569 = vpop.f32.mrb[0].mxu0
      %v2570 = vpop.f32.mrb[0].mxu0
      %v2571 = vadd.f32 %v2401, %v2570
      %v2572 = vpop.f32.mrb[0].mxu0
      %2573 = vmatprep.mubr.bf16.mxu0 0
      %2574 = vmatmul.mubr.bf16.gmra.mrb[0].mxu0 %v829
      %v2575 = vpop.f32.mrb[0].mxu0
      %v2576 = vadd.f32 %v2406, %v2575
      %v2577 = vpop.f32.mrb[0].mxu0
      %v2578 = vpop.f32.mrb[0].mxu0
      %v2579 = vadd.f32 %v2409, %v2578
      %v2580 = vpop.f32.mrb[0].mxu0
      %2581 = vmatprep.mubr.bf16.mxu0 0
      %2582 = vmatmul.mubr.bf16.gmra.mrb[0].mxu0 %v832
      %v2583 = vpop.f32.mrb[0].mxu0
      %v2584 = vadd.f32 %v2414, %v2583
      %v2585 = vpop.f32.mrb[0].mxu0
      %v2586 = vpop.f32.mrb[0].mxu0
      %v2587 = vadd.f32 %v2417, %v2586
      %v2588 = vpop.f32.mrb[0].mxu0
      %2589 = vmatprep.mubr.bf16.mxu0 0
      %2590 = vmatmul.mubr.bf16.gmra.mrb[0].mxu0 %v2259
      %v2591 = vpop.f32.mrb[0].mxu0
      %v2592 = vadd.f32 %v2422, %v2591
      %v2593 = vpop.f32.mrb[0].mxu0
      %v2594 = vpop.f32.mrb[0].mxu0
      %v2595 = vadd.f32 %v2425, %v2594
      %v2596 = vpop.f32.mrb[0].mxu0
      %2597 = vdwg.mxu0
      %s2598 = scalar_lea.vmem %s2, 16
      %v2599 = vld [vmem:[%s2598] sm:$0x3]
      %v2600 = vunpack.c.l.b16 %v2248
      %v2601 = vpack.c.b16 %v2600, %v1960
      %v2603 = vsel %vm809, %v2601, 0
      %v2606 = vsel %vm858, %v2599, 0
      %2608 = vmatprep.subr.bf16.mxu0 0
      %2609 = vmatpush1.bf16.msra.mxu0 %v2606
      %2610 = vmatprep.subr.bf16.mxu0 0
      %2611 = vmatpush1.bf16.msra.mxu0 0
      %2612 = vmatprep.subr.bf16.mxu0 0
      %2613 = vmatpush1.bf16.msra.mxu0 0
      %2614 = vmatprep.subr.bf16.mxu0 0
      %2615 = vmatpush1.bf16.msra.mxu0 0
      %2616 = vmatprep.subr.bf16.mxu0 0
      %2617 = vmatpush1.bf16.msra.mxu0 0
      %2618 = vmatprep.subr.bf16.mxu0 0
      %2619 = vmatpush1.bf16.msra.mxu0 0
      %2620 = vmatprep.subr.bf16.mxu0 0
      %2621 = vmatpush1.bf16.msra.mxu0 0
      %2622 = vmatprep.subr.bf16.mxu0 0
      %2623 = vmatpush1.bf16.msra.mxu0 0
      %2624 = vmatprep.subr.bf16.mxu0 0
      %2625 = vmatpush1.bf16.msra.mxu0 0
      %2626 = vmatprep.subr.bf16.mxu0 0
      %2627 = vmatpush1.bf16.msra.mxu0 0
      %2628 = vmatprep.subr.bf16.mxu0 0
      %2629 = vmatpush1.bf16.msra.mxu0 0
      %2630 = vmatprep.subr.bf16.mxu0 0
      %2631 = vmatpush1.bf16.msra.mxu0 0
      %2632 = vmatprep.subr.bf16.mxu0 0
      %2633 = vmatpush1.bf16.msra.mxu0 0
      %2634 = vmatprep.subr.bf16.mxu0 0
      %2635 = vmatpush1.bf16.msra.mxu0 0
      %2636 = vmatprep.subr.bf16.mxu0 0
      %2637 = vmatpush1.bf16.msra.mxu0 0
      %2638 = vmatprep.subr.bf16.mxu0 0
      %2639 = vmatpush1.bf16.msra.mxu0 0
      %2640 = vmatprep.mubr.bf16.mxu0 0
      %2641 = vmatmul.mubr.bf16.gmra.mrb[0].mxu0 %v838
      %v2642 = vpop.f32.mrb[0].mxu0
      %v2643 = vadd.f32 0.0, %v2642
      %v2644 = vpop.f32.mrb[0].mxu0
      %v2645 = vpop.f32.mrb[0].mxu0
      %v2646 = vadd.f32 0.0, %v2645
      %v2647 = vpop.f32.mrb[0].mxu0
      %2648 = vmatprep.mubr.bf16.mxu0 0
      %2649 = vmatmul.mubr.bf16.gmra.mrb[0].mxu0 %v841
      %v2650 = vpop.f32.mrb[0].mxu0
      %v2651 = vadd.f32 0.0, %v2650
      %v2652 = vpop.f32.mrb[0].mxu0
      %v2653 = vpop.f32.mrb[0].mxu0
      %v2654 = vadd.f32 0.0, %v2653
      %v2655 = vpop.f32.mrb[0].mxu0
      %2656 = vmatprep.mubr.bf16.mxu0 0
      %2657 = vmatmul.mubr.bf16.gmra.mrb[0].mxu0 %v844
      %v2658 = vpop.f32.mrb[0].mxu0
      %v2659 = vadd.f32 0.0, %v2658
      %v2660 = vpop.f32.mrb[0].mxu0
      %v2661 = vpop.f32.mrb[0].mxu0
      %v2662 = vadd.f32 0.0, %v2661
      %v2663 = vpop.f32.mrb[0].mxu0
      %2664 = vmatprep.mubr.bf16.mxu0 0
      %2665 = vmatmul.mubr.bf16.gmra.mrb[0].mxu0 %v847
      %v2666 = vpop.f32.mrb[0].mxu0
      %v2667 = vadd.f32 0.0, %v2666
      %v2668 = vpop.f32.mrb[0].mxu0
      %v2669 = vpop.f32.mrb[0].mxu0
      %v2670 = vadd.f32 0.0, %v2669
      %v2671 = vpop.f32.mrb[0].mxu0
      %2672 = vmatprep.mubr.bf16.mxu0 0
      %2673 = vmatmul.mubr.bf16.gmra.mrb[0].mxu0 %v850
      %v2674 = vpop.f32.mrb[0].mxu0
      %v2675 = vadd.f32 0.0, %v2674
      %v2676 = vpop.f32.mrb[0].mxu0
      %v2677 = vpop.f32.mrb[0].mxu0
      %v2678 = vadd.f32 0.0, %v2677
      %v2679 = vpop.f32.mrb[0].mxu0
      %2680 = vmatprep.mubr.bf16.mxu0 0
      %2681 = vmatmul.mubr.bf16.gmra.mrb[0].mxu0 %v853
      %v2682 = vpop.f32.mrb[0].mxu0
      %v2683 = vadd.f32 0.0, %v2682
      %v2684 = vpop.f32.mrb[0].mxu0
      %v2685 = vpop.f32.mrb[0].mxu0
      %v2686 = vadd.f32 0.0, %v2685
      %v2687 = vpop.f32.mrb[0].mxu0
      %2688 = vmatprep.mubr.bf16.mxu0 0
      %2689 = vmatmul.mubr.bf16.gmra.mrb[0].mxu0 %v856
      %v2690 = vpop.f32.mrb[0].mxu0
      %v2691 = vadd.f32 0.0, %v2690
      %v2692 = vpop.f32.mrb[0].mxu0
      %v2693 = vpop.f32.mrb[0].mxu0
      %v2694 = vadd.f32 0.0, %v2693
      %v2695 = vpop.f32.mrb[0].mxu0
      %2696 = vmatprep.mubr.bf16.mxu0 0
      %2697 = vmatmul.mubr.bf16.gmra.mrb[0].mxu0 %v2262
      %v2698 = vpop.f32.mrb[0].mxu0
      %v2699 = vadd.f32 0.0, %v2698
      %v2700 = vpop.f32.mrb[0].mxu0
      %v2701 = vpop.f32.mrb[0].mxu0
      %v2702 = vadd.f32 0.0, %v2701
      %v2703 = vpop.f32.mrb[0].mxu0
      %2704 = vmatprep.mubr.bf16.mxu0 0
      %2705 = vmatmul.mubr.bf16.gmra.mrb[0].mxu0 %v1281
      %v2706 = vpop.f32.mrb[0].mxu0
      %v2707 = vadd.f32 0.0, %v2706
      %v2708 = vpop.f32.mrb[0].mxu0
      %v2709 = vpop.f32.mrb[0].mxu0
      %v2710 = vadd.f32 0.0, %v2709
      %v2711 = vpop.f32.mrb[0].mxu0
      %2712 = vmatprep.mubr.bf16.mxu0 0
      %2713 = vmatmul.mubr.bf16.gmra.mrb[0].mxu0 %v1284
      %v2714 = vpop.f32.mrb[0].mxu0
      %v2715 = vadd.f32 0.0, %v2714
      %v2716 = vpop.f32.mrb[0].mxu0
      %v2717 = vpop.f32.mrb[0].mxu0
      %v2718 = vadd.f32 0.0, %v2717
      %v2719 = vpop.f32.mrb[0].mxu0
      %2720 = vmatprep.mubr.bf16.mxu0 0
      %2721 = vmatmul.mubr.bf16.gmra.mrb[0].mxu0 %v1287
      %v2722 = vpop.f32.mrb[0].mxu0
      %v2723 = vadd.f32 0.0, %v2722
      %v2724 = vpop.f32.mrb[0].mxu0
      %v2725 = vpop.f32.mrb[0].mxu0
      %v2726 = vadd.f32 0.0, %v2725
      %v2727 = vpop.f32.mrb[0].mxu0
      %2728 = vmatprep.mubr.bf16.mxu0 0
      %2729 = vmatmul.mubr.bf16.gmra.mrb[0].mxu0 %v1290
      %v2730 = vpop.f32.mrb[0].mxu0
      %v2731 = vadd.f32 0.0, %v2730
      %v2732 = vpop.f32.mrb[0].mxu0
      %v2733 = vpop.f32.mrb[0].mxu0
      %v2734 = vadd.f32 0.0, %v2733
      %v2735 = vpop.f32.mrb[0].mxu0
      %2736 = vmatprep.mubr.bf16.mxu0 0
      %2737 = vmatmul.mubr.bf16.gmra.mrb[0].mxu0 %v1293
      %v2738 = vpop.f32.mrb[0].mxu0
      %v2739 = vadd.f32 0.0, %v2738
      %v2740 = vpop.f32.mrb[0].mxu0
      %v2741 = vpop.f32.mrb[0].mxu0
      %v2742 = vadd.f32 0.0, %v2741
      %v2743 = vpop.f32.mrb[0].mxu0
      %2744 = vmatprep.mubr.bf16.mxu0 0
      %2745 = vmatmul.mubr.bf16.gmra.mrb[0].mxu0 %v1296
      %v2746 = vpop.f32.mrb[0].mxu0
      %v2747 = vadd.f32 0.0, %v2746
      %v2748 = vpop.f32.mrb[0].mxu0
      %v2749 = vpop.f32.mrb[0].mxu0
      %v2750 = vadd.f32 0.0, %v2749
      %v2751 = vpop.f32.mrb[0].mxu0
      %2752 = vmatprep.mubr.bf16.mxu0 0
      %2753 = vmatmul.mubr.bf16.gmra.mrb[0].mxu0 %v1299
      %v2754 = vpop.f32.mrb[0].mxu0
      %v2755 = vadd.f32 0.0, %v2754
      %v2756 = vpop.f32.mrb[0].mxu0
      %v2757 = vpop.f32.mrb[0].mxu0
      %v2758 = vadd.f32 0.0, %v2757
      %v2759 = vpop.f32.mrb[0].mxu0
      %2760 = vmatprep.mubr.bf16.mxu0 0
      %2761 = vmatmul.mubr.bf16.gmra.mrb[0].mxu0 %v2603
      %v2762 = vpop.f32.mrb[0].mxu0
      %v2763 = vadd.f32 0.0, %v2762
      %v2764 = vpop.f32.mrb[0].mxu0
      %v2765 = vpop.f32.mrb[0].mxu0
      %v2766 = vadd.f32 0.0, %v2765
      %v2767 = vpop.f32.mrb[0].mxu0
      %2768 = vdwg.mxu0
      %v2769 = vadd.f32 %v2472, %v2643
      %v2770 = vadd.f32 %v2475, %v2646
      %v2771 = vadd.f32 %v2480, %v2651
      %v2772 = vadd.f32 %v2483, %v2654
      %v2773 = vadd.f32 %v2488, %v2659
      %v2774 = vadd.f32 %v2491, %v2662
      %v2775 = vadd.f32 %v2496, %v2667
      %v2776 = vadd.f32 %v2499, %v2670
      %v2777 = vadd.f32 %v2504, %v2675
      %v2778 = vadd.f32 %v2507, %v2678
      %v2779 = vadd.f32 %v2512, %v2683
      %v2780 = vadd.f32 %v2515, %v2686
      %v2781 = vadd.f32 %v2520, %v2691
      %v2782 = vadd.f32 %v2523, %v2694
      %v2783 = vadd.f32 %v2528, %v2699
      %v2784 = vadd.f32 %v2531, %v2702
      %v2785 = vadd.f32 %v2536, %v2707
      %v2786 = vadd.f32 %v2539, %v2710
      %v2787 = vadd.f32 %v2544, %v2715
      %v2788 = vadd.f32 %v2547, %v2718
      %v2789 = vadd.f32 %v2552, %v2723
      %v2790 = vadd.f32 %v2555, %v2726
      %v2791 = vadd.f32 %v2560, %v2731
      %v2792 = vadd.f32 %v2563, %v2734
      %v2793 = vadd.f32 %v2568, %v2739
      %v2794 = vadd.f32 %v2571, %v2742
      %v2795 = vadd.f32 %v2576, %v2747
      %v2796 = vadd.f32 %v2579, %v2750
      %v2797 = vadd.f32 %v2584, %v2755
      %v2798 = vadd.f32 %v2587, %v2758
      %v2799 = vadd.f32 %v2592, %v2763
      %v2800 = vadd.f32 %v2595, %v2766
      %v2801 = vadd.f32 %v2189, %v2769
      %v2802 = vadd.f32 %v2190, %v2770
      %v2803 = vadd.f32 %v2191, %v2771
      %v2804 = vadd.f32 %v2192, %v2772
      %v2805 = vadd.f32 %v2193, %v2773
      %v2806 = vadd.f32 %v2194, %v2774
      %v2807 = vadd.f32 %v2195, %v2775
      %v2808 = vadd.f32 %v2196, %v2776
      %v2809 = vadd.f32 %v2197, %v2777
      %v2810 = vadd.f32 %v2198, %v2778
      %v2811 = vadd.f32 %v2199, %v2779
      %v2812 = vadd.f32 %v2200, %v2780
      %v2813 = vadd.f32 %v2201, %v2781
      %v2814 = vadd.f32 %v2202, %v2782
      %v2815 = vadd.f32 %v2203, %v2783
      %v2816 = vadd.f32 %v2204, %v2784
      %v2817 = vadd.f32 %v2205, %v2785
      %v2818 = vadd.f32 %v2206, %v2786
      %v2819 = vadd.f32 %v2207, %v2787
      %v2820 = vadd.f32 %v2208, %v2788
      %v2821 = vadd.f32 %v2209, %v2789
      %v2822 = vadd.f32 %v2210, %v2790
      %v2823 = vadd.f32 %v2211, %v2791
      %v2824 = vadd.f32 %v2212, %v2792
      %v2825 = vadd.f32 %v2213, %v2793
      %v2826 = vadd.f32 %v2214, %v2794
      %v2827 = vadd.f32 %v2215, %v2795
      %v2828 = vadd.f32 %v2216, %v2796
      %v2829 = vadd.f32 %v2217, %v2797
      %v2830 = vadd.f32 %v2218, %v2798
      %v2831 = vadd.f32 %v2219, %v2799
      %v2832 = vadd.f32 %v2220, %v2800
      %v2833 = vld [vmem:[%s3] sm:$0x1]
      %v2834 = vld [vmem:[%s3 + $0x1] sm:$0x1]
      %v2835 = vlaneseq
      %v2836 = vshrl.u32 %v2835, 7
      %v2837 = vsub.s32 0, %v2836
      %v2838 = vrot.slane %v2833, %v2837
      %v2839 = vmul.f32 %v2801, %v2838
      %v2840 = vmul.f32 %v2802, %v2838
      %v2841 = vmul.f32 %v2803, %v2838
      %v2842 = vmul.f32 %v2804, %v2838
      %v2843 = vmul.f32 %v2805, %v2838
      %v2844 = vmul.f32 %v2806, %v2838
      %v2845 = vmul.f32 %v2807, %v2838
      %v2846 = vmul.f32 %v2808, %v2838
      %v2847 = vmul.f32 %v2809, %v2838
      %v2848 = vmul.f32 %v2810, %v2838
      %v2849 = vmul.f32 %v2811, %v2838
      %v2850 = vmul.f32 %v2812, %v2838
      %v2851 = vmul.f32 %v2813, %v2838
      %v2852 = vmul.f32 %v2814, %v2838
      %v2853 = vmul.f32 %v2815, %v2838
      %v2854 = vmul.f32 %v2816, %v2838
      %v2855 = vmul.f32 %v2817, %v2838
      %v2856 = vmul.f32 %v2818, %v2838
      %v2857 = vmul.f32 %v2819, %v2838
      %v2858 = vmul.f32 %v2820, %v2838
      %v2859 = vmul.f32 %v2821, %v2838
      %v2860 = vmul.f32 %v2822, %v2838
      %v2861 = vmul.f32 %v2823, %v2838
      %v2862 = vmul.f32 %v2824, %v2838
      %v2863 = vmul.f32 %v2825, %v2838
      %v2864 = vmul.f32 %v2826, %v2838
      %v2865 = vmul.f32 %v2827, %v2838
      %v2866 = vmul.f32 %v2828, %v2838
      %v2867 = vmul.f32 %v2829, %v2838
      %v2868 = vmul.f32 %v2830, %v2838
      %v2869 = vmul.f32 %v2831, %v2838
      %v2870 = vmul.f32 %v2832, %v2838
      %v2871 = vlaneseq
      %v2872 = vshrl.u32 %v2871, 7
      %v2873 = vsub.s32 0, %v2872
      %v2874 = vrot.slane %v2834, %v2873
      %v2875 = vadd.f32 %v2839, %v2874
      %v2876 = vadd.f32 %v2840, %v2874
      %v2877 = vadd.f32 %v2841, %v2874
      %v2878 = vadd.f32 %v2842, %v2874
      %v2879 = vadd.f32 %v2843, %v2874
      %v2880 = vadd.f32 %v2844, %v2874
      %v2881 = vadd.f32 %v2845, %v2874
      %v2882 = vadd.f32 %v2846, %v2874
      %v2883 = vadd.f32 %v2847, %v2874
      %v2884 = vadd.f32 %v2848, %v2874
      %v2885 = vadd.f32 %v2849, %v2874
      %v2886 = vadd.f32 %v2850, %v2874
      %v2887 = vadd.f32 %v2851, %v2874
      %v2888 = vadd.f32 %v2852, %v2874
      %v2889 = vadd.f32 %v2853, %v2874
      %v2890 = vadd.f32 %v2854, %v2874
      %v2891 = vadd.f32 %v2855, %v2874
      %v2892 = vadd.f32 %v2856, %v2874
      %v2893 = vadd.f32 %v2857, %v2874
      %v2894 = vadd.f32 %v2858, %v2874
      %v2895 = vadd.f32 %v2859, %v2874
      %v2896 = vadd.f32 %v2860, %v2874
      %v2897 = vadd.f32 %v2861, %v2874
      %v2898 = vadd.f32 %v2862, %v2874
      %v2899 = vadd.f32 %v2863, %v2874
      %v2900 = vadd.f32 %v2864, %v2874
      %v2901 = vadd.f32 %v2865, %v2874
      %v2902 = vadd.f32 %v2866, %v2874
      %v2903 = vadd.f32 %v2867, %v2874
      %v2904 = vadd.f32 %v2868, %v2874
      %v2905 = vadd.f32 %v2869, %v2874
      %v2906 = vadd.f32 %v2870, %v2874
      %v2907 = vmax.f32 %v2875, 0.0
      %v2908 = vmax.f32 %v2876, 0.0
      %v2909 = vmax.f32 %v2877, 0.0
      %v2910 = vmax.f32 %v2878, 0.0
      %v2911 = vmax.f32 %v2879, 0.0
      %v2912 = vmax.f32 %v2880, 0.0
      %v2913 = vmax.f32 %v2881, 0.0
      %v2914 = vmax.f32 %v2882, 0.0
      %v2915 = vmax.f32 %v2883, 0.0
      %v2916 = vmax.f32 %v2884, 0.0
      %v2917 = vmax.f32 %v2885, 0.0
      %v2918 = vmax.f32 %v2886, 0.0
      %v2919 = vmax.f32 %v2887, 0.0
      %v2920 = vmax.f32 %v2888, 0.0
      %v2921 = vmax.f32 %v2889, 0.0
      %v2922 = vmax.f32 %v2890, 0.0
      %v2923 = vmax.f32 %v2891, 0.0
      %v2924 = vmax.f32 %v2892, 0.0
      %v2925 = vmax.f32 %v2893, 0.0
      %v2926 = vmax.f32 %v2894, 0.0
      %v2927 = vmax.f32 %v2895, 0.0
      %v2928 = vmax.f32 %v2896, 0.0
      %v2929 = vmax.f32 %v2897, 0.0
      %v2930 = vmax.f32 %v2898, 0.0
      %v2931 = vmax.f32 %v2899, 0.0
      %v2932 = vmax.f32 %v2900, 0.0
      %v2933 = vmax.f32 %v2901, 0.0
      %v2934 = vmax.f32 %v2902, 0.0
      %v2935 = vmax.f32 %v2903, 0.0
      %v2936 = vmax.f32 %v2904, 0.0
      %v2937 = vmax.f32 %v2905, 0.0
      %v2938 = vmax.f32 %v2906, 0.0
      %v2939 = vmax.f32 %v2907, %v2923
      %v2940 = vmax.f32 %v2908, %v2924
      %v2941 = vmax.f32 %v2909, %v2925
      %v2942 = vmax.f32 %v2910, %v2926
      %v2943 = vmax.f32 %v2911, %v2927
      %v2944 = vmax.f32 %v2912, %v2928
      %v2945 = vmax.f32 %v2913, %v2929
      %v2946 = vmax.f32 %v2914, %v2930
      %v2947 = vmax.f32 %v2915, %v2931
      %v2948 = vmax.f32 %v2916, %v2932
      %v2949 = vmax.f32 %v2917, %v2933
      %v2950 = vmax.f32 %v2918, %v2934
      %v2951 = vmax.f32 %v2919, %v2935
      %v2952 = vmax.f32 %v2920, %v2936
      %v2953 = vmax.f32 %v2921, %v2937
      %v2954 = vmax.f32 %v2922, %v2938
      %v2955 = vmax.f32 %v2939, %v2940
      %v2956 = vmax.f32 %v2941, %v2942
      %v2957 = vmax.f32 %v2943, %v2944
      %v2958 = vmax.f32 %v2945, %v2946
      %v2959 = vmax.f32 %v2947, %v2948
      %v2960 = vmax.f32 %v2949, %v2950
      %v2961 = vmax.f32 %v2951, %v2952
      %v2962 = vmax.f32 %v2953, %v2954
      %2963 = vst [vmem:[%s217] sm:$0xff] %v2955
      %2964 = vst [vmem:[%s217 + $0x8] sm:$0xff] %v2956
      %2965 = vst [vmem:[%s217 + $0x10] sm:$0xff] %v2957
      %2966 = vst [vmem:[%s217 + $0x18] sm:$0xff] %v2958
      %2967 = vst [vmem:[%s217 + $0x20] sm:$0xff] %v2959
      %2968 = vst [vmem:[%s217 + $0x28] sm:$0xff] %v2960
      %2969 = vst [vmem:[%s217 + $0x30] sm:$0xff] %v2961
      %2970 = vst [vmem:[%s217 + $0x38] sm:$0xff] %v2962
      %p2971 = scmp.lt.s32.totalorder %s15, 1
      %s2972 = scalar_select %p2971, %s15, 1
      %s2973 = smul.addr %s2972, 8
      %s2974 = smul.addr %s2973, 8
      %s2975 = scalar_lea.vmem %s4, %s2974
      // Predicated region
      $region37: #{_conv3_2d_forward.3} parent=35 // pred_check
        %p2976 = pneg %p127
      $region38: #{_conv3_2d_forward.3} parent=35 // pred_check_branch
        %2978 = sbr.rel (%p2976) target = $region40
      $region39: #{_conv3_2d_forward.3} parent=35 // pred_region
        _
      $region40: #{_conv3_2d_forward.3} parent=35 // pred_fallthru
        _
    $region36: #{_conv3_2d_forward.3} parent=5 // pred_fallthru
      _
    %p2979 = scmp.le.s32.totalorder 2, %s10
    // Predicated region
    $region41: #{_conv3_2d_forward.3} parent=5 // pred_check
      %p2980 = pneg %p2979
    $region42: #{_conv3_2d_forward.3} parent=5 // pred_check_branch
      %2982 = sbr.rel (%p2980) target = $region44
    $region43: #{_conv3_2d_forward.3} parent=5 // pred_region
      %s2983 = ssub.s32 %s10, 2
      // Predicated region
      $region45: #{_conv3_2d_forward.3} parent=43 // pred_check
        %p2984 = pneg %p133
      $region46: #{_conv3_2d_forward.3} parent=43 // pred_check_branch
        %2986 = sbr.rel (%p2984) target = $region48
      $region47: #{_conv3_2d_forward.3} parent=43 // pred_region
        %p2987 = scmp.lt.s32.totalorder %s16, 1
        %s2988 = scalar_select %p2987, %s16, 1
        %s2989 = smul.addr %s2988, 8
        %s2990 = smul.addr %s2989, 8
        %s2991 = scalar_lea.vmem %s4, %s2990
      $region48: #{_conv3_2d_forward.3} parent=43 // pred_fallthru
        _
    $region44: #{_conv3_2d_forward.3} parent=5 // pred_fallthru
      _
  $region6: #{_conv3_2d_forward.3} parent=0 // loop_footer
    %s14 = sadd.s32 1, %s10
  $region7: #{_conv3_2d_forward.3} parent=0 // loop_footer_branch
    %9 = sbr.rel target = $region3
  $region8: #{_conv3_2d_forward.3} parent=0 // loop_exit
    _

</llo_original>
